<compile_context>
chip_gen: v7x
topology: tpu7x:2x2x1
jax: 0.10.0
libtpu: 0.0.40
codegen_flags: <defaults>
</compile_context>

<pallas_src>
import functools

import jax
import jax.numpy as jnp
from jax.experimental import pallas as pl
from jax.experimental.pallas import tpu as pltpu

EPS_LN = 1e-5      # nn.LayerNorm default eps
EPS_NORM = 1e-12   # F.normalize default eps
NEG_BIG = -1e30    # additive mask for off-block (cross-head) attention entries (kept in f32)


# ------------------------------ in-kernel helpers ---------------------------

def _gelu(x):
    # tanh-approx GELU (single EUP tanh on the big elementwise surfaces instead of a
    # VALU-heavy erf polynomial).  Differs slightly from torch's default exact GELU.
    return 0.5 * x * (1.0 + jnp.tanh(0.7978845608028654 * (x + 0.044715 * x * x * x)))


def _dwconv3x3(x, w_r9, m_left, m_right, W):
    """Depthwise 3x3 conv (stride 1, pad 1, no bias) in channel-major (R, N=H*W) layout.

    Only ONE shifted tap is live at a time (generated inside the accumulate loop).
    Spatial zero-padding is emulated by zero-padding the flattened token axis by W+1 per
    side (dy=+-1 row boundaries) plus the two lane masks (dx=+-1 column boundaries).
    Tap order t = (dy+1)*3 + (dx+1) == PyTorch ky*3+kx.
    """
    R, N = x.shape
    P = W + 1
    z = jnp.zeros((R, P), x.dtype)
    xp = jnp.concatenate([z, x, z], axis=-1)              # (R, N + 2P), single padded copy
    acc = x * w_r9[:, 4:5]                                 # center tap (dy=0, dx=0)
    t = 0
    for dy in (-1, 0, 1):
        for dx in (-1, 0, 1):
            if not (dy == 0 and dx == 0):
                off = P + dy * W + dx
                tap = xp[:, off:off + N]
                if dx == -1:
                    tap = tap * m_left
                elif dx == 1:
                    tap = tap * m_right
                acc = acc + tap * w_r9[:, t:t + 1]         # (R,1) per-channel tap weight
            t += 1
    return acc


# ----------------------------- Pallas kernels ------------------------------

def _conv3x3_kernel(x_ref, ml_ref, mr_ref, w_ref, b_ref, o_ref, *, W):
    # Entry Conv2d(in_ch, out_ch, 3, stride=1, padding=1), channel-major, one batch element.
    # x_ref: (1, Cin_pad, N) f32; w_ref: (Cout, 9*Cin_pad) bf16 with columns t*Cin_pad + cin,
    # t = ky*3+kx; b_ref: (Cout, 1) f32; o_ref: (1, Cout, N).
    x = x_ref[0]
    ml = ml_ref[...]
    mr = mr_ref[...]
    Cin, N = x.shape
    P = W + 1
    z = jnp.zeros((Cin, P), x.dtype)
    xp = jnp.concatenate([z, x, z], axis=-1)
    taps = []
    for dy in (-1, 0, 1):
        for dx in (-1, 0, 1):
            off = P + dy * W + dx
            tap = xp[:, off:off + N]
            if dx == -1:
                tap = tap * ml
            elif dx == 1:
                tap = tap * mr
            taps.append(tap)
    # 9 taps stacked along the contraction axis: ONE (Cout, 9Cin)@(9Cin, N) MXU matmul.
    # (Cin_pad is a multiple of 8, so every concatenated piece is sublane-aligned in f32.)
    stacked = jnp.concatenate(taps, axis=0).astype(jnp.bfloat16)   # (9*Cin_pad, N)
    acc = jnp.dot(w_ref[...], stacked, preferred_element_type=jnp.float32)
    o_ref[0] = (acc + b_ref[...]).astype(o_ref.dtype)


def _msab_block_kernel(x_ref, ml_ref, mr_ref, bias_ref,
                       wqkv_ref, rs_ref, wp_ref, bp_ref, pw1_ref, pw2_ref,
                       lng_ref, lnb_ref, fw1_ref, fdw_ref, fw2_ref,
                       o_ref, *, W):
    # One fully fused MSAB block (MS_MSA + pos_emb + residual + LayerNorm + FFN + residual),
    # one batch element, channel-major (C, N) with the token axis N on lanes.
    # Assumes C (= out_ch) is a multiple of 8.
    C = x_ref.shape[1]
    x32 = x_ref[0].astype(jnp.float32)                     # (C, N)
    ml = ml_ref[...]
    mr = mr_ref[...]

    # ---------------- MS_MSA ----------------
    # Batched q/k/v projection: one (3C, C)@(C, N) bf16 matmul, f32 accumulation.
    qkv = jnp.dot(wqkv_ref[...], x32.astype(jnp.bfloat16),
                  preferred_element_type=jnp.float32)      # (3C, N) f32
    q = qkv[0:C]
    k = qkv[C:2 * C]
    v = qkv[2 * C:3 * C]            # == v_inp^T; consumed by pos_emb below (never leaves VMEM)

    # F.normalize(q/k, dim=-1) folded into the (C, C) score matrix:
    #   scores[i,j] = <k_i, q_j> / (max(||k_i||,eps) * max(||q_j||,eps)) * rescale[head(i)]
    # Row factor broadcasts from (C,1); the column factor (1,C) is built with an
    # iota-diagonal reduce (no (C,N) elementwise normalization, no awkward tiny transpose).
    k_inv = 1.0 / jnp.maximum(jnp.sqrt(jnp.sum(k * k, axis=-1, keepdims=True)), EPS_NORM)
    q_inv = 1.0 / jnp.maximum(jnp.sqrt(jnp.sum(q * q, axis=-1, keepdims=True)), EPS_NORM)
    row_i = jax.lax.broadcasted_iota(jnp.int32, (C, C), 0)
    col_i = jax.lax.broadcasted_iota(jnp.int32, (C, C), 1)
    eye = (row_i == col_i).astype(jnp.float32)
    q_inv_row = jnp.sum(eye * q_inv, axis=0, keepdims=True)           # (1, C)

    q_mx = q.astype(jnp.bfloat16)
    k_mx = k.astype(jnp.bfloat16)
    v_mx = v.astype(jnp.bfloat16)

    # All heads at once: bias_ref is 0 on per-head diagonal blocks / -1e30 off them, so the
    # row softmax below is exactly the per-head (d,d) softmax of the reference (f32 math).
    scores = jax.lax.dot_general(k_mx, q_mx, (((1,), (1,)), ((), ())),
                                 preferred_element_type=jnp.float32)  # (C, C) f32
    scores = scores * (k_inv * rs_ref[...]) * q_inv_row + bias_ref[...]
    scores = scores - jnp.max(scores, axis=-1, keepdims=True)
    p = jnp.exp(scores)
    p = p * pl.reciprocal(jnp.sum(p, axis=-1, keepdims=True), approx=True)

    # Output projection fused into the attention tail: Wp @ (P @ V) == (Wp @ P) @ V.
    wpp = jnp.dot(wp_ref[...], p.astype(jnp.bfloat16),
                  preferred_element_type=jnp.float32)                 # (C, C)
    out_c = jnp.dot(wpp.astype(jnp.bfloat16), v_mx,
                    preferred_element_type=jnp.float32) + bp_ref[...]  # (C, N)

    # pos_emb: depthwise3x3 -> GELU -> depthwise3x3 on v_inp (already channel-major, f32)
    p1 = _gelu(_dwconv3x3(v, pw1_ref[...], ml, mr, W))
    out_p = _dwconv3x3(p1, pw2_ref[...], ml, mr, W)

    feat = x32 + out_c + out_p                             # residual 1

    # ------------- PreNorm(LayerNorm over channels) + FeedForward -------------
    mu = jnp.mean(feat, axis=0, keepdims=True)
    xc = feat - mu
    var = jnp.mean(xc * xc, axis=0, keepdims=True)
    y = xc * jax.lax.rsqrt(var + EPS_LN) * lng_ref[...] + lnb_ref[...]

    h1 = _gelu(jnp.dot(fw1_ref[...], y.astype(jnp.bfloat16),
                       preferred_element_type=jnp.float32))           # (4C, N) f32
    h2 = _gelu(_dwconv3x3(h1, fdw_ref[...], ml, mr, W))
    out = jnp.dot(fw2_ref[...], h2.astype(jnp.bfloat16),
                  preferred_element_type=jnp.float32) + feat          # residual 2

    o_ref[0] = out.astype(o_ref.dtype)


# ----------------------------- wrappers (glue) ------------------------------

def _clamp_vmem(nbytes):
    # explicit scoped-VMEM budget (defaults are 16/32 MiB); cap below v7x's 64 MiB physical.
    return int(min(max(nbytes + (4 << 20), 32 << 20), 48 << 20))


def _cparams(vmem_bytes):
    # grid=(B,) is 'parallel'; with B >= 2 both v7x TensorCores get work.
    return pltpu.CompilerParams(dimension_semantics=("parallel",),
                                vmem_limit_bytes=vmem_bytes)


def _conv_vmem_bytes(cin_p, cout, N):
    act = N * 4
    return _clamp_vmem((2 * (cin_p + cout) + 12 * cin_p + 2 * cout) * act
                       + 2 * (9 * cin_p * cout * 2 + cout * 4) + 4 * N)


def _msab_vmem_bytes(C, N):
    act = C * N * 4
    return _clamp_vmem(4 * act + 40 * act + 64 * C * C + 8 * N)


def conv3x3(x_bcn, w, b, m_left, m_right, W):
    B, cin_p, N = x_bcn.shape
    Cout = w.shape[0]
    kern = functools.partial(_conv3x3_kernel, W=W)
    return pl.pallas_call(
        kern,
        out_shape=jax.ShapeDtypeStruct((B, Cout, N), x_bcn.dtype),
        grid=(B,),
        in_specs=[pl.BlockSpec((1, cin_p, N), lambda i: (i, 0, 0)),
                  pl.BlockSpec((1, N), lambda i: (0, 0)),
                  pl.BlockSpec((1, N), lambda i: (0, 0)),
                  pl.BlockSpec((Cout, 9 * cin_p), lambda i: (0, 0)),
                  pl.BlockSpec((Cout, 1), lambda i: (0, 0))],
        out_specs=pl.BlockSpec((1, Cout, N), lambda i: (i, 0, 0)),
        compiler_params=_cparams(_conv_vmem_bytes(cin_p, Cout, N)),
    )(x_bcn, m_left, m_right, w, b)


def msab_block(feat, blk, m_left, m_right, attn_bias, W):
    B, C, N = feat.shape
    kern = functools.partial(_msab_block_kernel, W=W)
    return pl.pallas_call(
        kern,
        out_shape=jax.ShapeDtypeStruct((B, C, N), feat.dtype),
        grid=(B,),
        in_specs=[pl.BlockSpec((1, C, N), lambda i: (i, 0, 0)),       # feat
                  pl.BlockSpec((1, N), lambda i: (0, 0)),             # m_left  (dx=-1 mask)
                  pl.BlockSpec((1, N), lambda i: (0, 0)),             # m_right (dx=+1 mask)
                  pl.BlockSpec((C, C), lambda i: (0, 0)),             # attn block-diag bias
                  pl.BlockSpec((3 * C, C), lambda i: (0, 0)),         # stacked Wq/Wk/Wv (bf16)
                  pl.BlockSpec((C, 1), lambda i: (0, 0)),             # rescale per channel
                  pl.BlockSpec((C, C), lambda i: (0, 0)),             # proj weight (bf16)
                  pl.BlockSpec((C, 1), lambda i: (0, 0)),             # proj bias
                  pl.BlockSpec((C, 9), lambda i: (0, 0)),             # pos_emb dw conv 1
                  pl.BlockSpec((C, 9), lambda i: (0, 0)),             # pos_emb dw conv 2
                  pl.BlockSpec((C, 1), lambda i: (0, 0)),             # LayerNorm gamma
                  pl.BlockSpec((C, 1), lambda i: (0, 0)),             # LayerNorm beta
                  pl.BlockSpec((4 * C, C), lambda i: (0, 0)),         # FFN 1x1 C->4C (bf16)
                  pl.BlockSpec((4 * C, 9), lambda i: (0, 0)),         # FFN depthwise 3x3
                  pl.BlockSpec((C, 4 * C), lambda i: (0, 0))],        # FFN 1x1 4C->C (bf16)
        out_specs=pl.BlockSpec((1, C, N), lambda i: (i, 0, 0)),
        compiler_params=_cparams(_msab_vmem_bytes(C, N)),
    )(feat, m_left, m_right, attn_bias, blk['wqkv'], blk['rescale_cols'], blk['wp'],
      blk['bp'], blk['pe_w1'], blk['pe_w2'], blk['ln_g'], blk['ln_b'],
      blk['ff_w1'], blk['ff_dw'], blk['ff_w2'])


def _conv_masks(H, W, dtype=jnp.float32):
    col = jnp.arange(H * W) % W
    m_left = (col > 0).astype(dtype).reshape(1, H * W)          # tap valid when dx == -1
    m_right = (col < W - 1).astype(dtype).reshape(1, H * W)     # tap valid when dx == +1
    return m_left, m_right


def _attn_block_bias(C, heads, dtype=jnp.float32):
    d = C // heads
    hid = jnp.arange(C) // d
    return jnp.where(hid[:, None] == hid[None, :], 0.0, NEG_BIG).astype(dtype)


def _round_up(v, m):
    return (v + m - 1) // m * m


# ----------------------------- BasicBlock forward ---------------------------

def basic_block_forward(x_nchw, params, heads=4):
    B, Cin, H, W = x_nchw.shape
    C = params['conv_b'].shape[0]
    N = H * W
    cin_p = params['conv_w'].shape[1] // 9
    m_left, m_right = _conv_masks(H, W)
    attn_bias = _attn_block_bias(C, heads)

    x = x_nchw.reshape(B, Cin, N)                    # channel-major tokens: pure reshape
    if cin_p != Cin:
        # pad input channels to a multiple of 8 so the in-kernel 9-tap stack concatenates
        # sublane-aligned pieces (zero channels contribute nothing to the conv).
        x = jnp.pad(x, ((0, 0), (0, cin_p - Cin), (0, 0)))
    feat = conv3x3(x, params['conv_w'], params['conv_b'], m_left, m_right, W)
    for blk in params['blocks']:
        feat = msab_block(feat, blk, m_left, m_right, attn_bias, W)
    return feat.reshape(B, C, H, W)                  # back to NCHW: pure reshape


# ----------------------------- deterministic init ---------------------------

def init_params(key, in_ch, out_ch, num_blocks, heads=4):
    hidden = out_ch * 4
    cin_p = _round_up(in_ch, 8)

    def rnd(k, shape, scale=0.1, dtype=jnp.float32):
        return (scale * jax.random.normal(k, shape)).astype(dtype)

    keys = jax.random.split(key, 2 + num_blocks)
    # entry Conv2d(in_ch, out_ch, 3, padding=1): columns ordered t*cin_p + cin with
    # t = ky*3 + kx (== torch weight.transpose(0,2,3,1), zero-padded on cin, reshaped).
    w9 = rnd(keys[0], (out_ch, 9, cin_p))
    w9 = w9 * (jnp.arange(cin_p) < in_ch)            # padded input channels carry zero weight
    params = {
        'conv_w': w9.reshape(out_ch, 9 * cin_p).astype(jnp.bfloat16),
        'conv_b': rnd(keys[1], (out_ch, 1)),
        'blocks': [],
    }
    for i in range(num_blocks):
        bk = jax.random.split(keys[2 + i], 8)
        params['blocks'].append({
            # stacked [Wq; Wk; Wv] rows of the (C, C) PyTorch Linear weights (MXU operand -> bf16)
            'wqkv': rnd(bk[0], (3 * out_ch, out_ch), dtype=jnp.bfloat16),
            # torch.ones(heads,1,1) rescale, expanded to one value per channel (c -> c//d)
            'rescale_cols': jnp.ones((out_ch, 1), jnp.float32),
            'wp': rnd(bk[1], (out_ch, out_ch), dtype=jnp.bfloat16),   # proj weight
            'bp': rnd(bk[2], (out_ch, 1)),                            # proj bias
            'pe_w1': rnd(bk[3], (out_ch, 9)),            # depthwise 3x3 taps (pos_emb conv 1)
            'pe_w2': rnd(bk[4], (out_ch, 9)),            # depthwise 3x3 taps (pos_emb conv 2)
            'ln_g': jnp.ones((out_ch, 1), jnp.float32),
            'ln_b': jnp.zeros((out_ch, 1), jnp.float32),
            'ff_w1': rnd(bk[5], (hidden, out_ch), dtype=jnp.bfloat16),  # 1x1 conv C -> 4C
            'ff_dw': rnd(bk[6], (hidden, 9)),                           # depthwise 3x3 on 4C
            'ff_w2': rnd(bk[7], (out_ch, hidden), dtype=jnp.bfloat16),  # 1x1 conv 4C -> C
        })
    return params


if __name__ == "__main__":
    B, IN_CH, OUT_CH, H, W = 2, 4, 16, 16, 16   # heads=4, dim_head=OUT_CH//4=4
    NUM_BLOCKS = 2                              # constructor default is 6; small for demo
    key = jax.random.PRNGKey(0)
    pkey, xkey = jax.random.split(key)
    params = init_params(pkey, IN_CH, OUT_CH, NUM_BLOCKS, heads=4)
    x = jax.random.normal(xkey, (B, IN_CH, H, W), jnp.float32)

    fwd = jax.jit(basic_block_forward, static_argnames="heads")
    out = jax.block_until_ready(fwd(x, params, heads=4))

    assert out.shape == (B, OUT_CH, H, W), out.shape
    assert bool(jnp.all(jnp.isfinite(out)))
    print("KERNEL_OK")
</pallas_src>

<mosaic_0001>
module attributes {stable_mosaic.version = 11 : i64} {
  func.func @_conv3x3_kernel(%arg0: i32, %arg1: memref<1x8x256xf32, #tpu.memory_space<vmem>>, %arg2: memref<1x256xf32, #tpu.memory_space<vmem>>, %arg3: memref<1x256xf32, #tpu.memory_space<vmem>>, %arg4: memref<16x72xbf16, #tpu.memory_space<vmem>>, %arg5: memref<16x1xf32, #tpu.memory_space<vmem>>, %arg6: memref<1x16x256xf32, #tpu.memory_space<vmem>>) attributes {dimension_semantics = [#tpu.dimension_semantics<parallel>], iteration_bounds = array<i64: 2>, scalar_prefetch = 0 : i64, scratch_operands = 0 : i64, tpu.core_type = #tpu.core_type<tc>, window_params = [{transform_indices = @transform_0, window_bounds = array<i64: 1, 8, 256>}, {pipeline_mode = #tpu.pipeline_mode<synchronous>, transform_indices = @transform_1, window_bounds = array<i64: 1, 256>}, {pipeline_mode = #tpu.pipeline_mode<synchronous>, transform_indices = @transform_2, window_bounds = array<i64: 1, 256>}, {pipeline_mode = #tpu.pipeline_mode<synchronous>, transform_indices = @transform_3, window_bounds = array<i64: 16, 72>}, {pipeline_mode = #tpu.pipeline_mode<synchronous>, transform_indices = @transform_4, window_bounds = array<i64: 16, 1>}, {transform_indices = @transform_5, window_bounds = array<i64: 1, 16, 256>}]} {
    %c0 = arith.constant 0 : index
    %c0_0 = arith.constant 0 : index
    %c0_1 = arith.constant 0 : index
    %0 = vector.load %arg1[%c0, %c0_0, %c0_1] : memref<1x8x256xf32, #tpu.memory_space<vmem>>, vector<1x8x256xf32>
    %1 = vector.shape_cast %0 : vector<1x8x256xf32> to vector<8x256xf32>
    %c0_2 = arith.constant 0 : index
    %c0_3 = arith.constant 0 : index
    %2 = vector.load %arg2[%c0_2, %c0_3] : memref<1x256xf32, #tpu.memory_space<vmem>>, vector<1x256xf32>
    %c0_4 = arith.constant 0 : index
    %c0_5 = arith.constant 0 : index
    %3 = vector.load %arg3[%c0_4, %c0_5] : memref<1x256xf32, #tpu.memory_space<vmem>>, vector<1x256xf32>
    %cst = arith.constant 0.000000e+00 : f32
    %4 = vector.broadcast %cst : f32 to vector<8x17xf32>
    %5 = tpu.concatenate %4, %1, %4 in 1 : vector<8x17xf32>, vector<8x256xf32>, vector<8x17xf32> -> vector<8x290xf32>
    %6 = vector.extract_strided_slice %5 {offsets = [0, 0], sizes = [8, 256], strides = [1, 1]} : vector<8x290xf32> to vector<8x256xf32>
    %7 = vector.broadcast %2 : vector<1x256xf32> to vector<8x256xf32>
    %8 = arith.mulf %6, %7 : vector<8x256xf32>
    %9 = vector.extract_strided_slice %5 {offsets = [0, 1], sizes = [8, 256], strides = [1, 1]} : vector<8x290xf32> to vector<8x256xf32>
    %10 = vector.extract_strided_slice %5 {offsets = [0, 2], sizes = [8, 256], strides = [1, 1]} : vector<8x290xf32> to vector<8x256xf32>
    %11 = vector.broadcast %3 : vector<1x256xf32> to vector<8x256xf32>
    %12 = arith.mulf %10, %11 : vector<8x256xf32>
    %13 = vector.extract_strided_slice %5 {offsets = [0, 16], sizes = [8, 256], strides = [1, 1]} : vector<8x290xf32> to vector<8x256xf32>
    %14 = vector.broadcast %2 : vector<1x256xf32> to vector<8x256xf32>
    %15 = arith.mulf %13, %14 : vector<8x256xf32>
    %16 = vector.extract_strided_slice %5 {offsets = [0, 17], sizes = [8, 256], strides = [1, 1]} : vector<8x290xf32> to vector<8x256xf32>
    %17 = vector.extract_strided_slice %5 {offsets = [0, 18], sizes = [8, 256], strides = [1, 1]} : vector<8x290xf32> to vector<8x256xf32>
    %18 = vector.broadcast %3 : vector<1x256xf32> to vector<8x256xf32>
    %19 = arith.mulf %17, %18 : vector<8x256xf32>
    %20 = vector.extract_strided_slice %5 {offsets = [0, 32], sizes = [8, 256], strides = [1, 1]} : vector<8x290xf32> to vector<8x256xf32>
    %21 = vector.broadcast %2 : vector<1x256xf32> to vector<8x256xf32>
    %22 = arith.mulf %20, %21 : vector<8x256xf32>
    %23 = vector.extract_strided_slice %5 {offsets = [0, 33], sizes = [8, 256], strides = [1, 1]} : vector<8x290xf32> to vector<8x256xf32>
    %24 = vector.extract_strided_slice %5 {offsets = [0, 34], sizes = [8, 256], strides = [1, 1]} : vector<8x290xf32> to vector<8x256xf32>
    %25 = vector.broadcast %3 : vector<1x256xf32> to vector<8x256xf32>
    %26 = arith.mulf %24, %25 : vector<8x256xf32>
    %27 = tpu.concatenate %8, %9, %12, %15, %16, %19, %22, %23, %26 in 0 : vector<8x256xf32>, vector<8x256xf32>, vector<8x256xf32>, vector<8x256xf32>, vector<8x256xf32>, vector<8x256xf32>, vector<8x256xf32>, vector<8x256xf32>, vector<8x256xf32> -> vector<72x256xf32>
    %28 = arith.truncf %27 : vector<72x256xf32> to vector<72x256xbf16>
    %c0_6 = arith.constant 0 : index
    %c0_7 = arith.constant 0 : index
    %29 = vector.load %arg4[%c0_6, %c0_7] : memref<16x72xbf16, #tpu.memory_space<vmem>>, vector<16x72xbf16>
    %cst_8 = arith.constant dense<0.000000e+00> : vector<16x256xf32>
    %30 = tpu.matmul %29, %28, %cst_8 {dimension_numbers = #tpu.dot_dimension_numbers<[1], [0], [0], [1], [0, 0, 1, 1], [], []>} : vector<16x72xbf16>, vector<72x256xbf16>, vector<16x256xf32> -> vector<16x256xf32>
    %c0_9 = arith.constant 0 : index
    %c0_10 = arith.constant 0 : index
    %31 = vector.load %arg5[%c0_9, %c0_10] : memref<16x1xf32, #tpu.memory_space<vmem>>, vector<16x1xf32>
    %32 = vector.broadcast %31 : vector<16x1xf32> to vector<16x256xf32>
    %33 = arith.addf %30, %32 : vector<16x256xf32>
    %c0_11 = arith.constant 0 : index
    %c0_12 = arith.constant 0 : index
    %c0_13 = arith.constant 0 : index
    %34 = vector.load %arg6[%c0_11, %c0_12, %c0_13] : memref<1x16x256xf32, #tpu.memory_space<vmem>>, vector<1x16x256xf32>
    %35 = vector.shape_cast %34 : vector<1x16x256xf32> to vector<16x256xf32>
    %36 = vector.shape_cast %33 : vector<16x256xf32> to vector<1x16x256xf32>
    tpu.vector_store %arg6[%c0_11, %c0_12, %c0_13], %36 {strides = array<i32>} : memref<1x16x256xf32, #tpu.memory_space<vmem>>, vector<1x16x256xf32>,
    return
  }
  func.func @transform_0(%arg0: i32) -> (i32, i32, i32) {
    %c0_i32 = arith.constant 0 : i32
    %c0_i32_0 = arith.constant 0 : i32
    %c0_i32_1 = arith.constant 0 : i32
    return %arg0, %c0_i32, %c0_i32_0 : i32, i32, i32
  }
  func.func @transform_1(%arg0: i32) -> (i32, i32) {
    %c0_i32 = arith.constant 0 : i32
    %c0_i32_0 = arith.constant 0 : i32
    %c0_i32_1 = arith.constant 0 : i32
    return %c0_i32, %c0_i32_0 : i32, i32
  }
  func.func @transform_2(%arg0: i32) -> (i32, i32) {
    %c0_i32 = arith.constant 0 : i32
    %c0_i32_0 = arith.constant 0 : i32
    %c0_i32_1 = arith.constant 0 : i32
    return %c0_i32, %c0_i32_0 : i32, i32
  }
  func.func @transform_3(%arg0: i32) -> (i32, i32) {
    %c0_i32 = arith.constant 0 : i32
    %c0_i32_0 = arith.constant 0 : i32
    %c0_i32_1 = arith.constant 0 : i32
    return %c0_i32, %c0_i32_0 : i32, i32
  }
  func.func @transform_4(%arg0: i32) -> (i32, i32) {
    %c0_i32 = arith.constant 0 : i32
    %c0_i32_0 = arith.constant 0 : i32
    %c0_i32_1 = arith.constant 0 : i32
    return %c0_i32, %c0_i32_0 : i32, i32
  }
  func.func @transform_5(%arg0: i32) -> (i32, i32, i32) {
    %c0_i32 = arith.constant 0 : i32
    %c0_i32_0 = arith.constant 0 : i32
    %c0_i32_1 = arith.constant 0 : i32
    return %arg0, %c0_i32, %c0_i32_0 : i32, i32, i32
  }
}

module attributes {stable_mosaic.version = 11 : i64} {
  func.func @_msab_block_kernel(%arg0: i32, %arg1: memref<1x16x256xf32, #tpu.memory_space<vmem>>, %arg2: memref<1x256xf32, #tpu.memory_space<vmem>>, %arg3: memref<1x256xf32, #tpu.memory_space<vmem>>, %arg4: memref<16x16xf32, #tpu.memory_space<vmem>>, %arg5: memref<48x16xbf16, #tpu.memory_space<vmem>>, %arg6: memref<16x1xf32, #tpu.memory_space<vmem>>, %arg7: memref<16x16xbf16, #tpu.memory_space<vmem>>, %arg8: memref<16x1xf32, #tpu.memory_space<vmem>>, %arg9: memref<16x9xf32, #tpu.memory_space<vmem>>, %arg10: memref<16x9xf32, #tpu.memory_space<vmem>>, %arg11: memref<16x1xf32, #tpu.memory_space<vmem>>, %arg12: memref<16x1xf32, #tpu.memory_space<vmem>>, %arg13: memref<64x16xbf16, #tpu.memory_space<vmem>>, %arg14: memref<64x9xf32, #tpu.memory_space<vmem>>, %arg15: memref<16x64xbf16, #tpu.memory_space<vmem>>, %arg16: memref<1x16x256xf32, #tpu.memory_space<vmem>>) attributes {dimension_semantics = [#tpu.dimension_semantics<parallel>], iteration_bounds = array<i64: 2>, scalar_prefetch = 0 : i64, scratch_operands = 0 : i64, tpu.core_type = #tpu.core_type<tc>, window_params = [{transform_indices = @transform_0, window_bounds = array<i64: 1, 16, 256>}, {pipeline_mode = #tpu.pipeline_mode<synchronous>, transform_indices = @transform_1, window_bounds = array<i64: 1, 256>}, {pipeline_mode = #tpu.pipeline_mode<synchronous>, transform_indices = @transform_2, window_bounds = array<i64: 1, 256>}, {pipeline_mode = #tpu.pipeline_mode<synchronous>, transform_indices = @transform_3, window_bounds = array<i64: 16, 16>}, {pipeline_mode = #tpu.pipeline_mode<synchronous>, transform_indices = @transform_4, window_bounds = array<i64: 48, 16>}, {pipeline_mode = #tpu.pipeline_mode<synchronous>, transform_indices = @transform_5, window_bounds = array<i64: 16, 1>}, {pipeline_mode = #tpu.pipeline_mode<synchronous>, transform_indices = @transform_6, window_bounds = array<i64: 16, 16>}, {pipeline_mode = #tpu.pipeline_mode<synchronous>, transform_indices = @transform_7, window_bounds = array<i64: 16, 1>}, {pipeline_mode = #tpu.pipeline_mode<synchronous>, transform_indices = @transform_8, window_bounds = array<i64: 16, 9>}, {pipeline_mode = #tpu.pipeline_mode<synchronous>, transform_indices = @transform_9, window_bounds = array<i64: 16, 9>}, {pipeline_mode = #tpu.pipeline_mode<synchronous>, transform_indices = @transform_10, window_bounds = array<i64: 16, 1>}, {pipeline_mode = #tpu.pipeline_mode<synchronous>, transform_indices = @transform_11, window_bounds = array<i64: 16, 1>}, {pipeline_mode = #tpu.pipeline_mode<synchronous>, transform_indices = @transform_12, window_bounds = array<i64: 64, 16>}, {pipeline_mode = #tpu.pipeline_mode<synchronous>, transform_indices = @transform_13, window_bounds = array<i64: 64, 9>}, {pipeline_mode = #tpu.pipeline_mode<synchronous>, transform_indices = @transform_14, window_bounds = array<i64: 16, 64>}, {transform_indices = @transform_15, window_bounds = array<i64: 1, 16, 256>}]} {
    %c0 = arith.constant 0 : index
    %c0_0 = arith.constant 0 : index
    %c0_1 = arith.constant 0 : index
    %0 = vector.load %arg1[%c0, %c0_0, %c0_1] : memref<1x16x256xf32, #tpu.memory_space<vmem>>, vector<1x16x256xf32>
    %1 = vector.shape_cast %0 : vector<1x16x256xf32> to vector<16x256xf32>
    %c0_2 = arith.constant 0 : index
    %c0_3 = arith.constant 0 : index
    %2 = vector.load %arg2[%c0_2, %c0_3] : memref<1x256xf32, #tpu.memory_space<vmem>>, vector<1x256xf32>
    %c0_4 = arith.constant 0 : index
    %c0_5 = arith.constant 0 : index
    %3 = vector.load %arg3[%c0_4, %c0_5] : memref<1x256xf32, #tpu.memory_space<vmem>>, vector<1x256xf32>
    %c0_6 = arith.constant 0 : index
    %c0_7 = arith.constant 0 : index
    %4 = vector.load %arg5[%c0_6, %c0_7] : memref<48x16xbf16, #tpu.memory_space<vmem>>, vector<48x16xbf16>
    %5 = arith.truncf %1 : vector<16x256xf32> to vector<16x256xbf16>
    %cst = arith.constant dense<0.000000e+00> : vector<48x256xf32>
    %6 = tpu.matmul %4, %5, %cst {dimension_numbers = #tpu.dot_dimension_numbers<[1], [0], [0], [1], [0, 0, 1, 1], [], []>} : vector<48x16xbf16>, vector<16x256xbf16>, vector<48x256xf32> -> vector<48x256xf32>
    %7 = vector.extract_strided_slice %6 {offsets = [0, 0], sizes = [16, 256], strides = [1, 1]} : vector<48x256xf32> to vector<16x256xf32>
    %8 = vector.extract_strided_slice %6 {offsets = [16, 0], sizes = [16, 256], strides = [1, 1]} : vector<48x256xf32> to vector<16x256xf32>
    %9 = vector.extract_strided_slice %6 {offsets = [32, 0], sizes = [16, 256], strides = [1, 1]} : vector<48x256xf32> to vector<16x256xf32>
    %10 = arith.mulf %8, %8 : vector<16x256xf32>
    %cst_8 = arith.constant dense<0.000000e+00> : vector<16xf32>
    %11 = vector.multi_reduction <add>, %10, %cst_8 [1] : vector<16x256xf32> to vector<16xf32>
    %12 = vector.shape_cast %11 : vector<16xf32> to vector<16x1xf32>
    %13 = math.sqrt %12 : vector<16x1xf32>
    %cst_9 = arith.constant 9.99999996E-13 : f32
    %14 = vector.broadcast %cst_9 : f32 to vector<16x1xf32>
    %15 = arith.maximumf %13, %14 : vector<16x1xf32>
    %cst_10 = arith.constant 1.000000e+00 : f32
    %16 = vector.broadcast %cst_10 : f32 to vector<16x1xf32>
    %17 = arith.divf %16, %15 : vector<16x1xf32>
    %18 = arith.mulf %7, %7 : vector<16x256xf32>
    %cst_11 = arith.constant dense<0.000000e+00> : vector<16xf32>
    %19 = vector.multi_reduction <add>, %18, %cst_11 [1] : vector<16x256xf32> to vector<16xf32>
    %20 = vector.shape_cast %19 : vector<16xf32> to vector<16x1xf32>
    %21 = math.sqrt %20 : vector<16x1xf32>
    %cst_12 = arith.constant 9.99999996E-13 : f32
    %22 = vector.broadcast %cst_12 : f32 to vector<16x1xf32>
    %23 = arith.maximumf %21, %22 : vector<16x1xf32>
    %cst_13 = arith.constant 1.000000e+00 : f32
    %24 = vector.broadcast %cst_13 : f32 to vector<16x1xf32>
    %25 = arith.divf %24, %23 : vector<16x1xf32>
    %26 = tpu.iota {dimensions = array<i32: 0>} : vector<16x16xi32>
    %27 = tpu.iota {dimensions = array<i32: 1>} : vector<16x16xi32>
    %28 = arith.cmpi eq, %26, %27 : vector<16x16xi32>
    %29 = arith.extui %28 : vector<16x16xi1> to vector<16x16xi32>
    %30 = arith.sitofp %29 : vector<16x16xi32> to vector<16x16xf32>
    %31 = vector.broadcast %25 : vector<16x1xf32> to vector<16x16xf32>
    %32 = arith.mulf %30, %31 : vector<16x16xf32>
    %cst_14 = arith.constant dense<0.000000e+00> : vector<16xf32>
    %33 = vector.multi_reduction <add>, %32, %cst_14 [0] : vector<16x16xf32> to vector<16xf32>
    %34 = vector.shape_cast %33 : vector<16xf32> to vector<1x16xf32>
    %35 = arith.truncf %7 : vector<16x256xf32> to vector<16x256xbf16>
    %36 = arith.truncf %8 : vector<16x256xf32> to vector<16x256xbf16>
    %37 = arith.truncf %9 : vector<16x256xf32> to vector<16x256xbf16>
    %cst_15 = arith.constant dense<0.000000e+00> : vector<16x16xf32>
    %38 = tpu.matmul %36, %35, %cst_15 {dimension_numbers = #tpu.dot_dimension_numbers<[1], [1], [0], [0], [0, 0, 1, 0], [], []>} : vector<16x256xbf16>, vector<16x256xbf16>, vector<16x16xf32> -> vector<16x16xf32>
    %c0_16 = arith.constant 0 : index
    %c0_17 = arith.constant 0 : index
    %39 = vector.load %arg6[%c0_16, %c0_17] : memref<16x1xf32, #tpu.memory_space<vmem>>, vector<16x1xf32>
    %40 = arith.mulf %17, %39 : vector<16x1xf32>
    %41 = vector.broadcast %40 : vector<16x1xf32> to vector<16x16xf32>
    %42 = arith.mulf %38, %41 : vector<16x16xf32>
    %43 = vector.broadcast %34 : vector<1x16xf32> to vector<16x16xf32>
    %44 = arith.mulf %42, %43 : vector<16x16xf32>
    %c0_18 = arith.constant 0 : index
    %c0_19 = arith.constant 0 : index
    %45 = vector.load %arg4[%c0_18, %c0_19] : memref<16x16xf32, #tpu.memory_space<vmem>>, vector<16x16xf32>
    %46 = arith.addf %44, %45 : vector<16x16xf32>
    %cst_20 = arith.constant dense<0xFF800000> : vector<16xf32>
    %47 = vector.multi_reduction <maximumf>, %46, %cst_20 [1] : vector<16x16xf32> to vector<16xf32>
    %48 = vector.shape_cast %47 : vector<16xf32> to vector<16x1xf32>
    %49 = vector.broadcast %48 : vector<16x1xf32> to vector<16x16xf32>
    %50 = arith.subf %46, %49 : vector<16x16xf32>
    %51 = math.exp %50 : vector<16x16xf32>
    %cst_21 = arith.constant dense<0.000000e+00> : vector<16xf32>
    %52 = vector.multi_reduction <add>, %51, %cst_21 [1] : vector<16x16xf32> to vector<16xf32>
    %53 = vector.shape_cast %52 : vector<16xf32> to vector<16x1xf32>
    %54 = tpu.reciprocal %53 {approx = true} : vector<16x1xf32> -> vector<16x1xf32>
    %55 = vector.broadcast %54 : vector<16x1xf32> to vector<16x16xf32>
    %56 = arith.mulf %51, %55 : vector<16x16xf32>
    %c0_22 = arith.constant 0 : index
    %c0_23 = arith.constant 0 : index
    %57 = vector.load %arg7[%c0_22, %c0_23] : memref<16x16xbf16, #tpu.memory_space<vmem>>, vector<16x16xbf16>
    %58 = arith.truncf %56 : vector<16x16xf32> to vector<16x16xbf16>
    %cst_24 = arith.constant dense<0.000000e+00> : vector<16x16xf32>
    %59 = tpu.matmul %57, %58, %cst_24 {dimension_numbers = #tpu.dot_dimension_numbers<[1], [0], [0], [1], [0, 0, 1, 1], [], []>} : vector<16x16xbf16>, vector<16x16xbf16>, vector<16x16xf32> -> vector<16x16xf32>
    %60 = arith.truncf %59 : vector<16x16xf32> to vector<16x16xbf16>
    %cst_25 = arith.constant dense<0.000000e+00> : vector<16x256xf32>
    %61 = tpu.matmul %60, %37, %cst_25 {dimension_numbers = #tpu.dot_dimension_numbers<[1], [0], [0], [1], [0, 0, 1, 1], [], []>} : vector<16x16xbf16>, vector<16x256xbf16>, vector<16x256xf32> -> vector<16x256xf32>
    %c0_26 = arith.constant 0 : index
    %c0_27 = arith.constant 0 : index
    %62 = vector.load %arg8[%c0_26, %c0_27] : memref<16x1xf32, #tpu.memory_space<vmem>>, vector<16x1xf32>
    %63 = vector.broadcast %62 : vector<16x1xf32> to vector<16x256xf32>
    %64 = arith.addf %61, %63 : vector<16x256xf32>
    %c0_28 = arith.constant 0 : index
    %c0_29 = arith.constant 0 : index
    %65 = vector.load %arg9[%c0_28, %c0_29] : memref<16x9xf32, #tpu.memory_space<vmem>>, vector<16x9xf32>
    %cst_30 = arith.constant 0.000000e+00 : f32
    %66 = vector.broadcast %cst_30 : f32 to vector<16x17xf32>
    %67 = tpu.concatenate %66, %9, %66 in 1 : vector<16x17xf32>, vector<16x256xf32>, vector<16x17xf32> -> vector<16x290xf32>
    %68 = vector.extract_strided_slice %65 {offsets = [0, 4], sizes = [16, 1], strides = [1, 1]} : vector<16x9xf32> to vector<16x1xf32>
    %69 = vector.broadcast %68 : vector<16x1xf32> to vector<16x256xf32>
    %70 = arith.mulf %9, %69 : vector<16x256xf32>
    %71 = vector.extract_strided_slice %67 {offsets = [0, 0], sizes = [16, 256], strides = [1, 1]} : vector<16x290xf32> to vector<16x256xf32>
    %72 = vector.broadcast %2 : vector<1x256xf32> to vector<16x256xf32>
    %73 = arith.mulf %71, %72 : vector<16x256xf32>
    %74 = vector.extract_strided_slice %65 {offsets = [0, 0], sizes = [16, 1], strides = [1, 1]} : vector<16x9xf32> to vector<16x1xf32>
    %75 = vector.broadcast %74 : vector<16x1xf32> to vector<16x256xf32>
    %76 = arith.mulf %73, %75 : vector<16x256xf32>
    %77 = arith.addf %70, %76 : vector<16x256xf32>
    %78 = vector.extract_strided_slice %67 {offsets = [0, 1], sizes = [16, 256], strides = [1, 1]} : vector<16x290xf32> to vector<16x256xf32>
    %79 = vector.extract_strided_slice %65 {offsets = [0, 1], sizes = [16, 1], strides = [1, 1]} : vector<16x9xf32> to vector<16x1xf32>
    %80 = vector.broadcast %79 : vector<16x1xf32> to vector<16x256xf32>
    %81 = arith.mulf %78, %80 : vector<16x256xf32>
    %82 = arith.addf %77, %81 : vector<16x256xf32>
    %83 = vector.extract_strided_slice %67 {offsets = [0, 2], sizes = [16, 256], strides = [1, 1]} : vector<16x290xf32> to vector<16x256xf32>
    %84 = vector.broadcast %3 : vector<1x256xf32> to vector<16x256xf32>
    %85 = arith.mulf %83, %84 : vector<16x256xf32>
    %86 = vector.extract_strided_slice %65 {offsets = [0, 2], sizes = [16, 1], strides = [1, 1]} : vector<16x9xf32> to vector<16x1xf32>
    %87 = vector.broadcast %86 : vector<16x1xf32> to vector<16x256xf32>
    %88 = arith.mulf %85, %87 : vector<16x256xf32>
    %89 = arith.addf %82, %88 : vector<16x256xf32>
    %90 = vector.extract_strided_slice %67 {offsets = [0, 16], sizes = [16, 256], strides = [1, 1]} : vector<16x290xf32> to vector<16x256xf32>
    %91 = vector.broadcast %2 : vector<1x256xf32> to vector<16x256xf32>
    %92 = arith.mulf %90, %91 : vector<16x256xf32>
    %93 = vector.extract_strided_slice %65 {offsets = [0, 3], sizes = [16, 1], strides = [1, 1]} : vector<16x9xf32> to vector<16x1xf32>
    %94 = vector.broadcast %93 : vector<16x1xf32> to vector<16x256xf32>
    %95 = arith.mulf %92, %94 : vector<16x256xf32>
    %96 = arith.addf %89, %95 : vector<16x256xf32>
    %97 = vector.extract_strided_slice %67 {offsets = [0, 18], sizes = [16, 256], strides = [1, 1]} : vector<16x290xf32> to vector<16x256xf32>
    %98 = vector.broadcast %3 : vector<1x256xf32> to vector<16x256xf32>
    %99 = arith.mulf %97, %98 : vector<16x256xf32>
    %100 = vector.extract_strided_slice %65 {offsets = [0, 5], sizes = [16, 1], strides = [1, 1]} : vector<16x9xf32> to vector<16x1xf32>
    %101 = vector.broadcast %100 : vector<16x1xf32> to vector<16x256xf32>
    %102 = arith.mulf %99, %101 : vector<16x256xf32>
    %103 = arith.addf %96, %102 : vector<16x256xf32>
    %104 = vector.extract_strided_slice %67 {offsets = [0, 32], sizes = [16, 256], strides = [1, 1]} : vector<16x290xf32> to vector<16x256xf32>
    %105 = vector.broadcast %2 : vector<1x256xf32> to vector<16x256xf32>
    %106 = arith.mulf %104, %105 : vector<16x256xf32>
    %107 = vector.extract_strided_slice %65 {offsets = [0, 6], sizes = [16, 1], strides = [1, 1]} : vector<16x9xf32> to vector<16x1xf32>
    %108 = vector.broadcast %107 : vector<16x1xf32> to vector<16x256xf32>
    %109 = arith.mulf %106, %108 : vector<16x256xf32>
    %110 = arith.addf %103, %109 : vector<16x256xf32>
    %111 = vector.extract_strided_slice %67 {offsets = [0, 33], sizes = [16, 256], strides = [1, 1]} : vector<16x290xf32> to vector<16x256xf32>
    %112 = vector.extract_strided_slice %65 {offsets = [0, 7], sizes = [16, 1], strides = [1, 1]} : vector<16x9xf32> to vector<16x1xf32>
    %113 = vector.broadcast %112 : vector<16x1xf32> to vector<16x256xf32>
    %114 = arith.mulf %111, %113 : vector<16x256xf32>
    %115 = arith.addf %110, %114 : vector<16x256xf32>
    %116 = vector.extract_strided_slice %67 {offsets = [0, 34], sizes = [16, 256], strides = [1, 1]} : vector<16x290xf32> to vector<16x256xf32>
    %117 = vector.broadcast %3 : vector<1x256xf32> to vector<16x256xf32>
    %118 = arith.mulf %116, %117 : vector<16x256xf32>
    %119 = vector.extract_strided_slice %65 {offsets = [0, 8], sizes = [16, 1], strides = [1, 1]} : vector<16x9xf32> to vector<16x1xf32>
    %120 = vector.broadcast %119 : vector<16x1xf32> to vector<16x256xf32>
    %121 = arith.mulf %118, %120 : vector<16x256xf32>
    %122 = arith.addf %115, %121 : vector<16x256xf32>
    %cst_31 = arith.constant 5.000000e-01 : f32
    %123 = vector.broadcast %cst_31 : f32 to vector<16x256xf32>
    %124 = arith.mulf %123, %122 : vector<16x256xf32>
    %cst_32 = arith.constant 4.471500e-02 : f32
    %125 = vector.broadcast %cst_32 : f32 to vector<16x256xf32>
    %126 = arith.mulf %125, %122 : vector<16x256xf32>
    %127 = arith.mulf %126, %122 : vector<16x256xf32>
    %128 = arith.mulf %127, %122 : vector<16x256xf32>
    %129 = arith.addf %122, %128 : vector<16x256xf32>
    %cst_33 = arith.constant 0.797884583 : f32
    %130 = vector.broadcast %cst_33 : f32 to vector<16x256xf32>
    %131 = arith.mulf %130, %129 : vector<16x256xf32>
    %132 = math.tanh %131 : vector<16x256xf32>
    %cst_34 = arith.constant 1.000000e+00 : f32
    %133 = vector.broadcast %cst_34 : f32 to vector<16x256xf32>
    %134 = arith.addf %133, %132 : vector<16x256xf32>
    %135 = arith.mulf %124, %134 : vector<16x256xf32>
    %c0_35 = arith.constant 0 : index
    %c0_36 = arith.constant 0 : index
    %136 = vector.load %arg10[%c0_35, %c0_36] : memref<16x9xf32, #tpu.memory_space<vmem>>, vector<16x9xf32>
    %cst_37 = arith.constant 0.000000e+00 : f32
    %137 = vector.broadcast %cst_37 : f32 to vector<16x17xf32>
    %138 = tpu.concatenate %137, %135, %137 in 1 : vector<16x17xf32>, vector<16x256xf32>, vector<16x17xf32> -> vector<16x290xf32>
    %139 = vector.extract_strided_slice %136 {offsets = [0, 4], sizes = [16, 1], strides = [1, 1]} : vector<16x9xf32> to vector<16x1xf32>
    %140 = vector.broadcast %139 : vector<16x1xf32> to vector<16x256xf32>
    %141 = arith.mulf %135, %140 : vector<16x256xf32>
    %142 = vector.extract_strided_slice %138 {offsets = [0, 0], sizes = [16, 256], strides = [1, 1]} : vector<16x290xf32> to vector<16x256xf32>
    %143 = vector.broadcast %2 : vector<1x256xf32> to vector<16x256xf32>
    %144 = arith.mulf %142, %143 : vector<16x256xf32>
    %145 = vector.extract_strided_slice %136 {offsets = [0, 0], sizes = [16, 1], strides = [1, 1]} : vector<16x9xf32> to vector<16x1xf32>
    %146 = vector.broadcast %145 : vector<16x1xf32> to vector<16x256xf32>
    %147 = arith.mulf %144, %146 : vector<16x256xf32>
    %148 = arith.addf %141, %147 : vector<16x256xf32>
    %149 = vector.extract_strided_slice %138 {offsets = [0, 1], sizes = [16, 256], strides = [1, 1]} : vector<16x290xf32> to vector<16x256xf32>
    %150 = vector.extract_strided_slice %136 {offsets = [0, 1], sizes = [16, 1], strides = [1, 1]} : vector<16x9xf32> to vector<16x1xf32>
    %151 = vector.broadcast %150 : vector<16x1xf32> to vector<16x256xf32>
    %152 = arith.mulf %149, %151 : vector<16x256xf32>
    %153 = arith.addf %148, %152 : vector<16x256xf32>
    %154 = vector.extract_strided_slice %138 {offsets = [0, 2], sizes = [16, 256], strides = [1, 1]} : vector<16x290xf32> to vector<16x256xf32>
    %155 = vector.broadcast %3 : vector<1x256xf32> to vector<16x256xf32>
    %156 = arith.mulf %154, %155 : vector<16x256xf32>
    %157 = vector.extract_strided_slice %136 {offsets = [0, 2], sizes = [16, 1], strides = [1, 1]} : vector<16x9xf32> to vector<16x1xf32>
    %158 = vector.broadcast %157 : vector<16x1xf32> to vector<16x256xf32>
    %159 = arith.mulf %156, %158 : vector<16x256xf32>
    %160 = arith.addf %153, %159 : vector<16x256xf32>
    %161 = vector.extract_strided_slice %138 {offsets = [0, 16], sizes = [16, 256], strides = [1, 1]} : vector<16x290xf32> to vector<16x256xf32>
    %162 = vector.broadcast %2 : vector<1x256xf32> to vector<16x256xf32>
    %163 = arith.mulf %161, %162 : vector<16x256xf32>
    %164 = vector.extract_strided_slice %136 {offsets = [0, 3], sizes = [16, 1], strides = [1, 1]} : vector<16x9xf32> to vector<16x1xf32>
    %165 = vector.broadcast %164 : vector<16x1xf32> to vector<16x256xf32>
    %166 = arith.mulf %163, %165 : vector<16x256xf32>
    %167 = arith.addf %160, %166 : vector<16x256xf32>
    %168 = vector.extract_strided_slice %138 {offsets = [0, 18], sizes = [16, 256], strides = [1, 1]} : vector<16x290xf32> to vector<16x256xf32>
    %169 = vector.broadcast %3 : vector<1x256xf32> to vector<16x256xf32>
    %170 = arith.mulf %168, %169 : vector<16x256xf32>
    %171 = vector.extract_strided_slice %136 {offsets = [0, 5], sizes = [16, 1], strides = [1, 1]} : vector<16x9xf32> to vector<16x1xf32>
    %172 = vector.broadcast %171 : vector<16x1xf32> to vector<16x256xf32>
    %173 = arith.mulf %170, %172 : vector<16x256xf32>
    %174 = arith.addf %167, %173 : vector<16x256xf32>
    %175 = vector.extract_strided_slice %138 {offsets = [0, 32], sizes = [16, 256], strides = [1, 1]} : vector<16x290xf32> to vector<16x256xf32>
    %176 = vector.broadcast %2 : vector<1x256xf32> to vector<16x256xf32>
    %177 = arith.mulf %175, %176 : vector<16x256xf32>
    %178 = vector.extract_strided_slice %136 {offsets = [0, 6], sizes = [16, 1], strides = [1, 1]} : vector<16x9xf32> to vector<16x1xf32>
    %179 = vector.broadcast %178 : vector<16x1xf32> to vector<16x256xf32>
    %180 = arith.mulf %177, %179 : vector<16x256xf32>
    %181 = arith.addf %174, %180 : vector<16x256xf32>
    %182 = vector.extract_strided_slice %138 {offsets = [0, 33], sizes = [16, 256], strides = [1, 1]} : vector<16x290xf32> to vector<16x256xf32>
    %183 = vector.extract_strided_slice %136 {offsets = [0, 7], sizes = [16, 1], strides = [1, 1]} : vector<16x9xf32> to vector<16x1xf32>
    %184 = vector.broadcast %183 : vector<16x1xf32> to vector<16x256xf32>
    %185 = arith.mulf %182, %184 : vector<16x256xf32>
    %186 = arith.addf %181, %185 : vector<16x256xf32>
    %187 = vector.extract_strided_slice %138 {offsets = [0, 34], sizes = [16, 256], strides = [1, 1]} : vector<16x290xf32> to vector<16x256xf32>
    %188 = vector.broadcast %3 : vector<1x256xf32> to vector<16x256xf32>
    %189 = arith.mulf %187, %188 : vector<16x256xf32>
    %190 = vector.extract_strided_slice %136 {offsets = [0, 8], sizes = [16, 1], strides = [1, 1]} : vector<16x9xf32> to vector<16x1xf32>
    %191 = vector.broadcast %190 : vector<16x1xf32> to vector<16x256xf32>
    %192 = arith.mulf %189, %191 : vector<16x256xf32>
    %193 = arith.addf %186, %192 : vector<16x256xf32>
    %194 = arith.addf %1, %64 : vector<16x256xf32>
    %195 = arith.addf %194, %193 : vector<16x256xf32>
    %cst_38 = arith.constant dense<0.000000e+00> : vector<256xf32>
    %196 = vector.multi_reduction <add>, %195, %cst_38 [0] : vector<16x256xf32> to vector<256xf32>
    %197 = vector.shape_cast %196 : vector<256xf32> to vector<1x256xf32>
    %cst_39 = arith.constant 1.600000e+01 : f32
    %198 = vector.broadcast %cst_39 : f32 to vector<1x256xf32>
    %199 = arith.divf %197, %198 : vector<1x256xf32>
    %200 = vector.broadcast %199 : vector<1x256xf32> to vector<16x256xf32>
    %201 = arith.subf %195, %200 : vector<16x256xf32>
    %202 = arith.mulf %201, %201 : vector<16x256xf32>
    %cst_40 = arith.constant dense<0.000000e+00> : vector<256xf32>
    %203 = vector.multi_reduction <add>, %202, %cst_40 [0] : vector<16x256xf32> to vector<256xf32>
    %204 = vector.shape_cast %203 : vector<256xf32> to vector<1x256xf32>
    %cst_41 = arith.constant 1.600000e+01 : f32
    %205 = vector.broadcast %cst_41 : f32 to vector<1x256xf32>
    %206 = arith.divf %204, %205 : vector<1x256xf32>
    %cst_42 = arith.constant 9.99999974E-6 : f32
    %207 = vector.broadcast %cst_42 : f32 to vector<1x256xf32>
    %208 = arith.addf %206, %207 : vector<1x256xf32>
    %209 = math.rsqrt %208 : vector<1x256xf32>
    %210 = vector.broadcast %209 : vector<1x256xf32> to vector<16x256xf32>
    %211 = arith.mulf %201, %210 : vector<16x256xf32>
    %c0_43 = arith.constant 0 : index
    %c0_44 = arith.constant 0 : index
    %212 = vector.load %arg11[%c0_43, %c0_44] : memref<16x1xf32, #tpu.memory_space<vmem>>, vector<16x1xf32>
    %213 = vector.broadcast %212 : vector<16x1xf32> to vector<16x256xf32>
    %214 = arith.mulf %211, %213 : vector<16x256xf32>
    %c0_45 = arith.constant 0 : index
    %c0_46 = arith.constant 0 : index
    %215 = vector.load %arg12[%c0_45, %c0_46] : memref<16x1xf32, #tpu.memory_space<vmem>>, vector<16x1xf32>
    %216 = vector.broadcast %215 : vector<16x1xf32> to vector<16x256xf32>
    %217 = arith.addf %214, %216 : vector<16x256xf32>
    %c0_47 = arith.constant 0 : index
    %c0_48 = arith.constant 0 : index
    %218 = vector.load %arg13[%c0_47, %c0_48] : memref<64x16xbf16, #tpu.memory_space<vmem>>, vector<64x16xbf16>
    %219 = arith.truncf %217 : vector<16x256xf32> to vector<16x256xbf16>
    %cst_49 = arith.constant dense<0.000000e+00> : vector<64x256xf32>
    %220 = tpu.matmul %218, %219, %cst_49 {dimension_numbers = #tpu.dot_dimension_numbers<[1], [0], [0], [1], [0, 0, 1, 1], [], []>} : vector<64x16xbf16>, vector<16x256xbf16>, vector<64x256xf32> -> vector<64x256xf32>
    %cst_50 = arith.constant 5.000000e-01 : f32
    %221 = vector.broadcast %cst_50 : f32 to vector<64x256xf32>
    %222 = arith.mulf %221, %220 : vector<64x256xf32>
    %cst_51 = arith.constant 4.471500e-02 : f32
    %223 = vector.broadcast %cst_51 : f32 to vector<64x256xf32>
    %224 = arith.mulf %223, %220 : vector<64x256xf32>
    %225 = arith.mulf %224, %220 : vector<64x256xf32>
    %226 = arith.mulf %225, %220 : vector<64x256xf32>
    %227 = arith.addf %220, %226 : vector<64x256xf32>
    %cst_52 = arith.constant 0.797884583 : f32
    %228 = vector.broadcast %cst_52 : f32 to vector<64x256xf32>
    %229 = arith.mulf %228, %227 : vector<64x256xf32>
    %230 = math.tanh %229 : vector<64x256xf32>
    %cst_53 = arith.constant 1.000000e+00 : f32
    %231 = vector.broadcast %cst_53 : f32 to vector<64x256xf32>
    %232 = arith.addf %231, %230 : vector<64x256xf32>
    %233 = arith.mulf %222, %232 : vector<64x256xf32>
    %c0_54 = arith.constant 0 : index
    %c0_55 = arith.constant 0 : index
    %234 = vector.load %arg14[%c0_54, %c0_55] : memref<64x9xf32, #tpu.memory_space<vmem>>, vector<64x9xf32>
    %cst_56 = arith.constant 0.000000e+00 : f32
    %235 = vector.broadcast %cst_56 : f32 to vector<64x17xf32>
    %236 = tpu.concatenate %235, %233, %235 in 1 : vector<64x17xf32>, vector<64x256xf32>, vector<64x17xf32> -> vector<64x290xf32>
    %237 = vector.extract_strided_slice %234 {offsets = [0, 4], sizes = [64, 1], strides = [1, 1]} : vector<64x9xf32> to vector<64x1xf32>
    %238 = vector.broadcast %237 : vector<64x1xf32> to vector<64x256xf32>
    %239 = arith.mulf %233, %238 : vector<64x256xf32>
    %240 = vector.extract_strided_slice %236 {offsets = [0, 0], sizes = [64, 256], strides = [1, 1]} : vector<64x290xf32> to vector<64x256xf32>
    %241 = vector.broadcast %2 : vector<1x256xf32> to vector<64x256xf32>
    %242 = arith.mulf %240, %241 : vector<64x256xf32>
    %243 = vector.extract_strided_slice %234 {offsets = [0, 0], sizes = [64, 1], strides = [1, 1]} : vector<64x9xf32> to vector<64x1xf32>
    %244 = vector.broadcast %243 : vector<64x1xf32> to vector<64x256xf32>
    %245 = arith.mulf %242, %244 : vector<64x256xf32>
    %246 = arith.addf %239, %245 : vector<64x256xf32>
    %247 = vector.extract_strided_slice %236 {offsets = [0, 1], sizes = [64, 256], strides = [1, 1]} : vector<64x290xf32> to vector<64x256xf32>
    %248 = vector.extract_strided_slice %234 {offsets = [0, 1], sizes = [64, 1], strides = [1, 1]} : vector<64x9xf32> to vector<64x1xf32>
    %249 = vector.broadcast %248 : vector<64x1xf32> to vector<64x256xf32>
    %250 = arith.mulf %247, %249 : vector<64x256xf32>
    %251 = arith.addf %246, %250 : vector<64x256xf32>
    %252 = vector.extract_strided_slice %236 {offsets = [0, 2], sizes = [64, 256], strides = [1, 1]} : vector<64x290xf32> to vector<64x256xf32>
    %253 = vector.broadcast %3 : vector<1x256xf32> to vector<64x256xf32>
    %254 = arith.mulf %252, %253 : vector<64x256xf32>
    %255 = vector.extract_strided_slice %234 {offsets = [0, 2], sizes = [64, 1], strides = [1, 1]} : vector<64x9xf32> to vector<64x1xf32>
    %256 = vector.broadcast %255 : vector<64x1xf32> to vector<64x256xf32>
    %257 = arith.mulf %254, %256 : vector<64x256xf32>
    %258 = arith.addf %251, %257 : vector<64x256xf32>
    %259 = vector.extract_strided_slice %236 {offsets = [0, 16], sizes = [64, 256], strides = [1, 1]} : vector<64x290xf32> to vector<64x256xf32>
    %260 = vector.broadcast %2 : vector<1x256xf32> to vector<64x256xf32>
    %261 = arith.mulf %259, %260 : vector<64x256xf32>
    %262 = vector.extract_strided_slice %234 {offsets = [0, 3], sizes = [64, 1], strides = [1, 1]} : vector<64x9xf32> to vector<64x1xf32>
    %263 = vector.broadcast %262 : vector<64x1xf32> to vector<64x256xf32>
    %264 = arith.mulf %261, %263 : vector<64x256xf32>
    %265 = arith.addf %258, %264 : vector<64x256xf32>
    %266 = vector.extract_strided_slice %236 {offsets = [0, 18], sizes = [64, 256], strides = [1, 1]} : vector<64x290xf32> to vector<64x256xf32>
    %267 = vector.broadcast %3 : vector<1x256xf32> to vector<64x256xf32>
    %268 = arith.mulf %266, %267 : vector<64x256xf32>
    %269 = vector.extract_strided_slice %234 {offsets = [0, 5], sizes = [64, 1], strides = [1, 1]} : vector<64x9xf32> to vector<64x1xf32>
    %270 = vector.broadcast %269 : vector<64x1xf32> to vector<64x256xf32>
    %271 = arith.mulf %268, %270 : vector<64x256xf32>
    %272 = arith.addf %265, %271 : vector<64x256xf32>
    %273 = vector.extract_strided_slice %236 {offsets = [0, 32], sizes = [64, 256], strides = [1, 1]} : vector<64x290xf32> to vector<64x256xf32>
    %274 = vector.broadcast %2 : vector<1x256xf32> to vector<64x256xf32>
    %275 = arith.mulf %273, %274 : vector<64x256xf32>
    %276 = vector.extract_strided_slice %234 {offsets = [0, 6], sizes = [64, 1], strides = [1, 1]} : vector<64x9xf32> to vector<64x1xf32>
    %277 = vector.broadcast %276 : vector<64x1xf32> to vector<64x256xf32>
    %278 = arith.mulf %275, %277 : vector<64x256xf32>
    %279 = arith.addf %272, %278 : vector<64x256xf32>
    %280 = vector.extract_strided_slice %236 {offsets = [0, 33], sizes = [64, 256], strides = [1, 1]} : vector<64x290xf32> to vector<64x256xf32>
    %281 = vector.extract_strided_slice %234 {offsets = [0, 7], sizes = [64, 1], strides = [1, 1]} : vector<64x9xf32> to vector<64x1xf32>
    %282 = vector.broadcast %281 : vector<64x1xf32> to vector<64x256xf32>
    %283 = arith.mulf %280, %282 : vector<64x256xf32>
    %284 = arith.addf %279, %283 : vector<64x256xf32>
    %285 = vector.extract_strided_slice %236 {offsets = [0, 34], sizes = [64, 256], strides = [1, 1]} : vector<64x290xf32> to vector<64x256xf32>
    %286 = vector.broadcast %3 : vector<1x256xf32> to vector<64x256xf32>
    %287 = arith.mulf %285, %286 : vector<64x256xf32>
    %288 = vector.extract_strided_slice %234 {offsets = [0, 8], sizes = [64, 1], strides = [1, 1]} : vector<64x9xf32> to vector<64x1xf32>
    %289 = vector.broadcast %288 : vector<64x1xf32> to vector<64x256xf32>
    %290 = arith.mulf %287, %289 : vector<64x256xf32>
    %291 = arith.addf %284, %290 : vector<64x256xf32>
    %cst_57 = arith.constant 5.000000e-01 : f32
    %292 = vector.broadcast %cst_57 : f32 to vector<64x256xf32>
    %293 = arith.mulf %292, %291 : vector<64x256xf32>
    %cst_58 = arith.constant 4.471500e-02 : f32
    %294 = vector.broadcast %cst_58 : f32 to vector<64x256xf32>
    %295 = arith.mulf %294, %291 : vector<64x256xf32>
    %296 = arith.mulf %295, %291 : vector<64x256xf32>
    %297 = arith.mulf %296, %291 : vector<64x256xf32>
    %298 = arith.addf %291, %297 : vector<64x256xf32>
    %cst_59 = arith.constant 0.797884583 : f32
    %299 = vector.broadcast %cst_59 : f32 to vector<64x256xf32>
    %300 = arith.mulf %299, %298 : vector<64x256xf32>
    %301 = math.tanh %300 : vector<64x256xf32>
    %cst_60 = arith.constant 1.000000e+00 : f32
    %302 = vector.broadcast %cst_60 : f32 to vector<64x256xf32>
    %303 = arith.addf %302, %301 : vector<64x256xf32>
    %304 = arith.mulf %293, %303 : vector<64x256xf32>
    %c0_61 = arith.constant 0 : index
    %c0_62 = arith.constant 0 : index
    %305 = vector.load %arg15[%c0_61, %c0_62] : memref<16x64xbf16, #tpu.memory_space<vmem>>, vector<16x64xbf16>
    %306 = arith.truncf %304 : vector<64x256xf32> to vector<64x256xbf16>
    %cst_63 = arith.constant dense<0.000000e+00> : vector<16x256xf32>
    %307 = tpu.matmul %305, %306, %cst_63 {dimension_numbers = #tpu.dot_dimension_numbers<[1], [0], [0], [1], [0, 0, 1, 1], [], []>} : vector<16x64xbf16>, vector<64x256xbf16>, vector<16x256xf32> -> vector<16x256xf32>
    %308 = arith.addf %307, %195 : vector<16x256xf32>
    %c0_64 = arith.constant 0 : index
    %c0_65 = arith.constant 0 : index
    %c0_66 = arith.constant 0 : index
    %309 = vector.load %arg16[%c0_64, %c0_65, %c0_66] : memref<1x16x256xf32, #tpu.memory_space<vmem>>, vector<1x16x256xf32>
    %310 = vector.shape_cast %309 : vector<1x16x256xf32> to vector<16x256xf32>
    %311 = vector.shape_cast %308 : vector<16x256xf32> to vector<1x16x256xf32>
    tpu.vector_store %arg16[%c0_64, %c0_65, %c0_66], %311 {strides = array<i32>} : memref<1x16x256xf32, #tpu.memory_space<vmem>>, vector<1x16x256xf32>,
    return
  }
  func.func @transform_0(%arg0: i32) -> (i32, i32, i32) {
    %c0_i32 = arith.constant 0 : i32
    %c0_i32_0 = arith.constant 0 : i32
    %c0_i32_1 = arith.constant 0 : i32
    return %arg0, %c0_i32, %c0_i32_0 : i32, i32, i32
  }
  func.func @transform_1(%arg0: i32) -> (i32, i32) {
    %c0_i32 = arith.constant 0 : i32
    %c0_i32_0 = arith.constant 0 : i32
    %c0_i32_1 = arith.constant 0 : i32
    return %c0_i32, %c0_i32_0 : i32, i32
  }
  func.func @transform_2(%arg0: i32) -> (i32, i32) {
    %c0_i32 = arith.constant 0 : i32
    %c0_i32_0 = arith.constant 0 : i32
    %c0_i32_1 = arith.constant 0 : i32
    return %c0_i32, %c0_i32_0 : i32, i32
  }
  func.func @transform_3(%arg0: i32) -> (i32, i32) {
    %c0_i32 = arith.constant 0 : i32
    %c0_i32_0 = arith.constant 0 : i32
    %c0_i32_1 = arith.constant 0 : i32
    return %c0_i32, %c0_i32_0 : i32, i32
  }
  func.func @transform_4(%arg0: i32) -> (i32, i32) {
    %c0_i32 = arith.constant 0 : i32
    %c0_i32_0 = arith.constant 0 : i32
    %c0_i32_1 = arith.constant 0 : i32
    return %c0_i32, %c0_i32_0 : i32, i32
  }
  func.func @transform_5(%arg0: i32) -> (i32, i32) {
    %c0_i32 = arith.constant 0 : i32
    %c0_i32_0 = arith.constant 0 : i32
    %c0_i32_1 = arith.constant 0 : i32
    return %c0_i32, %c0_i32_0 : i32, i32
  }
  func.func @transform_6(%arg0: i32) -> (i32, i32) {
    %c0_i32 = arith.constant 0 : i32
    %c0_i32_0 = arith.constant 0 : i32
    %c0_i32_1 = arith.constant 0 : i32
    return %c0_i32, %c0_i32_0 : i32, i32
  }
  func.func @transform_7(%arg0: i32) -> (i32, i32) {
    %c0_i32 = arith.constant 0 : i32
    %c0_i32_0 = arith.constant 0 : i32
    %c0_i32_1 = arith.constant 0 : i32
    return %c0_i32, %c0_i32_0 : i32, i32
  }
  func.func @transform_8(%arg0: i32) -> (i32, i32) {
    %c0_i32 = arith.constant 0 : i32
    %c0_i32_0 = arith.constant 0 : i32
    %c0_i32_1 = arith.constant 0 : i32
    return %c0_i32, %c0_i32_0 : i32, i32
  }
  func.func @transform_9(%arg0: i32) -> (i32, i32) {
    %c0_i32 = arith.constant 0 : i32
    %c0_i32_0 = arith.constant 0 : i32
    %c0_i32_1 = arith.constant 0 : i32
    return %c0_i32, %c0_i32_0 : i32, i32
  }
  func.func @transform_10(%arg0: i32) -> (i32, i32) {
    %c0_i32 = arith.constant 0 : i32
    %c0_i32_0 = arith.constant 0 : i32
    %c0_i32_1 = arith.constant 0 : i32
    return %c0_i32, %c0_i32_0 : i32, i32
  }
  func.func @transform_11(%arg0: i32) -> (i32, i32) {
    %c0_i32 = arith.constant 0 : i32
    %c0_i32_0 = arith.constant 0 : i32
    %c0_i32_1 = arith.constant 0 : i32
    return %c0_i32, %c0_i32_0 : i32, i32
  }
  func.func @transform_12(%arg0: i32) -> (i32, i32) {
    %c0_i32 = arith.constant 0 : i32
    %c0_i32_0 = arith.constant 0 : i32
    %c0_i32_1 = arith.constant 0 : i32
    return %c0_i32, %c0_i32_0 : i32, i32
  }
  func.func @transform_13(%arg0: i32) -> (i32, i32) {
    %c0_i32 = arith.constant 0 : i32
    %c0_i32_0 = arith.constant 0 : i32
    %c0_i32_1 = arith.constant 0 : i32
    return %c0_i32, %c0_i32_0 : i32, i32
  }
  func.func @transform_14(%arg0: i32) -> (i32, i32) {
    %c0_i32 = arith.constant 0 : i32
    %c0_i32_0 = arith.constant 0 : i32
    %c0_i32_1 = arith.constant 0 : i32
    return %c0_i32, %c0_i32_0 : i32, i32
  }
  func.func @transform_15(%arg0: i32) -> (i32, i32, i32) {
    %c0_i32 = arith.constant 0 : i32
    %c0_i32_0 = arith.constant 0 : i32
    %c0_i32_1 = arith.constant 0 : i32
    return %arg0, %c0_i32, %c0_i32_0 : i32, i32, i32
  }
}

</mosaic_0001>

<llo_original>
// kernel: basic_block_forward.3
$region0: #{basic_block_forward.3}
  #allocation0 [shape = 'u32[]', space=smem, size = 0x4, offset = 0x4, fixed_abs, tag = 'smem constant byte address 0x4 - core index']
  #allocation1 [shape = 'u32[144,128]{1,0:T(1,128)}', space=vmem, size = 0x12000, scoped, tag = 'internal scratch']
  %s0 = inlined_call_operand.vmem [shape: f32[2,8,256], index: 0, kind: input, shape index: {}]
  %s1 = inlined_call_operand.vmem [shape: f32[1,256], index: 1, kind: input, shape index: {}]
  %s2 = inlined_call_operand.vmem [shape: f32[1,256], index: 2, kind: input, shape index: {}]
  %s3 = inlined_call_operand.vmem [shape: bf16[16,72], index: 3, kind: input, shape index: {}]
  %s4 = inlined_call_operand.vmem [shape: f32[16,1], index: 4, kind: input, shape index: {}]
  %s5 = inlined_call_operand.vmem [shape: f32[2,16,256], index: 5, kind: output, shape index: {}]
  %s6 = sld [smem:[#allocation0]]
  $region53: #{basic_block_forward.3} parent=0
    _
  %s8 = ssub.s32 1, %s6
  %s9 = scalar_select 0, %s8, %s6
  loop: start=0, step=1, limit=4
  $region2: #{basic_block_forward.3} parent=0 // loop_pre_header
    _
  $region3: #{basic_block_forward.3} parent=0 // loop_header
    %s11 = sphi 0, %s15
    %p12 = scmp.ge.s32.totalorder %s11, 4
    %s21 = sphi 0, %s23
    %s24 = sphi 0, %s21
    %s25 = sphi 0, %s24
    %s41 = sphi 0, %s25
    %s45 = sphi 0, %s45
    %s47 = sphi 0, %s45
    %s48 = sphi 0, %s47
    %s62 = sphi 0, %s48
    %s66 = sphi 0, %s66
    %s68 = sphi 0, %s66
    %s69 = sphi 0, %s68
    %s83 = sphi 0, %s69
    %s87 = sphi 0, %s87
    %s89 = sphi 0, %s87
    %s90 = sphi 0, %s89
    %s104 = sphi 0, %s90
    %s108 = sphi 0, %s108
    %s110 = sphi 0, %s108
    %s111 = sphi 0, %s110
    %s125 = sphi 0, %s111
    %s131 = sphi 0, %s133
    %s134 = sphi 0, %s131
    %s135 = sphi 0, %s134
    %s151 = sphi 0, %s135
  $region4: #{basic_block_forward.3} parent=0 // loop_header_branch
    %14 = sbr.rel (%p12) target = $region8
  $region5: #{basic_block_forward.3} parent=0 // loop_body
    %s16 = ssub.s32 %s11, 1
    %s17 = ssub.s32 %s11, 2
    %s18 = sadd.s32 %s11, 1
    %s19 = ssub.s32 %s11, %s18
    %p20 = scmp.eq.s32.totalorder %s19, 0
    %s22 = sadd.s32 %s21, 1
    %s23 = scalar_select %p20, %s21, %s22
    %p26 = pneg %p20
    %p27 = scmp.eq.s32.totalorder %s11, 1
    %p28 = por %p26, %p27
    %p29 = scmp.ne.s32.totalorder %s21, %s24
    %p30 = scmp.eq.s32.totalorder %s11, 0
    %p31 = por %p29, %p30
    %p32 = scmp.ne.s32.totalorder %s21, %s24
    %p33 = scmp.eq.s32.totalorder %s16, 1
    %p34 = por %p32, %p33
    %p35 = scmp.ne.s32.totalorder %s24, %s25
    %p36 = scmp.eq.s32.totalorder %s16, 0
    %p37 = por %p35, %p36
    %p38 = scmp.ne.s32.totalorder %s24, %s25
    %p39 = scmp.eq.s32.totalorder %s17, 1
    %p40 = por %p38, %p39
    %p42 = scmp.ne.s32.totalorder %s25, %s41
    %p43 = scmp.eq.s32.totalorder %s17, 0
    %p44 = por %p42, %p43
    %s46 = sadd.s32 %s45, 1
    %p49 = scmp.eq.s32.totalorder %s11, 1
    %p50 = scmp.ne.s32.totalorder %s45, %s47
    %p51 = scmp.eq.s32.totalorder %s11, 0
    %p52 = por %p50, %p51
    %p53 = scmp.ne.s32.totalorder %s45, %s47
    %p54 = scmp.eq.s32.totalorder %s16, 1
    %p55 = por %p53, %p54
    %p56 = scmp.ne.s32.totalorder %s47, %s48
    %p57 = scmp.eq.s32.totalorder %s16, 0
    %p58 = por %p56, %p57
    %p59 = scmp.ne.s32.totalorder %s47, %s48
    %p60 = scmp.eq.s32.totalorder %s17, 1
    %p61 = por %p59, %p60
    %p63 = scmp.ne.s32.totalorder %s48, %s62
    %p64 = scmp.eq.s32.totalorder %s17, 0
    %p65 = por %p63, %p64
    %s67 = sadd.s32 %s66, 1
    %p70 = scmp.eq.s32.totalorder %s11, 1
    %p71 = scmp.ne.s32.totalorder %s66, %s68
    %p72 = scmp.eq.s32.totalorder %s11, 0
    %p73 = por %p71, %p72
    %p74 = scmp.ne.s32.totalorder %s66, %s68
    %p75 = scmp.eq.s32.totalorder %s16, 1
    %p76 = por %p74, %p75
    %p77 = scmp.ne.s32.totalorder %s68, %s69
    %p78 = scmp.eq.s32.totalorder %s16, 0
    %p79 = por %p77, %p78
    %p80 = scmp.ne.s32.totalorder %s68, %s69
    %p81 = scmp.eq.s32.totalorder %s17, 1
    %p82 = por %p80, %p81
    %p84 = scmp.ne.s32.totalorder %s69, %s83
    %p85 = scmp.eq.s32.totalorder %s17, 0
    %p86 = por %p84, %p85
    %s88 = sadd.s32 %s87, 1
    %p91 = scmp.eq.s32.totalorder %s11, 1
    %p92 = scmp.ne.s32.totalorder %s87, %s89
    %p93 = scmp.eq.s32.totalorder %s11, 0
    %p94 = por %p92, %p93
    %p95 = scmp.ne.s32.totalorder %s87, %s89
    %p96 = scmp.eq.s32.totalorder %s16, 1
    %p97 = por %p95, %p96
    %p98 = scmp.ne.s32.totalorder %s89, %s90
    %p99 = scmp.eq.s32.totalorder %s16, 0
    %p100 = por %p98, %p99
    %p101 = scmp.ne.s32.totalorder %s89, %s90
    %p102 = scmp.eq.s32.totalorder %s17, 1
    %p103 = por %p101, %p102
    %p105 = scmp.ne.s32.totalorder %s90, %s104
    %p106 = scmp.eq.s32.totalorder %s17, 0
    %p107 = por %p105, %p106
    %s109 = sadd.s32 %s108, 1
    %p112 = scmp.eq.s32.totalorder %s11, 1
    %p113 = scmp.ne.s32.totalorder %s108, %s110
    %p114 = scmp.eq.s32.totalorder %s11, 0
    %p115 = por %p113, %p114
    %p116 = scmp.ne.s32.totalorder %s108, %s110
    %p117 = scmp.eq.s32.totalorder %s16, 1
    %p118 = por %p116, %p117
    %p119 = scmp.ne.s32.totalorder %s110, %s111
    %p120 = scmp.eq.s32.totalorder %s16, 0
    %p121 = por %p119, %p120
    %p122 = scmp.ne.s32.totalorder %s110, %s111
    %p123 = scmp.eq.s32.totalorder %s17, 1
    %p124 = por %p122, %p123
    %p126 = scmp.ne.s32.totalorder %s111, %s125
    %p127 = scmp.eq.s32.totalorder %s17, 0
    %p128 = por %p126, %p127
    %s129 = ssub.s32 %s11, %s18
    %p130 = scmp.eq.s32.totalorder %s129, 0
    %s132 = sadd.s32 %s131, 1
    %s133 = scalar_select %p130, %s131, %s132
    %p136 = pneg %p130
    %p137 = scmp.eq.s32.totalorder %s11, 1
    %p138 = por %p136, %p137
    %p139 = scmp.ne.s32.totalorder %s131, %s134
    %p140 = scmp.eq.s32.totalorder %s11, 0
    %p141 = por %p139, %p140
    %p142 = scmp.ne.s32.totalorder %s131, %s134
    %p143 = scmp.eq.s32.totalorder %s16, 1
    %p144 = por %p142, %p143
    %p145 = scmp.ne.s32.totalorder %s134, %s135
    %p146 = scmp.eq.s32.totalorder %s16, 0
    %p147 = por %p145, %p146
    %p148 = scmp.ne.s32.totalorder %s134, %s135
    %p149 = scmp.eq.s32.totalorder %s17, 1
    %p150 = por %p148, %p149
    %p152 = scmp.ne.s32.totalorder %s135, %s151
    %p153 = scmp.eq.s32.totalorder %s17, 0
    %p154 = por %p152, %p153
    %p155 = scmp.le.s32.totalorder 1, %s11
    %p156 = scmp.lt.s32.totalorder %s11, 3
    %p157 = pnand %p155, %p156
    %p158 = pneg %p157
    // Predicated region
    $region9: #{basic_block_forward.3} parent=5 // pred_check
      _
    $region10: #{basic_block_forward.3} parent=5 // pred_check_branch
      %160 = sbr.rel (%p157) target = $region12
    $region11: #{basic_block_forward.3} parent=5 // pred_region
      %s161 = ssub.s32 %s11, 1
      // Predicated region
      $region13: #{basic_block_forward.3} parent=11 // pred_check
        %p162 = pneg %p58
      $region14: #{basic_block_forward.3} parent=11 // pred_check_branch
        %164 = sbr.rel (%p162) target = $region16
      $region15: #{basic_block_forward.3} parent=11 // pred_region
        _
      $region16: #{basic_block_forward.3} parent=11 // pred_fallthru
        _
      // Predicated region
      $region17: #{basic_block_forward.3} parent=11 // pred_check
        %p165 = pneg %p79
      $region18: #{basic_block_forward.3} parent=11 // pred_check_branch
        %167 = sbr.rel (%p165) target = $region20
      $region19: #{basic_block_forward.3} parent=11 // pred_region
        _
      $region20: #{basic_block_forward.3} parent=11 // pred_fallthru
        _
      // Predicated region
      $region21: #{basic_block_forward.3} parent=11 // pred_check
        %p168 = pneg %p100
      $region22: #{basic_block_forward.3} parent=11 // pred_check_branch
        %170 = sbr.rel (%p168) target = $region24
      $region23: #{basic_block_forward.3} parent=11 // pred_region
        _
      $region24: #{basic_block_forward.3} parent=11 // pred_fallthru
        _
      // Predicated region
      $region25: #{basic_block_forward.3} parent=11 // pred_check
        %p171 = pneg %p121
      $region26: #{basic_block_forward.3} parent=11 // pred_check_branch
        %173 = sbr.rel (%p171) target = $region28
      $region27: #{basic_block_forward.3} parent=11 // pred_region
        _
      $region28: #{basic_block_forward.3} parent=11 // pred_fallthru
        _
    $region12: #{basic_block_forward.3} parent=5 // pred_fallthru
      _
    %p174 = scmp.lt.s32.totalorder %s11, 2
    // Predicated region
    $region29: #{basic_block_forward.3} parent=5 // pred_check
      %p175 = pneg %p174
    $region30: #{basic_block_forward.3} parent=5 // pred_check_branch
      %177 = sbr.rel (%p175) target = $region32
    $region31: #{basic_block_forward.3} parent=5 // pred_region
      // Predicated region
      $region33: #{basic_block_forward.3} parent=31 // pred_check
        %p178 = pneg %p31
      $region34: #{basic_block_forward.3} parent=31 // pred_check_branch
        %180 = sbr.rel (%p178) target = $region36
      $region35: #{basic_block_forward.3} parent=31 // pred_region
        %p181 = scmp.lt.s32.totalorder %s11, 1
        %s182 = scalar_select %p181, %s11, 1
        %s183 = smul.addr %s182, 2
        %s184 = smul.addr %s183, 8
        %s185 = scalar_lea.vmem %s0, %s184
      $region36: #{basic_block_forward.3} parent=31 // pred_fallthru
        _
    $region32: #{basic_block_forward.3} parent=5 // pred_fallthru
      _
    %p186 = scmp.le.s32.totalorder 1, %s11
    %p187 = scmp.lt.s32.totalorder %s11, 3
    %p188 = pnand %p186, %p187
    %p189 = pneg %p188
    // Predicated region
    $region37: #{basic_block_forward.3} parent=5 // pred_check
      _
    $region38: #{basic_block_forward.3} parent=5 // pred_check_branch
      %191 = sbr.rel (%p188) target = $region40
    $region39: #{basic_block_forward.3} parent=5 // pred_region
      %s192 = ssub.s32 %s11, 1
      %p193 = scmp.lt.s32.totalorder %s16, 1
      %s194 = scalar_select %p193, %s16, 1
      %s195 = smul.addr %s194, 2
      %s196 = smul.addr %s195, 8
      %s197 = scalar_lea.vmem %s0, %s196
      %p198 = pneg %p37
      %p199 = pneg %p34
      %p200 = pneg %p58
      %p201 = pneg %p55
      %p202 = pneg %p79
      %p203 = pneg %p76
      %p204 = pneg %p100
      %p205 = pneg %p97
      %p206 = pneg %p121
      %p207 = pneg %p118
      %p208 = pneg %p147
      %p209 = pneg %p144
      %p210 = scmp.lt.s32.totalorder %s16, 1
      %s211 = scalar_select %p210, %s16, 1
      %s212 = smul.addr %s211, 4
      %s213 = smul.addr %s212, 8
      %s214 = scalar_lea.vmem %s5, %s213
      %p215 = scmp.lt.s32.totalorder %s16, 1
      %s216 = scalar_select %p215, %s16, 1
      %s217 = smul.addr %s216, 2
      %s218 = smul.addr %s217, 8
      %s219 = scalar_lea.vmem %s0, %s218
      %p220 = scmp.lt.s32.totalorder %s16, 1
      %s221 = scalar_select %p220, %s16, 1
      %s222 = smul.addr %s221, 4
      %s223 = smul.addr %s222, 8
      %s224 = scalar_lea.vmem %s5, %s223
      %v226 = vld [vmem:[%s219] sm:$0xff]
      %v227 = vld [vmem:[%s219 + $0x8] sm:$0xff]
      %v228 = vld [vmem:[%s1] sm:$0x3]
      %v229 = vld [vmem:[%s2] sm:$0x3]
      %232 = vrot.lane.b32.xlu0 %v226, 17
      %v233 = vpop.permute.xlu0 %232
      %234 = vrot.lane.b32.xlu0 %v227, 17
      %v235 = vpop.permute.xlu0 %234
      %vm236 = vcmask 138240
      %v237 = vsel %vm236, %v233, %v235
      %v241 = vsel %vm236, 0.0, %v233
      %v242 = vsel %vm236, %v235, 0.0
      %v244 = vlaneseq
      %v245 = vshrl.u32 %v244, 7
      %v246 = vsub.s32 0, %v245
      %v247 = vrot.slane %v228, %v246
      %v248 = vlaneseq
      %v249 = vshrl.u32 %v248, 7
      %v250 = vsub.s32 1, %v249
      %v251 = vrot.slane %v228, %v250
      %v254 = vmul.f32 %v241, %v247
      %v255 = vmul.f32 %v237, %v251
      %v257 = vlaneseq
      %v258 = vshrl.u32 %v257, 7
      %v259 = vsub.s32 0, %v258
      %v260 = vrot.slane %v229, %v259
      %v261 = vlaneseq
      %v262 = vshrl.u32 %v261, 7
      %v263 = vsub.s32 1, %v262
      %v264 = vrot.slane %v229, %v263
      %265 = vrot.lane.b32.xlu0 %v260, 2
      %v266 = vpop.permute.xlu0 %265
      %267 = vrot.lane.b32.xlu0 %v264, 2
      %v268 = vpop.permute.xlu0 %267
      %vm269 = vcmask 15360
      %v270 = vsel %vm269, %v266, %v268
      %v274 = vmul.f32 %v241, %v266
      %v275 = vmul.f32 %v237, %v270
      %v276 = vmul.f32 %v242, %v268
      %277 = vrot.lane.b32.xlu0 %v247, 16
      %v278 = vpop.permute.xlu0 %277
      %279 = vrot.lane.b32.xlu0 %v251, 16
      %v280 = vpop.permute.xlu0 %279
      %vm281 = vcmask 130048
      %v282 = vsel %vm281, %v278, %v280
      %v286 = vmul.f32 %v241, %v278
      %v287 = vmul.f32 %v237, %v282
      %v288 = vmul.f32 %v242, %v280
      %289 = vrot.lane.b32.xlu0 %v260, 18
      %v290 = vpop.permute.xlu0 %289
      %291 = vrot.lane.b32.xlu0 %v264, 18
      %v292 = vpop.permute.xlu0 %291
      %vm293 = vcmask 146432
      %v294 = vsel %vm293, %v290, %v292
      %v298 = vmul.f32 %v241, %v290
      %v299 = vmul.f32 %v237, %v294
      %v300 = vmul.f32 %v242, %v292
      %301 = vrot.lane.b32.xlu0 %v247, 32
      %v302 = vpop.permute.xlu0 %301
      %303 = vrot.lane.b32.xlu0 %v251, 32
      %v304 = vpop.permute.xlu0 %303
      %vm305 = vcmask 261120
      %v306 = vsel %vm305, %v302, %v304
      %v310 = vmul.f32 %v241, %v302
      %v311 = vmul.f32 %v237, %v306
      %v312 = vmul.f32 %v242, %v304
      %313 = vrot.lane.b32.xlu0 %v260, 34
      %v314 = vpop.permute.xlu0 %313
      %315 = vrot.lane.b32.xlu0 %v264, 34
      %v316 = vpop.permute.xlu0 %315
      %vm317 = vcmask 277504
      %v318 = vsel %vm317, %v314, %v316
      %v322 = vmul.f32 %v241, %v314
      %v323 = vmul.f32 %v237, %v318
      %v324 = vmul.f32 %v242, %v316
      %327 = vrot.lane.b32.xlu0 %v241, 127
      %v328 = vpop.permute.xlu0 %327
      %329 = vrot.lane.b32.xlu0 %v237, 127
      %v330 = vpop.permute.xlu0 %329
      %331 = vrot.lane.b32.xlu0 %v242, 127
      %v332 = vpop.permute.xlu0 %331
      %vm333 = vcmask 1039360
      %v334 = vsel %vm333, %v328, %v330
      %v335 = vsel %vm333, %v330, %v332
      %341 = vrot.lane.b32.xlu0 %v274, 126
      %v342 = vpop.permute.xlu0 %341
      %343 = vrot.lane.b32.xlu0 %v275, 126
      %v344 = vpop.permute.xlu0 %343
      %345 = vrot.lane.b32.xlu0 %v276, 126
      %v346 = vpop.permute.xlu0 %345
      %vm347 = vcmask 1031168
      %v348 = vsel %vm347, %v342, %v344
      %v349 = vsel %vm347, %v344, %v346
      %355 = vrot.lane.b32.xlu0 %v286, 112
      %v356 = vpop.permute.xlu0 %355
      %357 = vrot.lane.b32.xlu0 %v287, 112
      %v358 = vpop.permute.xlu0 %357
      %359 = vrot.lane.b32.xlu0 %v288, 112
      %v360 = vpop.permute.xlu0 %359
      %vm361 = vcmask 916480
      %v362 = vsel %vm361, %v356, %v358
      %v363 = vsel %vm361, %v358, %v360
      %366 = vrot.lane.b32.xlu0 %v241, 111
      %v367 = vpop.permute.xlu0 %366
      %368 = vrot.lane.b32.xlu0 %v237, 111
      %v369 = vpop.permute.xlu0 %368
      %370 = vrot.lane.b32.xlu0 %v242, 111
      %v371 = vpop.permute.xlu0 %370
      %vm372 = vcmask 908288
      %v373 = vsel %vm372, %v367, %v369
      %v374 = vsel %vm372, %v369, %v371
      %380 = vrot.lane.b32.xlu0 %v298, 110
      %v381 = vpop.permute.xlu0 %380
      %382 = vrot.lane.b32.xlu0 %v299, 110
      %v383 = vpop.permute.xlu0 %382
      %384 = vrot.lane.b32.xlu0 %v300, 110
      %v385 = vpop.permute.xlu0 %384
      %vm386 = vcmask 900096
      %v387 = vsel %vm386, %v381, %v383
      %v388 = vsel %vm386, %v383, %v385
      %394 = vrot.lane.b32.xlu0 %v310, 96
      %v395 = vpop.permute.xlu0 %394
      %396 = vrot.lane.b32.xlu0 %v311, 96
      %v397 = vpop.permute.xlu0 %396
      %398 = vrot.lane.b32.xlu0 %v312, 96
      %v399 = vpop.permute.xlu0 %398
      %vm400 = vcmask 785408
      %v401 = vsel %vm400, %v395, %v397
      %v402 = vsel %vm400, %v397, %v399
      %405 = vrot.lane.b32.xlu0 %v241, 95
      %v406 = vpop.permute.xlu0 %405
      %407 = vrot.lane.b32.xlu0 %v237, 95
      %v408 = vpop.permute.xlu0 %407
      %409 = vrot.lane.b32.xlu0 %v242, 95
      %v410 = vpop.permute.xlu0 %409
      %vm411 = vcmask 777216
      %v412 = vsel %vm411, %v406, %v408
      %v413 = vsel %vm411, %v408, %v410
      %419 = vrot.lane.b32.xlu0 %v322, 94
      %v420 = vpop.permute.xlu0 %419
      %421 = vrot.lane.b32.xlu0 %v323, 94
      %v422 = vpop.permute.xlu0 %421
      %423 = vrot.lane.b32.xlu0 %v324, 94
      %v424 = vpop.permute.xlu0 %423
      %vm425 = vcmask 769024
      %v426 = vsel %vm425, %v420, %v422
      %v427 = vsel %vm425, %v422, %v424
      %v430 = vpack.c.bf16 %v334, %v254
      %v431 = vpack.c.bf16 %v335, %v255
      %v432 = vpack.c.bf16 %v362, %v348
      %v433 = vpack.c.bf16 %v363, %v349
      %v434 = vpack.c.bf16 %v387, %v373
      %v435 = vpack.c.bf16 %v388, %v374
      %v436 = vpack.c.bf16 %v412, %v401
      %v437 = vpack.c.bf16 %v413, %v402
      %v438 = vpack.c.bf16 %v426, %v426
      %v439 = vpack.c.bf16 %v427, %v427
      %v440 = vld [vmem:[%s3] sm:$0xf]
      %v441 = vld [vmem:[%s3 + $0x4] sm:$0xf]
      %v442 = vld [vmem:[%s4] sm:$0xff]
      %v443 = vld [vmem:[%s4 + $0x8] sm:$0xff]
      %445 = vset.pattern.permute.xlu0 0
      %446 = vperm.xlu0 %445, %v442
      %v447 = vpop.permute.xlu0 %446
      %450 = vset.pattern.permute.xlu0 0
      %451 = vperm.xlu0 %450, %v443
      %v452 = vpop.permute.xlu0 %451
      %v456 = vunpack.c.l.b16 %v440
      %v457 = vunpack.c.l.b16 %v441
      %v458 = vpack.c.b16 %v457, %v456
      %vm459 = vcmask 588800
      %v461 = vsel %vm459, %v458, 0
      %vm463 = vcmask 1043456
      %v465 = vsel %vm463, %v438, 0
      %v468 = vsel %vm463, %v439, 0
      %470 = vmatprep.subr.bf16.mxu0 %v431
      %471 = vmatpush1.bf16.msra.mxu0 %v430
      %472 = vmatprep.subr.bf16.mxu0 %v433
      %473 = vmatpush1.bf16.msra.mxu0 %v432
      %474 = vmatprep.subr.bf16.mxu0 %v435
      %475 = vmatpush1.bf16.msra.mxu0 %v434
      %476 = vmatprep.subr.bf16.mxu0 %v437
      %477 = vmatpush1.bf16.msra.mxu0 %v436
      %478 = vmatprep.subr.bf16.mxu0 %v468
      %479 = vmatpush1.bf16.msra.mxu0 %v465
      %480 = vmatprep.subr.bf16.mxu0 0
      %481 = vmatpush1.bf16.msra.mxu0 0
      %482 = vmatprep.subr.bf16.mxu0 0
      %483 = vmatpush1.bf16.msra.mxu0 0
      %484 = vmatprep.subr.bf16.mxu0 0
      %485 = vmatpush1.bf16.msra.mxu0 0
      %486 = vmatprep.subr.bf16.mxu0 0
      %487 = vmatpush1.bf16.msra.mxu0 0
      %488 = vmatprep.subr.bf16.mxu0 0
      %489 = vmatpush1.bf16.msra.mxu0 0
      %490 = vmatprep.subr.bf16.mxu0 0
      %491 = vmatpush1.bf16.msra.mxu0 0
      %492 = vmatprep.subr.bf16.mxu0 0
      %493 = vmatpush1.bf16.msra.mxu0 0
      %494 = vmatprep.subr.bf16.mxu0 0
      %495 = vmatpush1.bf16.msra.mxu0 0
      %496 = vmatprep.subr.bf16.mxu0 0
      %497 = vmatpush1.bf16.msra.mxu0 0
      %498 = vmatprep.subr.bf16.mxu0 0
      %499 = vmatpush1.bf16.msra.mxu0 0
      %500 = vmatprep.subr.bf16.mxu0 0
      %501 = vmatpush1.bf16.msra.mxu0 0
      %502 = vmatprep.mubr.bf16.mxu0 0
      %503 = vmatmul.mubr.bf16.gmra.mrb[0].mxu0 %v461
      %v504 = vpop.f32.mrb[0].mxu0
      %v505 = vadd.f32 %v447, %v504
      %v506 = vpop.f32.mrb[0].mxu0
      %v507 = vadd.f32 %v447, %v506
      %v508 = vpop.f32.mrb[0].mxu0
      %v509 = vadd.f32 %v452, %v508
      %v510 = vpop.f32.mrb[0].mxu0
      %v511 = vadd.f32 %v452, %v510
      %512 = vdwg.mxu0
      %513 = vst [vmem:[%s224] sm:$0xff] %v505
      %514 = vst [vmem:[%s224 + $0x8] sm:$0xff] %v507
      %515 = vst [vmem:[%s224 + $0x10] sm:$0xff] %v509
      %516 = vst [vmem:[%s224 + $0x18] sm:$0xff] %v511
      %p517 = scmp.lt.s32.totalorder %s16, 1
      %s518 = scalar_select %p517, %s16, 1
      %s519 = smul.addr %s518, 4
      %s520 = smul.addr %s519, 8
      %s521 = scalar_lea.vmem %s5, %s520
      // Predicated region
      $region41: #{basic_block_forward.3} parent=39 // pred_check
        %p522 = pneg %p144
      $region42: #{basic_block_forward.3} parent=39 // pred_check_branch
        %524 = sbr.rel (%p522) target = $region44
      $region43: #{basic_block_forward.3} parent=39 // pred_region
        _
      $region44: #{basic_block_forward.3} parent=39 // pred_fallthru
        _
    $region40: #{basic_block_forward.3} parent=5 // pred_fallthru
      _
    %p525 = scmp.le.s32.totalorder 2, %s11
    // Predicated region
    $region45: #{basic_block_forward.3} parent=5 // pred_check
      %p526 = pneg %p525
    $region46: #{basic_block_forward.3} parent=5 // pred_check_branch
      %528 = sbr.rel (%p526) target = $region48
    $region47: #{basic_block_forward.3} parent=5 // pred_region
      %s529 = ssub.s32 %s11, 2
      // Predicated region
      $region49: #{basic_block_forward.3} parent=47 // pred_check
        %p530 = pneg %p150
      $region50: #{basic_block_forward.3} parent=47 // pred_check_branch
        %532 = sbr.rel (%p530) target = $region52
      $region51: #{basic_block_forward.3} parent=47 // pred_region
        %p533 = scmp.lt.s32.totalorder %s17, 1
        %s534 = scalar_select %p533, %s17, 1
        %s535 = smul.addr %s534, 4
        %s536 = smul.addr %s535, 8
        %s537 = scalar_lea.vmem %s5, %s536
      $region52: #{basic_block_forward.3} parent=47 // pred_fallthru
        _
    $region48: #{basic_block_forward.3} parent=5 // pred_fallthru
      _
  $region6: #{basic_block_forward.3} parent=0 // loop_footer
    %s15 = sadd.s32 1, %s11
  $region7: #{basic_block_forward.3} parent=0 // loop_footer_branch
    %10 = sbr.rel target = $region3
  $region8: #{basic_block_forward.3} parent=0 // loop_exit
    _

// kernel: basic_block_forward.4
$region0: #{basic_block_forward.4}
  #allocation0 [shape = 'u32[]', space=smem, size = 0x4, offset = 0x4, fixed_abs, tag = 'smem constant byte address 0x4 - core index']
  #allocation1 [shape = 'u32[144,128]{1,0:T(1,128)}', space=vmem, size = 0x12000, scoped, tag = 'internal scratch']
  %s0 = inlined_call_operand.vmem [shape: f32[2,16,256], index: 0, kind: input, shape index: {}]
  %s1 = inlined_call_operand.vmem [shape: f32[1,256], index: 1, kind: input, shape index: {}]
  %s2 = inlined_call_operand.vmem [shape: f32[1,256], index: 2, kind: input, shape index: {}]
  %s3 = inlined_call_operand.vmem [shape: f32[16,16], index: 3, kind: input, shape index: {}]
  %s4 = inlined_call_operand.vmem [shape: bf16[48,16], index: 4, kind: input, shape index: {}]
  %s5 = inlined_call_operand.vmem [shape: f32[16,1], index: 5, kind: input, shape index: {}]
  %s6 = inlined_call_operand.vmem [shape: bf16[16,16], index: 6, kind: input, shape index: {}]
  %s7 = inlined_call_operand.vmem [shape: f32[16,1], index: 7, kind: input, shape index: {}]
  %s8 = inlined_call_operand.vmem [shape: f32[16,9], index: 8, kind: input, shape index: {}]
  %s9 = inlined_call_operand.vmem [shape: f32[16,9], index: 9, kind: input, shape index: {}]
  %s10 = inlined_call_operand.vmem [shape: f32[16,1], index: 10, kind: input, shape index: {}]
  %s11 = inlined_call_operand.vmem [shape: f32[16,1], index: 11, kind: input, shape index: {}]
  %s12 = inlined_call_operand.vmem [shape: bf16[64,16], index: 12, kind: input, shape index: {}]
  %s13 = inlined_call_operand.vmem [shape: f32[64,9], index: 13, kind: input, shape index: {}]
  %s14 = inlined_call_operand.vmem [shape: bf16[16,64], index: 14, kind: input, shape index: {}]
  %s15 = inlined_call_operand.vmem [shape: f32[2,16,256], index: 15, kind: output, shape index: {}]
  %s16 = sld [smem:[#allocation0]]
  $region93: #{basic_block_forward.4} parent=0
    _
  %s18 = ssub.s32 1, %s16
  %s19 = scalar_select 0, %s18, %s16
  loop: start=0, step=1, limit=4
  $region2: #{basic_block_forward.4} parent=0 // loop_pre_header
    _
  $region3: #{basic_block_forward.4} parent=0 // loop_header
    %s21 = sphi 0, %s25
    %p22 = scmp.ge.s32.totalorder %s21, 4
    %s31 = sphi 0, %s33
    %s34 = sphi 0, %s31
    %s35 = sphi 0, %s34
    %s51 = sphi 0, %s35
    %s55 = sphi 0, %s55
    %s57 = sphi 0, %s55
    %s58 = sphi 0, %s57
    %s72 = sphi 0, %s58
    %s76 = sphi 0, %s76
    %s78 = sphi 0, %s76
    %s79 = sphi 0, %s78
    %s93 = sphi 0, %s79
    %s97 = sphi 0, %s97
    %s99 = sphi 0, %s97
    %s100 = sphi 0, %s99
    %s114 = sphi 0, %s100
    %s118 = sphi 0, %s118
    %s120 = sphi 0, %s118
    %s121 = sphi 0, %s120
    %s135 = sphi 0, %s121
    %s139 = sphi 0, %s139
    %s141 = sphi 0, %s139
    %s142 = sphi 0, %s141
    %s156 = sphi 0, %s142
    %s160 = sphi 0, %s160
    %s162 = sphi 0, %s160
    %s163 = sphi 0, %s162
    %s177 = sphi 0, %s163
    %s181 = sphi 0, %s181
    %s183 = sphi 0, %s181
    %s184 = sphi 0, %s183
    %s198 = sphi 0, %s184
    %s202 = sphi 0, %s202
    %s204 = sphi 0, %s202
    %s205 = sphi 0, %s204
    %s219 = sphi 0, %s205
    %s223 = sphi 0, %s223
    %s225 = sphi 0, %s223
    %s226 = sphi 0, %s225
    %s240 = sphi 0, %s226
    %s244 = sphi 0, %s244
    %s246 = sphi 0, %s244
    %s247 = sphi 0, %s246
    %s261 = sphi 0, %s247
    %s265 = sphi 0, %s265
    %s267 = sphi 0, %s265
    %s268 = sphi 0, %s267
    %s282 = sphi 0, %s268
    %s286 = sphi 0, %s286
    %s288 = sphi 0, %s286
    %s289 = sphi 0, %s288
    %s303 = sphi 0, %s289
    %s307 = sphi 0, %s307
    %s309 = sphi 0, %s307
    %s310 = sphi 0, %s309
    %s324 = sphi 0, %s310
    %s328 = sphi 0, %s328
    %s330 = sphi 0, %s328
    %s331 = sphi 0, %s330
    %s345 = sphi 0, %s331
    %s351 = sphi 0, %s353
    %s354 = sphi 0, %s351
    %s355 = sphi 0, %s354
    %s371 = sphi 0, %s355
  $region4: #{basic_block_forward.4} parent=0 // loop_header_branch
    %24 = sbr.rel (%p22) target = $region8
  $region5: #{basic_block_forward.4} parent=0 // loop_body
    %s26 = ssub.s32 %s21, 1
    %s27 = ssub.s32 %s21, 2
    %s28 = sadd.s32 %s21, 1
    %s29 = ssub.s32 %s21, %s28
    %p30 = scmp.eq.s32.totalorder %s29, 0
    %s32 = sadd.s32 %s31, 1
    %s33 = scalar_select %p30, %s31, %s32
    %p36 = pneg %p30
    %p37 = scmp.eq.s32.totalorder %s21, 1
    %p38 = por %p36, %p37
    %p39 = scmp.ne.s32.totalorder %s31, %s34
    %p40 = scmp.eq.s32.totalorder %s21, 0
    %p41 = por %p39, %p40
    %p42 = scmp.ne.s32.totalorder %s31, %s34
    %p43 = scmp.eq.s32.totalorder %s26, 1
    %p44 = por %p42, %p43
    %p45 = scmp.ne.s32.totalorder %s34, %s35
    %p46 = scmp.eq.s32.totalorder %s26, 0
    %p47 = por %p45, %p46
    %p48 = scmp.ne.s32.totalorder %s34, %s35
    %p49 = scmp.eq.s32.totalorder %s27, 1
    %p50 = por %p48, %p49
    %p52 = scmp.ne.s32.totalorder %s35, %s51
    %p53 = scmp.eq.s32.totalorder %s27, 0
    %p54 = por %p52, %p53
    %s56 = sadd.s32 %s55, 1
    %p59 = scmp.eq.s32.totalorder %s21, 1
    %p60 = scmp.ne.s32.totalorder %s55, %s57
    %p61 = scmp.eq.s32.totalorder %s21, 0
    %p62 = por %p60, %p61
    %p63 = scmp.ne.s32.totalorder %s55, %s57
    %p64 = scmp.eq.s32.totalorder %s26, 1
    %p65 = por %p63, %p64
    %p66 = scmp.ne.s32.totalorder %s57, %s58
    %p67 = scmp.eq.s32.totalorder %s26, 0
    %p68 = por %p66, %p67
    %p69 = scmp.ne.s32.totalorder %s57, %s58
    %p70 = scmp.eq.s32.totalorder %s27, 1
    %p71 = por %p69, %p70
    %p73 = scmp.ne.s32.totalorder %s58, %s72
    %p74 = scmp.eq.s32.totalorder %s27, 0
    %p75 = por %p73, %p74
    %s77 = sadd.s32 %s76, 1
    %p80 = scmp.eq.s32.totalorder %s21, 1
    %p81 = scmp.ne.s32.totalorder %s76, %s78
    %p82 = scmp.eq.s32.totalorder %s21, 0
    %p83 = por %p81, %p82
    %p84 = scmp.ne.s32.totalorder %s76, %s78
    %p85 = scmp.eq.s32.totalorder %s26, 1
    %p86 = por %p84, %p85
    %p87 = scmp.ne.s32.totalorder %s78, %s79
    %p88 = scmp.eq.s32.totalorder %s26, 0
    %p89 = por %p87, %p88
    %p90 = scmp.ne.s32.totalorder %s78, %s79
    %p91 = scmp.eq.s32.totalorder %s27, 1
    %p92 = por %p90, %p91
    %p94 = scmp.ne.s32.totalorder %s79, %s93
    %p95 = scmp.eq.s32.totalorder %s27, 0
    %p96 = por %p94, %p95
    %s98 = sadd.s32 %s97, 1
    %p101 = scmp.eq.s32.totalorder %s21, 1
    %p102 = scmp.ne.s32.totalorder %s97, %s99
    %p103 = scmp.eq.s32.totalorder %s21, 0
    %p104 = por %p102, %p103
    %p105 = scmp.ne.s32.totalorder %s97, %s99
    %p106 = scmp.eq.s32.totalorder %s26, 1
    %p107 = por %p105, %p106
    %p108 = scmp.ne.s32.totalorder %s99, %s100
    %p109 = scmp.eq.s32.totalorder %s26, 0
    %p110 = por %p108, %p109
    %p111 = scmp.ne.s32.totalorder %s99, %s100
    %p112 = scmp.eq.s32.totalorder %s27, 1
    %p113 = por %p111, %p112
    %p115 = scmp.ne.s32.totalorder %s100, %s114
    %p116 = scmp.eq.s32.totalorder %s27, 0
    %p117 = por %p115, %p116
    %s119 = sadd.s32 %s118, 1
    %p122 = scmp.eq.s32.totalorder %s21, 1
    %p123 = scmp.ne.s32.totalorder %s118, %s120
    %p124 = scmp.eq.s32.totalorder %s21, 0
    %p125 = por %p123, %p124
    %p126 = scmp.ne.s32.totalorder %s118, %s120
    %p127 = scmp.eq.s32.totalorder %s26, 1
    %p128 = por %p126, %p127
    %p129 = scmp.ne.s32.totalorder %s120, %s121
    %p130 = scmp.eq.s32.totalorder %s26, 0
    %p131 = por %p129, %p130
    %p132 = scmp.ne.s32.totalorder %s120, %s121
    %p133 = scmp.eq.s32.totalorder %s27, 1
    %p134 = por %p132, %p133
    %p136 = scmp.ne.s32.totalorder %s121, %s135
    %p137 = scmp.eq.s32.totalorder %s27, 0
    %p138 = por %p136, %p137
    %s140 = sadd.s32 %s139, 1
    %p143 = scmp.eq.s32.totalorder %s21, 1
    %p144 = scmp.ne.s32.totalorder %s139, %s141
    %p145 = scmp.eq.s32.totalorder %s21, 0
    %p146 = por %p144, %p145
    %p147 = scmp.ne.s32.totalorder %s139, %s141
    %p148 = scmp.eq.s32.totalorder %s26, 1
    %p149 = por %p147, %p148
    %p150 = scmp.ne.s32.totalorder %s141, %s142
    %p151 = scmp.eq.s32.totalorder %s26, 0
    %p152 = por %p150, %p151
    %p153 = scmp.ne.s32.totalorder %s141, %s142
    %p154 = scmp.eq.s32.totalorder %s27, 1
    %p155 = por %p153, %p154
    %p157 = scmp.ne.s32.totalorder %s142, %s156
    %p158 = scmp.eq.s32.totalorder %s27, 0
    %p159 = por %p157, %p158
    %s161 = sadd.s32 %s160, 1
    %p164 = scmp.eq.s32.totalorder %s21, 1
    %p165 = scmp.ne.s32.totalorder %s160, %s162
    %p166 = scmp.eq.s32.totalorder %s21, 0
    %p167 = por %p165, %p166
    %p168 = scmp.ne.s32.totalorder %s160, %s162
    %p169 = scmp.eq.s32.totalorder %s26, 1
    %p170 = por %p168, %p169
    %p171 = scmp.ne.s32.totalorder %s162, %s163
    %p172 = scmp.eq.s32.totalorder %s26, 0
    %p173 = por %p171, %p172
    %p174 = scmp.ne.s32.totalorder %s162, %s163
    %p175 = scmp.eq.s32.totalorder %s27, 1
    %p176 = por %p174, %p175
    %p178 = scmp.ne.s32.totalorder %s163, %s177
    %p179 = scmp.eq.s32.totalorder %s27, 0
    %p180 = por %p178, %p179
    %s182 = sadd.s32 %s181, 1
    %p185 = scmp.eq.s32.totalorder %s21, 1
    %p186 = scmp.ne.s32.totalorder %s181, %s183
    %p187 = scmp.eq.s32.totalorder %s21, 0
    %p188 = por %p186, %p187
    %p189 = scmp.ne.s32.totalorder %s181, %s183
    %p190 = scmp.eq.s32.totalorder %s26, 1
    %p191 = por %p189, %p190
    %p192 = scmp.ne.s32.totalorder %s183, %s184
    %p193 = scmp.eq.s32.totalorder %s26, 0
    %p194 = por %p192, %p193
    %p195 = scmp.ne.s32.totalorder %s183, %s184
    %p196 = scmp.eq.s32.totalorder %s27, 1
    %p197 = por %p195, %p196
    %p199 = scmp.ne.s32.totalorder %s184, %s198
    %p200 = scmp.eq.s32.totalorder %s27, 0
    %p201 = por %p199, %p200
    %s203 = sadd.s32 %s202, 1
    %p206 = scmp.eq.s32.totalorder %s21, 1
    %p207 = scmp.ne.s32.totalorder %s202, %s204
    %p208 = scmp.eq.s32.totalorder %s21, 0
    %p209 = por %p207, %p208
    %p210 = scmp.ne.s32.totalorder %s202, %s204
    %p211 = scmp.eq.s32.totalorder %s26, 1
    %p212 = por %p210, %p211
    %p213 = scmp.ne.s32.totalorder %s204, %s205
    %p214 = scmp.eq.s32.totalorder %s26, 0
    %p215 = por %p213, %p214
    %p216 = scmp.ne.s32.totalorder %s204, %s205
    %p217 = scmp.eq.s32.totalorder %s27, 1
    %p218 = por %p216, %p217
    %p220 = scmp.ne.s32.totalorder %s205, %s219
    %p221 = scmp.eq.s32.totalorder %s27, 0
    %p222 = por %p220, %p221
    %s224 = sadd.s32 %s223, 1
    %p227 = scmp.eq.s32.totalorder %s21, 1
    %p228 = scmp.ne.s32.totalorder %s223, %s225
    %p229 = scmp.eq.s32.totalorder %s21, 0
    %p230 = por %p228, %p229
    %p231 = scmp.ne.s32.totalorder %s223, %s225
    %p232 = scmp.eq.s32.totalorder %s26, 1
    %p233 = por %p231, %p232
    %p234 = scmp.ne.s32.totalorder %s225, %s226
    %p235 = scmp.eq.s32.totalorder %s26, 0
    %p236 = por %p234, %p235
    %p237 = scmp.ne.s32.totalorder %s225, %s226
    %p238 = scmp.eq.s32.totalorder %s27, 1
    %p239 = por %p237, %p238
    %p241 = scmp.ne.s32.totalorder %s226, %s240
    %p242 = scmp.eq.s32.totalorder %s27, 0
    %p243 = por %p241, %p242
    %s245 = sadd.s32 %s244, 1
    %p248 = scmp.eq.s32.totalorder %s21, 1
    %p249 = scmp.ne.s32.totalorder %s244, %s246
    %p250 = scmp.eq.s32.totalorder %s21, 0
    %p251 = por %p249, %p250
    %p252 = scmp.ne.s32.totalorder %s244, %s246
    %p253 = scmp.eq.s32.totalorder %s26, 1
    %p254 = por %p252, %p253
    %p255 = scmp.ne.s32.totalorder %s246, %s247
    %p256 = scmp.eq.s32.totalorder %s26, 0
    %p257 = por %p255, %p256
    %p258 = scmp.ne.s32.totalorder %s246, %s247
    %p259 = scmp.eq.s32.totalorder %s27, 1
    %p260 = por %p258, %p259
    %p262 = scmp.ne.s32.totalorder %s247, %s261
    %p263 = scmp.eq.s32.totalorder %s27, 0
    %p264 = por %p262, %p263
    %s266 = sadd.s32 %s265, 1
    %p269 = scmp.eq.s32.totalorder %s21, 1
    %p270 = scmp.ne.s32.totalorder %s265, %s267
    %p271 = scmp.eq.s32.totalorder %s21, 0
    %p272 = por %p270, %p271
    %p273 = scmp.ne.s32.totalorder %s265, %s267
    %p274 = scmp.eq.s32.totalorder %s26, 1
    %p275 = por %p273, %p274
    %p276 = scmp.ne.s32.totalorder %s267, %s268
    %p277 = scmp.eq.s32.totalorder %s26, 0
    %p278 = por %p276, %p277
    %p279 = scmp.ne.s32.totalorder %s267, %s268
    %p280 = scmp.eq.s32.totalorder %s27, 1
    %p281 = por %p279, %p280
    %p283 = scmp.ne.s32.totalorder %s268, %s282
    %p284 = scmp.eq.s32.totalorder %s27, 0
    %p285 = por %p283, %p284
    %s287 = sadd.s32 %s286, 1
    %p290 = scmp.eq.s32.totalorder %s21, 1
    %p291 = scmp.ne.s32.totalorder %s286, %s288
    %p292 = scmp.eq.s32.totalorder %s21, 0
    %p293 = por %p291, %p292
    %p294 = scmp.ne.s32.totalorder %s286, %s288
    %p295 = scmp.eq.s32.totalorder %s26, 1
    %p296 = por %p294, %p295
    %p297 = scmp.ne.s32.totalorder %s288, %s289
    %p298 = scmp.eq.s32.totalorder %s26, 0
    %p299 = por %p297, %p298
    %p300 = scmp.ne.s32.totalorder %s288, %s289
    %p301 = scmp.eq.s32.totalorder %s27, 1
    %p302 = por %p300, %p301
    %p304 = scmp.ne.s32.totalorder %s289, %s303
    %p305 = scmp.eq.s32.totalorder %s27, 0
    %p306 = por %p304, %p305
    %s308 = sadd.s32 %s307, 1
    %p311 = scmp.eq.s32.totalorder %s21, 1
    %p312 = scmp.ne.s32.totalorder %s307, %s309
    %p313 = scmp.eq.s32.totalorder %s21, 0
    %p314 = por %p312, %p313
    %p315 = scmp.ne.s32.totalorder %s307, %s309
    %p316 = scmp.eq.s32.totalorder %s26, 1
    %p317 = por %p315, %p316
    %p318 = scmp.ne.s32.totalorder %s309, %s310
    %p319 = scmp.eq.s32.totalorder %s26, 0
    %p320 = por %p318, %p319
    %p321 = scmp.ne.s32.totalorder %s309, %s310
    %p322 = scmp.eq.s32.totalorder %s27, 1
    %p323 = por %p321, %p322
    %p325 = scmp.ne.s32.totalorder %s310, %s324
    %p326 = scmp.eq.s32.totalorder %s27, 0
    %p327 = por %p325, %p326
    %s329 = sadd.s32 %s328, 1
    %p332 = scmp.eq.s32.totalorder %s21, 1
    %p333 = scmp.ne.s32.totalorder %s328, %s330
    %p334 = scmp.eq.s32.totalorder %s21, 0
    %p335 = por %p333, %p334
    %p336 = scmp.ne.s32.totalorder %s328, %s330
    %p337 = scmp.eq.s32.totalorder %s26, 1
    %p338 = por %p336, %p337
    %p339 = scmp.ne.s32.totalorder %s330, %s331
    %p340 = scmp.eq.s32.totalorder %s26, 0
    %p341 = por %p339, %p340
    %p342 = scmp.ne.s32.totalorder %s330, %s331
    %p343 = scmp.eq.s32.totalorder %s27, 1
    %p344 = por %p342, %p343
    %p346 = scmp.ne.s32.totalorder %s331, %s345
    %p347 = scmp.eq.s32.totalorder %s27, 0
    %p348 = por %p346, %p347
    %s349 = ssub.s32 %s21, %s28
    %p350 = scmp.eq.s32.totalorder %s349, 0
    %s352 = sadd.s32 %s351, 1
    %s353 = scalar_select %p350, %s351, %s352
    %p356 = pneg %p350
    %p357 = scmp.eq.s32.totalorder %s21, 1
    %p358 = por %p356, %p357
    %p359 = scmp.ne.s32.totalorder %s351, %s354
    %p360 = scmp.eq.s32.totalorder %s21, 0
    %p361 = por %p359, %p360
    %p362 = scmp.ne.s32.totalorder %s351, %s354
    %p363 = scmp.eq.s32.totalorder %s26, 1
    %p364 = por %p362, %p363
    %p365 = scmp.ne.s32.totalorder %s354, %s355
    %p366 = scmp.eq.s32.totalorder %s26, 0
    %p367 = por %p365, %p366
    %p368 = scmp.ne.s32.totalorder %s354, %s355
    %p369 = scmp.eq.s32.totalorder %s27, 1
    %p370 = por %p368, %p369
    %p372 = scmp.ne.s32.totalorder %s355, %s371
    %p373 = scmp.eq.s32.totalorder %s27, 0
    %p374 = por %p372, %p373
    %p375 = scmp.le.s32.totalorder 1, %s21
    %p376 = scmp.lt.s32.totalorder %s21, 3
    %p377 = pnand %p375, %p376
    %p378 = pneg %p377
    // Predicated region
    $region9: #{basic_block_forward.4} parent=5 // pred_check
      _
    $region10: #{basic_block_forward.4} parent=5 // pred_check_branch
      %380 = sbr.rel (%p377) target = $region12
    $region11: #{basic_block_forward.4} parent=5 // pred_region
      %s381 = ssub.s32 %s21, 1
      // Predicated region
      $region13: #{basic_block_forward.4} parent=11 // pred_check
        %p382 = pneg %p68
      $region14: #{basic_block_forward.4} parent=11 // pred_check_branch
        %384 = sbr.rel (%p382) target = $region16
      $region15: #{basic_block_forward.4} parent=11 // pred_region
        _
      $region16: #{basic_block_forward.4} parent=11 // pred_fallthru
        _
      // Predicated region
      $region17: #{basic_block_forward.4} parent=11 // pred_check
        %p385 = pneg %p89
      $region18: #{basic_block_forward.4} parent=11 // pred_check_branch
        %387 = sbr.rel (%p385) target = $region20
      $region19: #{basic_block_forward.4} parent=11 // pred_region
        _
      $region20: #{basic_block_forward.4} parent=11 // pred_fallthru
        _
      // Predicated region
      $region21: #{basic_block_forward.4} parent=11 // pred_check
        %p388 = pneg %p110
      $region22: #{basic_block_forward.4} parent=11 // pred_check_branch
        %390 = sbr.rel (%p388) target = $region24
      $region23: #{basic_block_forward.4} parent=11 // pred_region
        _
      $region24: #{basic_block_forward.4} parent=11 // pred_fallthru
        _
      // Predicated region
      $region25: #{basic_block_forward.4} parent=11 // pred_check
        %p391 = pneg %p131
      $region26: #{basic_block_forward.4} parent=11 // pred_check_branch
        %393 = sbr.rel (%p391) target = $region28
      $region27: #{basic_block_forward.4} parent=11 // pred_region
        _
      $region28: #{basic_block_forward.4} parent=11 // pred_fallthru
        _
      // Predicated region
      $region29: #{basic_block_forward.4} parent=11 // pred_check
        %p394 = pneg %p152
      $region30: #{basic_block_forward.4} parent=11 // pred_check_branch
        %396 = sbr.rel (%p394) target = $region32
      $region31: #{basic_block_forward.4} parent=11 // pred_region
        _
      $region32: #{basic_block_forward.4} parent=11 // pred_fallthru
        _
      // Predicated region
      $region33: #{basic_block_forward.4} parent=11 // pred_check
        %p397 = pneg %p173
      $region34: #{basic_block_forward.4} parent=11 // pred_check_branch
        %399 = sbr.rel (%p397) target = $region36
      $region35: #{basic_block_forward.4} parent=11 // pred_region
        _
      $region36: #{basic_block_forward.4} parent=11 // pred_fallthru
        _
      // Predicated region
      $region37: #{basic_block_forward.4} parent=11 // pred_check
        %p400 = pneg %p194
      $region38: #{basic_block_forward.4} parent=11 // pred_check_branch
        %402 = sbr.rel (%p400) target = $region40
      $region39: #{basic_block_forward.4} parent=11 // pred_region
        _
      $region40: #{basic_block_forward.4} parent=11 // pred_fallthru
        _
      // Predicated region
      $region41: #{basic_block_forward.4} parent=11 // pred_check
        %p403 = pneg %p215
      $region42: #{basic_block_forward.4} parent=11 // pred_check_branch
        %405 = sbr.rel (%p403) target = $region44
      $region43: #{basic_block_forward.4} parent=11 // pred_region
        _
      $region44: #{basic_block_forward.4} parent=11 // pred_fallthru
        _
      // Predicated region
      $region45: #{basic_block_forward.4} parent=11 // pred_check
        %p406 = pneg %p236
      $region46: #{basic_block_forward.4} parent=11 // pred_check_branch
        %408 = sbr.rel (%p406) target = $region48
      $region47: #{basic_block_forward.4} parent=11 // pred_region
        _
      $region48: #{basic_block_forward.4} parent=11 // pred_fallthru
        _
      // Predicated region
      $region49: #{basic_block_forward.4} parent=11 // pred_check
        %p409 = pneg %p257
      $region50: #{basic_block_forward.4} parent=11 // pred_check_branch
        %411 = sbr.rel (%p409) target = $region52
      $region51: #{basic_block_forward.4} parent=11 // pred_region
        _
      $region52: #{basic_block_forward.4} parent=11 // pred_fallthru
        _
      // Predicated region
      $region53: #{basic_block_forward.4} parent=11 // pred_check
        %p412 = pneg %p278
      $region54: #{basic_block_forward.4} parent=11 // pred_check_branch
        %414 = sbr.rel (%p412) target = $region56
      $region55: #{basic_block_forward.4} parent=11 // pred_region
        _
      $region56: #{basic_block_forward.4} parent=11 // pred_fallthru
        _
      // Predicated region
      $region57: #{basic_block_forward.4} parent=11 // pred_check
        %p415 = pneg %p299
      $region58: #{basic_block_forward.4} parent=11 // pred_check_branch
        %417 = sbr.rel (%p415) target = $region60
      $region59: #{basic_block_forward.4} parent=11 // pred_region
        _
      $region60: #{basic_block_forward.4} parent=11 // pred_fallthru
        _
      // Predicated region
      $region61: #{basic_block_forward.4} parent=11 // pred_check
        %p418 = pneg %p320
      $region62: #{basic_block_forward.4} parent=11 // pred_check_branch
        %420 = sbr.rel (%p418) target = $region64
      $region63: #{basic_block_forward.4} parent=11 // pred_region
        _
      $region64: #{basic_block_forward.4} parent=11 // pred_fallthru
        _
      // Predicated region
      $region65: #{basic_block_forward.4} parent=11 // pred_check
        %p421 = pneg %p341
      $region66: #{basic_block_forward.4} parent=11 // pred_check_branch
        %423 = sbr.rel (%p421) target = $region68
      $region67: #{basic_block_forward.4} parent=11 // pred_region
        _
      $region68: #{basic_block_forward.4} parent=11 // pred_fallthru
        _
    $region12: #{basic_block_forward.4} parent=5 // pred_fallthru
      _
    %p424 = scmp.lt.s32.totalorder %s21, 2
    // Predicated region
    $region69: #{basic_block_forward.4} parent=5 // pred_check
      %p425 = pneg %p424
    $region70: #{basic_block_forward.4} parent=5 // pred_check_branch
      %427 = sbr.rel (%p425) target = $region72
    $region71: #{basic_block_forward.4} parent=5 // pred_region
      // Predicated region
      $region73: #{basic_block_forward.4} parent=71 // pred_check
        %p428 = pneg %p41
      $region74: #{basic_block_forward.4} parent=71 // pred_check_branch
        %430 = sbr.rel (%p428) target = $region76
      $region75: #{basic_block_forward.4} parent=71 // pred_region
        %p431 = scmp.lt.s32.totalorder %s21, 1
        %s432 = scalar_select %p431, %s21, 1
        %s433 = smul.addr %s432, 4
        %s434 = smul.addr %s433, 8
        %s435 = scalar_lea.vmem %s0, %s434
      $region76: #{basic_block_forward.4} parent=71 // pred_fallthru
        _
    $region72: #{basic_block_forward.4} parent=5 // pred_fallthru
      _
    %p436 = scmp.le.s32.totalorder 1, %s21
    %p437 = scmp.lt.s32.totalorder %s21, 3
    %p438 = pnand %p436, %p437
    %p439 = pneg %p438
    // Predicated region
    $region77: #{basic_block_forward.4} parent=5 // pred_check
      _
    $region78: #{basic_block_forward.4} parent=5 // pred_check_branch
      %441 = sbr.rel (%p438) target = $region80
    $region79: #{basic_block_forward.4} parent=5 // pred_region
      %s442 = ssub.s32 %s21, 1
      %p443 = scmp.lt.s32.totalorder %s26, 1
      %s444 = scalar_select %p443, %s26, 1
      %s445 = smul.addr %s444, 4
      %s446 = smul.addr %s445, 8
      %s447 = scalar_lea.vmem %s0, %s446
      %p448 = pneg %p47
      %p449 = pneg %p44
      %p450 = pneg %p68
      %p451 = pneg %p65
      %p452 = pneg %p89
      %p453 = pneg %p86
      %p454 = pneg %p110
      %p455 = pneg %p107
      %p456 = pneg %p131
      %p457 = pneg %p128
      %p458 = pneg %p152
      %p459 = pneg %p149
      %p460 = pneg %p173
      %p461 = pneg %p170
      %p462 = pneg %p194
      %p463 = pneg %p191
      %p464 = pneg %p215
      %p465 = pneg %p212
      %p466 = pneg %p236
      %p467 = pneg %p233
      %p468 = pneg %p257
      %p469 = pneg %p254
      %p470 = pneg %p278
      %p471 = pneg %p275
      %p472 = pneg %p299
      %p473 = pneg %p296
      %p474 = pneg %p320
      %p475 = pneg %p317
      %p476 = pneg %p341
      %p477 = pneg %p338
      %p478 = pneg %p367
      %p479 = pneg %p364
      %p480 = scmp.lt.s32.totalorder %s26, 1
      %s481 = scalar_select %p480, %s26, 1
      %s482 = smul.addr %s481, 4
      %s483 = smul.addr %s482, 8
      %s484 = scalar_lea.vmem %s15, %s483
      %p485 = scmp.lt.s32.totalorder %s26, 1
      %s486 = scalar_select %p485, %s26, 1
      %s487 = smul.addr %s486, 4
      %s488 = smul.addr %s487, 8
      %s489 = scalar_lea.vmem %s0, %s488
      %p490 = scmp.lt.s32.totalorder %s26, 1
      %s491 = scalar_select %p490, %s26, 1
      %s492 = smul.addr %s491, 4
      %s493 = smul.addr %s492, 8
      %s494 = scalar_lea.vmem %s15, %s493
      %v496 = vld [vmem:[%s489] sm:$0xff]
      %v497 = vld [vmem:[%s489 + $0x8] sm:$0xff]
      %v498 = vld [vmem:[%s489 + $0x10] sm:$0xff]
      %v499 = vld [vmem:[%s489 + $0x18] sm:$0xff]
      %v500 = vld [vmem:[%s1] sm:$0x3]
      %v501 = vld [vmem:[%s2] sm:$0x3]
      %v502 = vld [vmem:[%s4] sm:$0xf]
      %v503 = vld [vmem:[%s4 + $0x4] sm:$0xf]
      %v504 = vld [vmem:[%s4 + $0x8] sm:$0xf]
      %v505 = vld [vmem:[%s4 + $0xc] sm:$0xf]
      %v506 = vld [vmem:[%s4 + $0x10] sm:$0xf]
      %v507 = vld [vmem:[%s4 + $0x14] sm:$0xf]
      %v508 = vpack.c.bf16 %v498, %v496
      %v509 = vpack.c.bf16 %v499, %v497
      %v516 = vunpack.c.l.b16 %v502
      %v517 = vunpack.c.l.b16 %v503
      %v518 = vunpack.c.l.b16 %v504
      %v519 = vunpack.c.l.b16 %v505
      %v520 = vunpack.c.l.b16 %v506
      %v521 = vunpack.c.l.b16 %v507
      %v522 = vpack.c.b16 %v517, %v516
      %v523 = vpack.c.b16 %v519, %v518
      %v524 = vpack.c.b16 %v521, %v520
      %vm525 = vcmask 130048
      %v527 = vsel %vm525, %v522, 0
      %v530 = vsel %vm525, %v523, 0
      %v533 = vsel %vm525, %v524, 0
      %535 = vmatprep.subr.bf16.mxu0 %v509
      %536 = vmatpush1.bf16.msra.mxu0 %v508
      %537 = vmatprep.subr.bf16.mxu0 0
      %538 = vmatpush1.bf16.msra.mxu0 0
      %539 = vmatprep.subr.bf16.mxu0 0
      %540 = vmatpush1.bf16.msra.mxu0 0
      %541 = vmatprep.subr.bf16.mxu0 0
      %542 = vmatpush1.bf16.msra.mxu0 0
      %543 = vmatprep.subr.bf16.mxu0 0
      %544 = vmatpush1.bf16.msra.mxu0 0
      %545 = vmatprep.subr.bf16.mxu0 0
      %546 = vmatpush1.bf16.msra.mxu0 0
      %547 = vmatprep.subr.bf16.mxu0 0
      %548 = vmatpush1.bf16.msra.mxu0 0
      %549 = vmatprep.subr.bf16.mxu0 0
      %550 = vmatpush1.bf16.msra.mxu0 0
      %551 = vmatprep.subr.bf16.mxu0 0
      %552 = vmatpush1.bf16.msra.mxu0 0
      %553 = vmatprep.subr.bf16.mxu0 0
      %554 = vmatpush1.bf16.msra.mxu0 0
      %555 = vmatprep.subr.bf16.mxu0 0
      %556 = vmatpush1.bf16.msra.mxu0 0
      %557 = vmatprep.subr.bf16.mxu0 0
      %558 = vmatpush1.bf16.msra.mxu0 0
      %559 = vmatprep.subr.bf16.mxu0 0
      %560 = vmatpush1.bf16.msra.mxu0 0
      %561 = vmatprep.subr.bf16.mxu0 0
      %562 = vmatpush1.bf16.msra.mxu0 0
      %563 = vmatprep.subr.bf16.mxu0 0
      %564 = vmatpush1.bf16.msra.mxu0 0
      %565 = vmatprep.subr.bf16.mxu0 0
      %566 = vmatpush1.bf16.msra.mxu0 0
      %567 = vmatprep.mubr.bf16.mxu0 0
      %568 = vmatmul.mubr.bf16.gmra.mrb[0].mxu0 %v527
      %v569 = vpop.f32.mrb[0].mxu0
      %v570 = vadd.f32 0.0, %v569
      %v571 = vpop.f32.mrb[0].mxu0
      %v572 = vadd.f32 0.0, %v571
      %v573 = vpop.f32.mrb[0].mxu0
      %v574 = vadd.f32 0.0, %v573
      %v575 = vpop.f32.mrb[0].mxu0
      %v576 = vadd.f32 0.0, %v575
      %577 = vmatprep.mubr.bf16.mxu0 0
      %578 = vmatmul.mubr.bf16.gmra.mrb[0].mxu0 %v530
      %v579 = vpop.f32.mrb[0].mxu0
      %v580 = vadd.f32 0.0, %v579
      %v581 = vpop.f32.mrb[0].mxu0
      %v582 = vadd.f32 0.0, %v581
      %v583 = vpop.f32.mrb[0].mxu0
      %v584 = vadd.f32 0.0, %v583
      %v585 = vpop.f32.mrb[0].mxu0
      %v586 = vadd.f32 0.0, %v585
      %587 = vmatprep.mubr.bf16.mxu0 0
      %588 = vmatmul.mubr.bf16.gmra.mrb[0].mxu0 %v533
      %v589 = vpop.f32.mrb[0].mxu0
      %v590 = vadd.f32 0.0, %v589
      %v591 = vpop.f32.mrb[0].mxu0
      %v592 = vadd.f32 0.0, %v591
      %v593 = vpop.f32.mrb[0].mxu0
      %v594 = vadd.f32 0.0, %v593
      %v595 = vpop.f32.mrb[0].mxu0
      %v596 = vadd.f32 0.0, %v595
      %597 = vdwg.mxu0
      %v598 = vmul.f32 %v580, %v580
      %v599 = vmul.f32 %v582, %v582
      %v600 = vmul.f32 %v584, %v584
      %v601 = vmul.f32 %v586, %v586
      %v602 = vadd.f32 %v598, %v599
      %603 = vadd.xlane.f32.xlu0 %v602
      %v604 = vpop.xlane.xlu0 %603
      %v605 = vadd.f32 %v600, %v601
      %606 = vadd.xlane.f32.xlu0 %v605
      %v607 = vpop.xlane.xlu0 %606
      %v608 = vrsqrt.pop %v604
      %v609 = vmul.f32 %v604, %v608
      %vm610 = vcmp.eq.f32.partialorder %v604, inf
      %v611 = vsel %vm610, %v604, %v609
      %vm612 = vcmp.eq.f32.partialorder %v604, 0.0
      %v613 = vand.u32 %v604, 2147483648
      %v614 = vsel %vm612, %v613, %v611
      %v615 = vrsqrt.pop %v607
      %v616 = vmul.f32 %v607, %v615
      %vm617 = vcmp.eq.f32.partialorder %v607, inf
      %v618 = vsel %vm617, %v607, %v616
      %vm619 = vcmp.eq.f32.partialorder %v607, 0.0
      %v620 = vand.u32 %v607, 2147483648
      %v621 = vsel %vm619, %v620, %v618
      %v622 = vmax.f32 %v614, 1e-12
      %v623 = vmax.f32 %v621, 1e-12
      %v624 = vrcp.pop %v622
      %v625 = vmul.f32 1.0, %v624
      %v626 = vrcp.pop %v623
      %v627 = vmul.f32 1.0, %v626
      %v628 = vmul.f32 %v570, %v570
      %v629 = vmul.f32 %v572, %v572
      %v630 = vmul.f32 %v574, %v574
      %v631 = vmul.f32 %v576, %v576
      %v632 = vadd.f32 %v628, %v629
      %633 = vadd.xlane.f32.xlu0 %v632
      %v634 = vpop.xlane.xlu0 %633
      %v635 = vadd.f32 %v630, %v631
      %636 = vadd.xlane.f32.xlu0 %v635
      %v637 = vpop.xlane.xlu0 %636
      %v638 = vrsqrt.pop %v634
      %v639 = vmul.f32 %v634, %v638
      %vm640 = vcmp.eq.f32.partialorder %v634, inf
      %v641 = vsel %vm640, %v634, %v639
      %vm642 = vcmp.eq.f32.partialorder %v634, 0.0
      %v643 = vand.u32 %v634, 2147483648
      %v644 = vsel %vm642, %v643, %v641
      %v645 = vrsqrt.pop %v637
      %v646 = vmul.f32 %v637, %v645
      %vm647 = vcmp.eq.f32.partialorder %v637, inf
      %v648 = vsel %vm647, %v637, %v646
      %vm649 = vcmp.eq.f32.partialorder %v637, 0.0
      %v650 = vand.u32 %v637, 2147483648
      %v651 = vsel %vm649, %v650, %v648
      %v652 = vmax.f32 %v644, 1e-12
      %v653 = vmax.f32 %v651, 1e-12
      %v654 = vrcp.pop %v652
      %v655 = vmul.f32 1.0, %v654
      %v656 = vrcp.pop %v653
      %v657 = vmul.f32 1.0, %v656
      %v658 = vlaneseq
      %v659 = vshrl.u32 %v658, 7
      %v660 = vadd.s32 %v659, 8
      %v661 = vlaneseq
      %v662 = vand.u32 %v661, 127
      %vm663 = vcmp.eq.s32.totalorder %v659, %v662
      %vm664 = vcmp.eq.s32.totalorder %v660, %v662
      %v665 = vsel %vm663, 1, 0
      %v666 = vsel %vm664, 1, 0
      %v667 = vcvt.s32.f32 %v665
      %v668 = vcvt.s32.f32 %v666
      %v669 = vmul.f32 %v667, %v655
      %v670 = vmul.f32 %v668, %v657
      %v671 = vsel %vm525, %v669, 0.0
      %v672 = vsel %vm525, %v670, 0.0
      %v673 = vadd.f32 %v671, %v672
      %v674 = vrot.slane %v673, 4
      %v675 = vadd.f32 %v673, %v674
      %v676 = vrot.slane %v675, 2
      %v677 = vadd.f32 %v675, %v676
      %v678 = vrot.slane %v677, 1
      %v679 = vadd.f32 %v677, %v678
      %v680 = vpack.c.bf16 %v574, %v570
      %v681 = vpack.c.bf16 %v576, %v572
      %v682 = vpack.c.bf16 %v584, %v580
      %v683 = vpack.c.bf16 %v586, %v582
      %v684 = vpack.c.bf16 %v594, %v590
      %v685 = vpack.c.bf16 %v596, %v592
      %686 = vmatprep.subr.bf16.mxu0 %v681
      %687 = vmatpush1.bf16.xpose.msra.mxu0 %v680
      %688 = vmatprep.subr.bf16.mxu0 0
      %689 = vmatpush1.bf16.xpose.msra.mxu0 0
      %690 = vmatprep.subr.bf16.mxu0 0
      %691 = vmatpush1.bf16.xpose.msra.mxu0 0
      %692 = vmatprep.subr.bf16.mxu0 0
      %693 = vmatpush1.bf16.xpose.msra.mxu0 0
      %694 = vmatprep.subr.bf16.mxu0 0
      %695 = vmatpush1.bf16.xpose.msra.mxu0 0
      %696 = vmatprep.subr.bf16.mxu0 0
      %697 = vmatpush1.bf16.xpose.msra.mxu0 0
      %698 = vmatprep.subr.bf16.mxu0 0
      %699 = vmatpush1.bf16.xpose.msra.mxu0 0
      %700 = vmatprep.subr.bf16.mxu0 0
      %701 = vmatpush1.bf16.xpose.msra.mxu0 0
      %702 = vmatprep.subr.bf16.mxu0 0
      %703 = vmatpush1.bf16.xpose.msra.mxu0 0
      %704 = vmatprep.subr.bf16.mxu0 0
      %705 = vmatpush1.bf16.xpose.msra.mxu0 0
      %706 = vmatprep.subr.bf16.mxu0 0
      %707 = vmatpush1.bf16.xpose.msra.mxu0 0
      %708 = vmatprep.subr.bf16.mxu0 0
      %709 = vmatpush1.bf16.xpose.msra.mxu0 0
      %710 = vmatprep.subr.bf16.mxu0 0
      %711 = vmatpush1.bf16.xpose.msra.mxu0 0
      %712 = vmatprep.subr.bf16.mxu0 0
      %713 = vmatpush1.bf16.xpose.msra.mxu0 0
      %714 = vmatprep.subr.bf16.mxu0 0
      %715 = vmatpush1.bf16.xpose.msra.mxu0 0
      %716 = vmatprep.subr.bf16.mxu0 0
      %717 = vmatpush1.bf16.xpose.msra.mxu0 0
      %718 = vmatprep.mubr.bf16.mxu0 %v683
      %719 = vmatmul.mubr.bf16.gmra.mrb[0].mxu0 %v682
      %v720 = vpop.f32.mrb[0].mxu0
      %v721 = vadd.f32 0.0, %v720
      %v722 = vpop.f32.mrb[0].mxu0
      %v723 = vpop.f32.mrb[0].mxu0
      %v724 = vadd.f32 0.0, %v723
      %v725 = vpop.f32.mrb[0].mxu0
      %726 = vdwg.mxu0
      %v727 = vld [vmem:[%s5] sm:$0xff]
      %v728 = vld [vmem:[%s5 + $0x8] sm:$0xff]
      %v729 = vmul.f32 %v625, %v727
      %v730 = vmul.f32 %v627, %v728
      %732 = vset.pattern.permute.xlu0 0
      %733 = vperm.xlu0 %732, %v729
      %v734 = vpop.permute.xlu0 %733
      %737 = vset.pattern.permute.xlu0 0
      %738 = vperm.xlu0 %737, %v730
      %v739 = vpop.permute.xlu0 %738
      %v741 = vmul.f32 %v721, %v734
      %v742 = vmul.f32 %v724, %v739
      %v743 = vmul.f32 %v741, %v679
      %v744 = vmul.f32 %v742, %v679
      %v745 = vld [vmem:[%s3] sm:$0xff]
      %v746 = vld [vmem:[%s3 + $0x8] sm:$0xff]
      %v747 = vadd.f32 %v743, %v745
      %v748 = vadd.f32 %v744, %v746
      %v749 = vsel %vm525, %v747, -inf
      %750 = vmax.xlane.f32.xlu0 %v749
      %v751 = vpop.xlane.xlu0 %750
      %v752 = vsel %vm525, %v748, -inf
      %753 = vmax.xlane.f32.xlu0 %v752
      %v754 = vpop.xlane.xlu0 %753
      %v755 = vsub.f32 %v747, %v751
      %v756 = vsub.f32 %v748, %v754
      %v757 = vmul.f32 %v755, 1.442695
      %v758 = vpow.pop %v757
      %v759 = vmul.f32 %v756, 1.442695
      %v760 = vpow.pop %v759
      %v761 = vsel %vm525, %v758, 0.0
      %762 = vadd.xlane.f32.xlu0 %v761
      %v763 = vpop.xlane.xlu0 %762
      %v764 = vsel %vm525, %v760, 0.0
      %765 = vadd.xlane.f32.xlu0 %v764
      %v766 = vpop.xlane.xlu0 %765
      %v767 = vrcp.pop %v763
      %v768 = vrcp.pop %v766
      %v769 = vmul.f32 %v758, %v767
      %v770 = vmul.f32 %v760, %v768
      %v771 = vld [vmem:[%s6] sm:$0xf]
      %v772 = vld [vmem:[%s6 + $0x4] sm:$0xf]
      %v773 = vpack.c.bf16 %v770, %v769
      %v776 = vunpack.c.l.b16 %v771
      %v777 = vunpack.c.l.b16 %v772
      %v778 = vpack.c.b16 %v777, %v776
      %v780 = vsel %vm525, %v778, 0
      %782 = vmatprep.subr.bf16.mxu0 0
      %783 = vmatpush1.bf16.msra.mxu0 %v773
      %784 = vmatprep.subr.bf16.mxu0 0
      %785 = vmatpush1.bf16.msra.mxu0 0
      %786 = vmatprep.subr.bf16.mxu0 0
      %787 = vmatpush1.bf16.msra.mxu0 0
      %788 = vmatprep.subr.bf16.mxu0 0
      %789 = vmatpush1.bf16.msra.mxu0 0
      %790 = vmatprep.subr.bf16.mxu0 0
      %791 = vmatpush1.bf16.msra.mxu0 0
      %792 = vmatprep.subr.bf16.mxu0 0
      %793 = vmatpush1.bf16.msra.mxu0 0
      %794 = vmatprep.subr.bf16.mxu0 0
      %795 = vmatpush1.bf16.msra.mxu0 0
      %796 = vmatprep.subr.bf16.mxu0 0
      %797 = vmatpush1.bf16.msra.mxu0 0
      %798 = vmatprep.subr.bf16.mxu0 0
      %799 = vmatpush1.bf16.msra.mxu0 0
      %800 = vmatprep.subr.bf16.mxu0 0
      %801 = vmatpush1.bf16.msra.mxu0 0
      %802 = vmatprep.subr.bf16.mxu0 0
      %803 = vmatpush1.bf16.msra.mxu0 0
      %804 = vmatprep.subr.bf16.mxu0 0
      %805 = vmatpush1.bf16.msra.mxu0 0
      %806 = vmatprep.subr.bf16.mxu0 0
      %807 = vmatpush1.bf16.msra.mxu0 0
      %808 = vmatprep.subr.bf16.mxu0 0
      %809 = vmatpush1.bf16.msra.mxu0 0
      %810 = vmatprep.subr.bf16.mxu0 0
      %811 = vmatpush1.bf16.msra.mxu0 0
      %812 = vmatprep.subr.bf16.mxu0 0
      %813 = vmatpush1.bf16.msra.mxu0 0
      %814 = vmatprep.mubr.bf16.mxu0 0
      %815 = vmatmul.mubr.bf16.gmra.mrb[0].mxu0 %v780
      %v816 = vpop.f32.mrb[0].mxu0
      %v817 = vadd.f32 0.0, %v816
      %v818 = vpop.f32.mrb[0].mxu0
      %v819 = vpop.f32.mrb[0].mxu0
      %v820 = vadd.f32 0.0, %v819
      %v821 = vpop.f32.mrb[0].mxu0
      %822 = vdwg.mxu0
      %v823 = vpack.c.bf16 %v820, %v817
      %v824 = vld [vmem:[%s7] sm:$0xff]
      %v825 = vld [vmem:[%s7 + $0x8] sm:$0xff]
      %827 = vset.pattern.permute.xlu0 0
      %828 = vperm.xlu0 %827, %v824
      %v829 = vpop.permute.xlu0 %828
      %832 = vset.pattern.permute.xlu0 0
      %833 = vperm.xlu0 %832, %v825
      %v834 = vpop.permute.xlu0 %833
      %v837 = vsel %vm525, %v823, 0
      %839 = vmatprep.subr.bf16.mxu0 %v685
      %840 = vmatpush1.bf16.msra.mxu0 %v684
      %841 = vmatprep.subr.bf16.mxu0 0
      %842 = vmatpush1.bf16.msra.mxu0 0
      %843 = vmatprep.subr.bf16.mxu0 0
      %844 = vmatpush1.bf16.msra.mxu0 0
      %845 = vmatprep.subr.bf16.mxu0 0
      %846 = vmatpush1.bf16.msra.mxu0 0
      %847 = vmatprep.subr.bf16.mxu0 0
      %848 = vmatpush1.bf16.msra.mxu0 0
      %849 = vmatprep.subr.bf16.mxu0 0
      %850 = vmatpush1.bf16.msra.mxu0 0
      %851 = vmatprep.subr.bf16.mxu0 0
      %852 = vmatpush1.bf16.msra.mxu0 0
      %853 = vmatprep.subr.bf16.mxu0 0
      %854 = vmatpush1.bf16.msra.mxu0 0
      %855 = vmatprep.subr.bf16.mxu0 0
      %856 = vmatpush1.bf16.msra.mxu0 0
      %857 = vmatprep.subr.bf16.mxu0 0
      %858 = vmatpush1.bf16.msra.mxu0 0
      %859 = vmatprep.subr.bf16.mxu0 0
      %860 = vmatpush1.bf16.msra.mxu0 0
      %861 = vmatprep.subr.bf16.mxu0 0
      %862 = vmatpush1.bf16.msra.mxu0 0
      %863 = vmatprep.subr.bf16.mxu0 0
      %864 = vmatpush1.bf16.msra.mxu0 0
      %865 = vmatprep.subr.bf16.mxu0 0
      %866 = vmatpush1.bf16.msra.mxu0 0
      %867 = vmatprep.subr.bf16.mxu0 0
      %868 = vmatpush1.bf16.msra.mxu0 0
      %869 = vmatprep.subr.bf16.mxu0 0
      %870 = vmatpush1.bf16.msra.mxu0 0
      %871 = vmatprep.mubr.bf16.mxu0 0
      %872 = vmatmul.mubr.bf16.gmra.mrb[0].mxu0 %v837
      %v873 = vpop.f32.mrb[0].mxu0
      %v874 = vadd.f32 %v829, %v873
      %v875 = vpop.f32.mrb[0].mxu0
      %v876 = vadd.f32 %v829, %v875
      %v877 = vpop.f32.mrb[0].mxu0
      %v878 = vadd.f32 %v834, %v877
      %v879 = vpop.f32.mrb[0].mxu0
      %v880 = vadd.f32 %v834, %v879
      %881 = vdwg.mxu0
      %v882 = vld [vmem:[%s8] sm:$0xff]
      %v883 = vld [vmem:[%s8 + $0x8] sm:$0xff]
      %888 = vrot.lane.b32.xlu0 %v590, 17
      %v889 = vpop.permute.xlu0 %888
      %890 = vrot.lane.b32.xlu0 %v592, 17
      %v891 = vpop.permute.xlu0 %890
      %892 = vrot.lane.b32.xlu0 %v594, 17
      %v893 = vpop.permute.xlu0 %892
      %894 = vrot.lane.b32.xlu0 %v596, 17
      %v895 = vpop.permute.xlu0 %894
      %vm896 = vcmask 138240
      %v897 = vsel %vm896, %v889, %v891
      %v898 = vsel %vm896, %v893, %v895
      %v905 = vsel %vm896, 0.0, %v889
      %v906 = vsel %vm896, 0.0, %v893
      %v907 = vsel %vm896, %v891, 0.0
      %v908 = vsel %vm896, %v895, 0.0
      %910 = vset.pattern.permute.xlu0 4
      %911 = vperm.xlu0 %910, %v882
      %v912 = vpop.permute.xlu0 %911
      %915 = vset.pattern.permute.xlu0 4
      %916 = vperm.xlu0 %915, %v883
      %v917 = vpop.permute.xlu0 %916
      %v919 = vmul.f32 %v590, %v912
      %v920 = vmul.f32 %v592, %v912
      %v921 = vmul.f32 %v594, %v917
      %v922 = vmul.f32 %v596, %v917
      %v924 = vlaneseq
      %v925 = vshrl.u32 %v924, 7
      %v926 = vsub.s32 0, %v925
      %v927 = vrot.slane %v500, %v926
      %v928 = vlaneseq
      %v929 = vshrl.u32 %v928, 7
      %v930 = vsub.s32 1, %v929
      %v931 = vrot.slane %v500, %v930
      %v934 = vmul.f32 %v905, %v927
      %v935 = vmul.f32 %v897, %v931
      %v936 = vmul.f32 %v906, %v927
      %v937 = vmul.f32 %v898, %v931
      %938 = vset.pattern.permute.xlu0 0
      %939 = vperm.xlu0 %938, %v882
      %v940 = vpop.permute.xlu0 %939
      %942 = vset.pattern.permute.xlu0 0
      %943 = vperm.xlu0 %942, %v883
      %v944 = vpop.permute.xlu0 %943
      %v946 = vmul.f32 %v934, %v940
      %v947 = vmul.f32 %v935, %v940
      %v948 = vmul.f32 %v936, %v944
      %v949 = vmul.f32 %v937, %v944
      %v950 = vadd.f32 %v919, %v946
      %v951 = vadd.f32 %v920, %v947
      %v952 = vadd.f32 %v921, %v948
      %v953 = vadd.f32 %v922, %v949
      %954 = vset.pattern.permute.xlu0 1
      %955 = vperm.xlu0 %954, %v882
      %v956 = vpop.permute.xlu0 %955
      %958 = vset.pattern.permute.xlu0 1
      %959 = vperm.xlu0 %958, %v883
      %v960 = vpop.permute.xlu0 %959
      %v962 = vmul.f32 %v905, %v956
      %v963 = vmul.f32 %v897, %v956
      %v964 = vmul.f32 %v907, %v956
      %v965 = vmul.f32 %v906, %v960
      %v966 = vmul.f32 %v898, %v960
      %v967 = vmul.f32 %v908, %v960
      %974 = vrot.lane.b32.xlu0 %v962, 127
      %v975 = vpop.permute.xlu0 %974
      %976 = vrot.lane.b32.xlu0 %v963, 127
      %v977 = vpop.permute.xlu0 %976
      %978 = vrot.lane.b32.xlu0 %v964, 127
      %v979 = vpop.permute.xlu0 %978
      %980 = vrot.lane.b32.xlu0 %v965, 127
      %v981 = vpop.permute.xlu0 %980
      %982 = vrot.lane.b32.xlu0 %v966, 127
      %v983 = vpop.permute.xlu0 %982
      %984 = vrot.lane.b32.xlu0 %v967, 127
      %v985 = vpop.permute.xlu0 %984
      %vm986 = vcmask 1039360
      %v987 = vsel %vm986, %v975, %v977
      %v988 = vsel %vm986, %v977, %v979
      %v989 = vsel %vm986, %v981, %v983
      %v990 = vsel %vm986, %v983, %v985
      %v995 = vadd.f32 %v950, %v987
      %v996 = vadd.f32 %v951, %v988
      %v997 = vadd.f32 %v952, %v989
      %v998 = vadd.f32 %v953, %v990
      %v1000 = vlaneseq
      %v1001 = vshrl.u32 %v1000, 7
      %v1002 = vsub.s32 0, %v1001
      %v1003 = vrot.slane %v501, %v1002
      %v1004 = vlaneseq
      %v1005 = vshrl.u32 %v1004, 7
      %v1006 = vsub.s32 1, %v1005
      %v1007 = vrot.slane %v501, %v1006
      %1008 = vrot.lane.b32.xlu0 %v1003, 2
      %v1009 = vpop.permute.xlu0 %1008
      %1010 = vrot.lane.b32.xlu0 %v1007, 2
      %v1011 = vpop.permute.xlu0 %1010
      %vm1012 = vcmask 15360
      %v1013 = vsel %vm1012, %v1009, %v1011
      %v1017 = vmul.f32 %v905, %v1009
      %v1018 = vmul.f32 %v897, %v1013
      %v1019 = vmul.f32 %v907, %v1011
      %v1020 = vmul.f32 %v906, %v1009
      %v1021 = vmul.f32 %v898, %v1013
      %v1022 = vmul.f32 %v908, %v1011
      %1023 = vset.pattern.permute.xlu0 2
      %1024 = vperm.xlu0 %1023, %v882
      %v1025 = vpop.permute.xlu0 %1024
      %1027 = vset.pattern.permute.xlu0 2
      %1028 = vperm.xlu0 %1027, %v883
      %v1029 = vpop.permute.xlu0 %1028
      %v1031 = vmul.f32 %v1017, %v1025
      %v1032 = vmul.f32 %v1018, %v1025
      %v1033 = vmul.f32 %v1019, %v1025
      %v1034 = vmul.f32 %v1020, %v1029
      %v1035 = vmul.f32 %v1021, %v1029
      %v1036 = vmul.f32 %v1022, %v1029
      %1043 = vrot.lane.b32.xlu0 %v1031, 126
      %v1044 = vpop.permute.xlu0 %1043
      %1045 = vrot.lane.b32.xlu0 %v1032, 126
      %v1046 = vpop.permute.xlu0 %1045
      %1047 = vrot.lane.b32.xlu0 %v1033, 126
      %v1048 = vpop.permute.xlu0 %1047
      %1049 = vrot.lane.b32.xlu0 %v1034, 126
      %v1050 = vpop.permute.xlu0 %1049
      %1051 = vrot.lane.b32.xlu0 %v1035, 126
      %v1052 = vpop.permute.xlu0 %1051
      %1053 = vrot.lane.b32.xlu0 %v1036, 126
      %v1054 = vpop.permute.xlu0 %1053
      %vm1055 = vcmask 1031168
      %v1056 = vsel %vm1055, %v1044, %v1046
      %v1057 = vsel %vm1055, %v1046, %v1048
      %v1058 = vsel %vm1055, %v1050, %v1052
      %v1059 = vsel %vm1055, %v1052, %v1054
      %v1064 = vadd.f32 %v995, %v1056
      %v1065 = vadd.f32 %v996, %v1057
      %v1066 = vadd.f32 %v997, %v1058
      %v1067 = vadd.f32 %v998, %v1059
      %1068 = vrot.lane.b32.xlu0 %v927, 16
      %v1069 = vpop.permute.xlu0 %1068
      %1070 = vrot.lane.b32.xlu0 %v931, 16
      %v1071 = vpop.permute.xlu0 %1070
      %v1072 = vsel %vm525, %v1069, %v1071
      %v1076 = vmul.f32 %v905, %v1069
      %v1077 = vmul.f32 %v897, %v1072
      %v1078 = vmul.f32 %v907, %v1071
      %v1079 = vmul.f32 %v906, %v1069
      %v1080 = vmul.f32 %v898, %v1072
      %v1081 = vmul.f32 %v908, %v1071
      %1082 = vset.pattern.permute.xlu0 3
      %1083 = vperm.xlu0 %1082, %v882
      %v1084 = vpop.permute.xlu0 %1083
      %1086 = vset.pattern.permute.xlu0 3
      %1087 = vperm.xlu0 %1086, %v883
      %v1088 = vpop.permute.xlu0 %1087
      %v1090 = vmul.f32 %v1076, %v1084
      %v1091 = vmul.f32 %v1077, %v1084
      %v1092 = vmul.f32 %v1078, %v1084
      %v1093 = vmul.f32 %v1079, %v1088
      %v1094 = vmul.f32 %v1080, %v1088
      %v1095 = vmul.f32 %v1081, %v1088
      %1102 = vrot.lane.b32.xlu0 %v1090, 112
      %v1103 = vpop.permute.xlu0 %1102
      %1104 = vrot.lane.b32.xlu0 %v1091, 112
      %v1105 = vpop.permute.xlu0 %1104
      %1106 = vrot.lane.b32.xlu0 %v1092, 112
      %v1107 = vpop.permute.xlu0 %1106
      %1108 = vrot.lane.b32.xlu0 %v1093, 112
      %v1109 = vpop.permute.xlu0 %1108
      %1110 = vrot.lane.b32.xlu0 %v1094, 112
      %v1111 = vpop.permute.xlu0 %1110
      %1112 = vrot.lane.b32.xlu0 %v1095, 112
      %v1113 = vpop.permute.xlu0 %1112
      %vm1114 = vcmask 916480
      %v1115 = vsel %vm1114, %v1103, %v1105
      %v1116 = vsel %vm1114, %v1105, %v1107
      %v1117 = vsel %vm1114, %v1109, %v1111
      %v1118 = vsel %vm1114, %v1111, %v1113
      %v1123 = vadd.f32 %v1064, %v1115
      %v1124 = vadd.f32 %v1065, %v1116
      %v1125 = vadd.f32 %v1066, %v1117
      %v1126 = vadd.f32 %v1067, %v1118
      %1127 = vrot.lane.b32.xlu0 %v1003, 18
      %v1128 = vpop.permute.xlu0 %1127
      %1129 = vrot.lane.b32.xlu0 %v1007, 18
      %v1130 = vpop.permute.xlu0 %1129
      %vm1131 = vcmask 146432
      %v1132 = vsel %vm1131, %v1128, %v1130
      %v1136 = vmul.f32 %v905, %v1128
      %v1137 = vmul.f32 %v897, %v1132
      %v1138 = vmul.f32 %v907, %v1130
      %v1139 = vmul.f32 %v906, %v1128
      %v1140 = vmul.f32 %v898, %v1132
      %v1141 = vmul.f32 %v908, %v1130
      %1142 = vset.pattern.permute.xlu0 5
      %1143 = vperm.xlu0 %1142, %v882
      %v1144 = vpop.permute.xlu0 %1143
      %1146 = vset.pattern.permute.xlu0 5
      %1147 = vperm.xlu0 %1146, %v883
      %v1148 = vpop.permute.xlu0 %1147
      %v1150 = vmul.f32 %v1136, %v1144
      %v1151 = vmul.f32 %v1137, %v1144
      %v1152 = vmul.f32 %v1138, %v1144
      %v1153 = vmul.f32 %v1139, %v1148
      %v1154 = vmul.f32 %v1140, %v1148
      %v1155 = vmul.f32 %v1141, %v1148
      %1162 = vrot.lane.b32.xlu0 %v1150, 110
      %v1163 = vpop.permute.xlu0 %1162
      %1164 = vrot.lane.b32.xlu0 %v1151, 110
      %v1165 = vpop.permute.xlu0 %1164
      %1166 = vrot.lane.b32.xlu0 %v1152, 110
      %v1167 = vpop.permute.xlu0 %1166
      %1168 = vrot.lane.b32.xlu0 %v1153, 110
      %v1169 = vpop.permute.xlu0 %1168
      %1170 = vrot.lane.b32.xlu0 %v1154, 110
      %v1171 = vpop.permute.xlu0 %1170
      %1172 = vrot.lane.b32.xlu0 %v1155, 110
      %v1173 = vpop.permute.xlu0 %1172
      %vm1174 = vcmask 900096
      %v1175 = vsel %vm1174, %v1163, %v1165
      %v1176 = vsel %vm1174, %v1165, %v1167
      %v1177 = vsel %vm1174, %v1169, %v1171
      %v1178 = vsel %vm1174, %v1171, %v1173
      %v1183 = vadd.f32 %v1123, %v1175
      %v1184 = vadd.f32 %v1124, %v1176
      %v1185 = vadd.f32 %v1125, %v1177
      %v1186 = vadd.f32 %v1126, %v1178
      %1187 = vrot.lane.b32.xlu0 %v927, 32
      %v1188 = vpop.permute.xlu0 %1187
      %1189 = vrot.lane.b32.xlu0 %v931, 32
      %v1190 = vpop.permute.xlu0 %1189
      %vm1191 = vcmask 261120
      %v1192 = vsel %vm1191, %v1188, %v1190
      %v1196 = vmul.f32 %v905, %v1188
      %v1197 = vmul.f32 %v897, %v1192
      %v1198 = vmul.f32 %v907, %v1190
      %v1199 = vmul.f32 %v906, %v1188
      %v1200 = vmul.f32 %v898, %v1192
      %v1201 = vmul.f32 %v908, %v1190
      %1202 = vset.pattern.permute.xlu0 6
      %1203 = vperm.xlu0 %1202, %v882
      %v1204 = vpop.permute.xlu0 %1203
      %1206 = vset.pattern.permute.xlu0 6
      %1207 = vperm.xlu0 %1206, %v883
      %v1208 = vpop.permute.xlu0 %1207
      %v1210 = vmul.f32 %v1196, %v1204
      %v1211 = vmul.f32 %v1197, %v1204
      %v1212 = vmul.f32 %v1198, %v1204
      %v1213 = vmul.f32 %v1199, %v1208
      %v1214 = vmul.f32 %v1200, %v1208
      %v1215 = vmul.f32 %v1201, %v1208
      %1222 = vrot.lane.b32.xlu0 %v1210, 96
      %v1223 = vpop.permute.xlu0 %1222
      %1224 = vrot.lane.b32.xlu0 %v1211, 96
      %v1225 = vpop.permute.xlu0 %1224
      %1226 = vrot.lane.b32.xlu0 %v1212, 96
      %v1227 = vpop.permute.xlu0 %1226
      %1228 = vrot.lane.b32.xlu0 %v1213, 96
      %v1229 = vpop.permute.xlu0 %1228
      %1230 = vrot.lane.b32.xlu0 %v1214, 96
      %v1231 = vpop.permute.xlu0 %1230
      %1232 = vrot.lane.b32.xlu0 %v1215, 96
      %v1233 = vpop.permute.xlu0 %1232
      %vm1234 = vcmask 785408
      %v1235 = vsel %vm1234, %v1223, %v1225
      %v1236 = vsel %vm1234, %v1225, %v1227
      %v1237 = vsel %vm1234, %v1229, %v1231
      %v1238 = vsel %vm1234, %v1231, %v1233
      %v1243 = vadd.f32 %v1183, %v1235
      %v1244 = vadd.f32 %v1184, %v1236
      %v1245 = vadd.f32 %v1185, %v1237
      %v1246 = vadd.f32 %v1186, %v1238
      %1247 = vset.pattern.permute.xlu0 7
      %1248 = vperm.xlu0 %1247, %v882
      %v1249 = vpop.permute.xlu0 %1248
      %1251 = vset.pattern.permute.xlu0 7
      %1252 = vperm.xlu0 %1251, %v883
      %v1253 = vpop.permute.xlu0 %1252
      %v1255 = vmul.f32 %v905, %v1249
      %v1256 = vmul.f32 %v897, %v1249
      %v1257 = vmul.f32 %v907, %v1249
      %v1258 = vmul.f32 %v906, %v1253
      %v1259 = vmul.f32 %v898, %v1253
      %v1260 = vmul.f32 %v908, %v1253
      %1267 = vrot.lane.b32.xlu0 %v1255, 95
      %v1268 = vpop.permute.xlu0 %1267
      %1269 = vrot.lane.b32.xlu0 %v1256, 95
      %v1270 = vpop.permute.xlu0 %1269
      %1271 = vrot.lane.b32.xlu0 %v1257, 95
      %v1272 = vpop.permute.xlu0 %1271
      %1273 = vrot.lane.b32.xlu0 %v1258, 95
      %v1274 = vpop.permute.xlu0 %1273
      %1275 = vrot.lane.b32.xlu0 %v1259, 95
      %v1276 = vpop.permute.xlu0 %1275
      %1277 = vrot.lane.b32.xlu0 %v1260, 95
      %v1278 = vpop.permute.xlu0 %1277
      %vm1279 = vcmask 777216
      %v1280 = vsel %vm1279, %v1268, %v1270
      %v1281 = vsel %vm1279, %v1270, %v1272
      %v1282 = vsel %vm1279, %v1274, %v1276
      %v1283 = vsel %vm1279, %v1276, %v1278
      %v1288 = vadd.f32 %v1243, %v1280
      %v1289 = vadd.f32 %v1244, %v1281
      %v1290 = vadd.f32 %v1245, %v1282
      %v1291 = vadd.f32 %v1246, %v1283
      %1292 = vrot.lane.b32.xlu0 %v1003, 34
      %v1293 = vpop.permute.xlu0 %1292
      %1294 = vrot.lane.b32.xlu0 %v1007, 34
      %v1295 = vpop.permute.xlu0 %1294
      %vm1296 = vcmask 277504
      %v1297 = vsel %vm1296, %v1293, %v1295
      %v1301 = vmul.f32 %v905, %v1293
      %v1302 = vmul.f32 %v897, %v1297
      %v1303 = vmul.f32 %v907, %v1295
      %v1304 = vmul.f32 %v906, %v1293
      %v1305 = vmul.f32 %v898, %v1297
      %v1306 = vmul.f32 %v908, %v1295
      %1307 = vset.pattern.permute.xlu0 8
      %1308 = vperm.xlu0 %1307, %v882
      %v1309 = vpop.permute.xlu0 %1308
      %1311 = vset.pattern.permute.xlu0 8
      %1312 = vperm.xlu0 %1311, %v883
      %v1313 = vpop.permute.xlu0 %1312
      %v1315 = vmul.f32 %v1301, %v1309
      %v1316 = vmul.f32 %v1302, %v1309
      %v1317 = vmul.f32 %v1303, %v1309
      %v1318 = vmul.f32 %v1304, %v1313
      %v1319 = vmul.f32 %v1305, %v1313
      %v1320 = vmul.f32 %v1306, %v1313
      %1327 = vrot.lane.b32.xlu0 %v1315, 94
      %v1328 = vpop.permute.xlu0 %1327
      %1329 = vrot.lane.b32.xlu0 %v1316, 94
      %v1330 = vpop.permute.xlu0 %1329
      %1331 = vrot.lane.b32.xlu0 %v1317, 94
      %v1332 = vpop.permute.xlu0 %1331
      %1333 = vrot.lane.b32.xlu0 %v1318, 94
      %v1334 = vpop.permute.xlu0 %1333
      %1335 = vrot.lane.b32.xlu0 %v1319, 94
      %v1336 = vpop.permute.xlu0 %1335
      %1337 = vrot.lane.b32.xlu0 %v1320, 94
      %v1338 = vpop.permute.xlu0 %1337
      %vm1339 = vcmask 769024
      %v1340 = vsel %vm1339, %v1328, %v1330
      %v1341 = vsel %vm1339, %v1330, %v1332
      %v1342 = vsel %vm1339, %v1334, %v1336
      %v1343 = vsel %vm1339, %v1336, %v1338
      %v1348 = vadd.f32 %v1288, %v1340
      %v1349 = vadd.f32 %v1289, %v1341
      %v1350 = vadd.f32 %v1290, %v1342
      %v1351 = vadd.f32 %v1291, %v1343
      %v1352 = vmul.f32 %v1348, 0.5
      %v1353 = vmul.f32 %v1349, 0.5
      %v1354 = vmul.f32 %v1350, 0.5
      %v1355 = vmul.f32 %v1351, 0.5
      %v1356 = vmul.f32 %v1348, 0.044715
      %v1357 = vmul.f32 %v1349, 0.044715
      %v1358 = vmul.f32 %v1350, 0.044715
      %v1359 = vmul.f32 %v1351, 0.044715
      %v1360 = vmul.f32 %v1356, %v1348
      %v1361 = vmul.f32 %v1357, %v1349
      %v1362 = vmul.f32 %v1358, %v1350
      %v1363 = vmul.f32 %v1359, %v1351
      %v1364 = vmul.f32 %v1360, %v1348
      %v1365 = vmul.f32 %v1361, %v1349
      %v1366 = vmul.f32 %v1362, %v1350
      %v1367 = vmul.f32 %v1363, %v1351
      %v1368 = vadd.f32 %v1348, %v1364
      %v1369 = vadd.f32 %v1349, %v1365
      %v1370 = vadd.f32 %v1350, %v1366
      %v1371 = vadd.f32 %v1351, %v1367
      %v1372 = vmul.f32 %v1368, 0.7978846
      %v1373 = vmul.f32 %v1369, 0.7978846
      %v1374 = vmul.f32 %v1370, 0.7978846
      %v1375 = vmul.f32 %v1371, 0.7978846
      %v1376 = vtanh.pop %v1372
      %v1377 = vtanh.pop %v1373
      %v1378 = vtanh.pop %v1374
      %v1379 = vtanh.pop %v1375
      %v1380 = vadd.f32 %v1376, 1.0
      %v1381 = vadd.f32 %v1377, 1.0
      %v1382 = vadd.f32 %v1378, 1.0
      %v1383 = vadd.f32 %v1379, 1.0
      %v1384 = vmul.f32 %v1352, %v1380
      %v1385 = vmul.f32 %v1353, %v1381
      %v1386 = vmul.f32 %v1354, %v1382
      %v1387 = vmul.f32 %v1355, %v1383
      %v1388 = vld [vmem:[%s9] sm:$0xff]
      %v1389 = vld [vmem:[%s9 + $0x8] sm:$0xff]
      %1394 = vrot.lane.b32.xlu0 %v1384, 17
      %v1395 = vpop.permute.xlu0 %1394
      %1396 = vrot.lane.b32.xlu0 %v1385, 17
      %v1397 = vpop.permute.xlu0 %1396
      %1398 = vrot.lane.b32.xlu0 %v1386, 17
      %v1399 = vpop.permute.xlu0 %1398
      %1400 = vrot.lane.b32.xlu0 %v1387, 17
      %v1401 = vpop.permute.xlu0 %1400
      %v1402 = vsel %vm896, %v1395, %v1397
      %v1403 = vsel %vm896, %v1399, %v1401
      %v1410 = vsel %vm896, 0.0, %v1395
      %v1411 = vsel %vm896, 0.0, %v1399
      %v1412 = vsel %vm896, %v1397, 0.0
      %v1413 = vsel %vm896, %v1401, 0.0
      %1415 = vset.pattern.permute.xlu0 4
      %1416 = vperm.xlu0 %1415, %v1388
      %v1417 = vpop.permute.xlu0 %1416
      %1420 = vset.pattern.permute.xlu0 4
      %1421 = vperm.xlu0 %1420, %v1389
      %v1422 = vpop.permute.xlu0 %1421
      %v1424 = vmul.f32 %v1384, %v1417
      %v1425 = vmul.f32 %v1385, %v1417
      %v1426 = vmul.f32 %v1386, %v1422
      %v1427 = vmul.f32 %v1387, %v1422
      %v1428 = vmul.f32 %v1410, %v927
      %v1429 = vmul.f32 %v1402, %v931
      %v1430 = vmul.f32 %v1411, %v927
      %v1431 = vmul.f32 %v1403, %v931
      %1432 = vset.pattern.permute.xlu0 0
      %1433 = vperm.xlu0 %1432, %v1388
      %v1434 = vpop.permute.xlu0 %1433
      %1436 = vset.pattern.permute.xlu0 0
      %1437 = vperm.xlu0 %1436, %v1389
      %v1438 = vpop.permute.xlu0 %1437
      %v1440 = vmul.f32 %v1428, %v1434
      %v1441 = vmul.f32 %v1429, %v1434
      %v1442 = vmul.f32 %v1430, %v1438
      %v1443 = vmul.f32 %v1431, %v1438
      %v1444 = vadd.f32 %v1424, %v1440
      %v1445 = vadd.f32 %v1425, %v1441
      %v1446 = vadd.f32 %v1426, %v1442
      %v1447 = vadd.f32 %v1427, %v1443
      %1448 = vset.pattern.permute.xlu0 1
      %1449 = vperm.xlu0 %1448, %v1388
      %v1450 = vpop.permute.xlu0 %1449
      %1452 = vset.pattern.permute.xlu0 1
      %1453 = vperm.xlu0 %1452, %v1389
      %v1454 = vpop.permute.xlu0 %1453
      %v1456 = vmul.f32 %v1410, %v1450
      %v1457 = vmul.f32 %v1402, %v1450
      %v1458 = vmul.f32 %v1412, %v1450
      %v1459 = vmul.f32 %v1411, %v1454
      %v1460 = vmul.f32 %v1403, %v1454
      %v1461 = vmul.f32 %v1413, %v1454
      %1468 = vrot.lane.b32.xlu0 %v1456, 127
      %v1469 = vpop.permute.xlu0 %1468
      %1470 = vrot.lane.b32.xlu0 %v1457, 127
      %v1471 = vpop.permute.xlu0 %1470
      %1472 = vrot.lane.b32.xlu0 %v1458, 127
      %v1473 = vpop.permute.xlu0 %1472
      %1474 = vrot.lane.b32.xlu0 %v1459, 127
      %v1475 = vpop.permute.xlu0 %1474
      %1476 = vrot.lane.b32.xlu0 %v1460, 127
      %v1477 = vpop.permute.xlu0 %1476
      %1478 = vrot.lane.b32.xlu0 %v1461, 127
      %v1479 = vpop.permute.xlu0 %1478
      %v1480 = vsel %vm986, %v1469, %v1471
      %v1481 = vsel %vm986, %v1471, %v1473
      %v1482 = vsel %vm986, %v1475, %v1477
      %v1483 = vsel %vm986, %v1477, %v1479
      %v1488 = vadd.f32 %v1444, %v1480
      %v1489 = vadd.f32 %v1445, %v1481
      %v1490 = vadd.f32 %v1446, %v1482
      %v1491 = vadd.f32 %v1447, %v1483
      %v1492 = vmul.f32 %v1410, %v1009
      %v1493 = vmul.f32 %v1402, %v1013
      %v1494 = vmul.f32 %v1412, %v1011
      %v1495 = vmul.f32 %v1411, %v1009
      %v1496 = vmul.f32 %v1403, %v1013
      %v1497 = vmul.f32 %v1413, %v1011
      %1498 = vset.pattern.permute.xlu0 2
      %1499 = vperm.xlu0 %1498, %v1388
      %v1500 = vpop.permute.xlu0 %1499
      %1502 = vset.pattern.permute.xlu0 2
      %1503 = vperm.xlu0 %1502, %v1389
      %v1504 = vpop.permute.xlu0 %1503
      %v1506 = vmul.f32 %v1492, %v1500
      %v1507 = vmul.f32 %v1493, %v1500
      %v1508 = vmul.f32 %v1494, %v1500
      %v1509 = vmul.f32 %v1495, %v1504
      %v1510 = vmul.f32 %v1496, %v1504
      %v1511 = vmul.f32 %v1497, %v1504
      %1518 = vrot.lane.b32.xlu0 %v1506, 126
      %v1519 = vpop.permute.xlu0 %1518
      %1520 = vrot.lane.b32.xlu0 %v1507, 126
      %v1521 = vpop.permute.xlu0 %1520
      %1522 = vrot.lane.b32.xlu0 %v1508, 126
      %v1523 = vpop.permute.xlu0 %1522
      %1524 = vrot.lane.b32.xlu0 %v1509, 126
      %v1525 = vpop.permute.xlu0 %1524
      %1526 = vrot.lane.b32.xlu0 %v1510, 126
      %v1527 = vpop.permute.xlu0 %1526
      %1528 = vrot.lane.b32.xlu0 %v1511, 126
      %v1529 = vpop.permute.xlu0 %1528
      %v1530 = vsel %vm1055, %v1519, %v1521
      %v1531 = vsel %vm1055, %v1521, %v1523
      %v1532 = vsel %vm1055, %v1525, %v1527
      %v1533 = vsel %vm1055, %v1527, %v1529
      %v1538 = vadd.f32 %v1488, %v1530
      %v1539 = vadd.f32 %v1489, %v1531
      %v1540 = vadd.f32 %v1490, %v1532
      %v1541 = vadd.f32 %v1491, %v1533
      %v1542 = vmul.f32 %v1410, %v1069
      %v1543 = vmul.f32 %v1402, %v1072
      %v1544 = vmul.f32 %v1412, %v1071
      %v1545 = vmul.f32 %v1411, %v1069
      %v1546 = vmul.f32 %v1403, %v1072
      %v1547 = vmul.f32 %v1413, %v1071
      %1548 = vset.pattern.permute.xlu0 3
      %1549 = vperm.xlu0 %1548, %v1388
      %v1550 = vpop.permute.xlu0 %1549
      %1552 = vset.pattern.permute.xlu0 3
      %1553 = vperm.xlu0 %1552, %v1389
      %v1554 = vpop.permute.xlu0 %1553
      %v1556 = vmul.f32 %v1542, %v1550
      %v1557 = vmul.f32 %v1543, %v1550
      %v1558 = vmul.f32 %v1544, %v1550
      %v1559 = vmul.f32 %v1545, %v1554
      %v1560 = vmul.f32 %v1546, %v1554
      %v1561 = vmul.f32 %v1547, %v1554
      %1568 = vrot.lane.b32.xlu0 %v1556, 112
      %v1569 = vpop.permute.xlu0 %1568
      %1570 = vrot.lane.b32.xlu0 %v1557, 112
      %v1571 = vpop.permute.xlu0 %1570
      %1572 = vrot.lane.b32.xlu0 %v1558, 112
      %v1573 = vpop.permute.xlu0 %1572
      %1574 = vrot.lane.b32.xlu0 %v1559, 112
      %v1575 = vpop.permute.xlu0 %1574
      %1576 = vrot.lane.b32.xlu0 %v1560, 112
      %v1577 = vpop.permute.xlu0 %1576
      %1578 = vrot.lane.b32.xlu0 %v1561, 112
      %v1579 = vpop.permute.xlu0 %1578
      %v1580 = vsel %vm1114, %v1569, %v1571
      %v1581 = vsel %vm1114, %v1571, %v1573
      %v1582 = vsel %vm1114, %v1575, %v1577
      %v1583 = vsel %vm1114, %v1577, %v1579
      %v1588 = vadd.f32 %v1538, %v1580
      %v1589 = vadd.f32 %v1539, %v1581
      %v1590 = vadd.f32 %v1540, %v1582
      %v1591 = vadd.f32 %v1541, %v1583
      %v1592 = vmul.f32 %v1410, %v1128
      %v1593 = vmul.f32 %v1402, %v1132
      %v1594 = vmul.f32 %v1412, %v1130
      %v1595 = vmul.f32 %v1411, %v1128
      %v1596 = vmul.f32 %v1403, %v1132
      %v1597 = vmul.f32 %v1413, %v1130
      %1598 = vset.pattern.permute.xlu0 5
      %1599 = vperm.xlu0 %1598, %v1388
      %v1600 = vpop.permute.xlu0 %1599
      %1602 = vset.pattern.permute.xlu0 5
      %1603 = vperm.xlu0 %1602, %v1389
      %v1604 = vpop.permute.xlu0 %1603
      %v1606 = vmul.f32 %v1592, %v1600
      %v1607 = vmul.f32 %v1593, %v1600
      %v1608 = vmul.f32 %v1594, %v1600
      %v1609 = vmul.f32 %v1595, %v1604
      %v1610 = vmul.f32 %v1596, %v1604
      %v1611 = vmul.f32 %v1597, %v1604
      %1618 = vrot.lane.b32.xlu0 %v1606, 110
      %v1619 = vpop.permute.xlu0 %1618
      %1620 = vrot.lane.b32.xlu0 %v1607, 110
      %v1621 = vpop.permute.xlu0 %1620
      %1622 = vrot.lane.b32.xlu0 %v1608, 110
      %v1623 = vpop.permute.xlu0 %1622
      %1624 = vrot.lane.b32.xlu0 %v1609, 110
      %v1625 = vpop.permute.xlu0 %1624
      %1626 = vrot.lane.b32.xlu0 %v1610, 110
      %v1627 = vpop.permute.xlu0 %1626
      %1628 = vrot.lane.b32.xlu0 %v1611, 110
      %v1629 = vpop.permute.xlu0 %1628
      %v1630 = vsel %vm1174, %v1619, %v1621
      %v1631 = vsel %vm1174, %v1621, %v1623
      %v1632 = vsel %vm1174, %v1625, %v1627
      %v1633 = vsel %vm1174, %v1627, %v1629
      %v1638 = vadd.f32 %v1588, %v1630
      %v1639 = vadd.f32 %v1589, %v1631
      %v1640 = vadd.f32 %v1590, %v1632
      %v1641 = vadd.f32 %v1591, %v1633
      %v1642 = vmul.f32 %v1410, %v1188
      %v1643 = vmul.f32 %v1402, %v1192
      %v1644 = vmul.f32 %v1412, %v1190
      %v1645 = vmul.f32 %v1411, %v1188
      %v1646 = vmul.f32 %v1403, %v1192
      %v1647 = vmul.f32 %v1413, %v1190
      %1648 = vset.pattern.permute.xlu0 6
      %1649 = vperm.xlu0 %1648, %v1388
      %v1650 = vpop.permute.xlu0 %1649
      %1652 = vset.pattern.permute.xlu0 6
      %1653 = vperm.xlu0 %1652, %v1389
      %v1654 = vpop.permute.xlu0 %1653
      %v1656 = vmul.f32 %v1642, %v1650
      %v1657 = vmul.f32 %v1643, %v1650
      %v1658 = vmul.f32 %v1644, %v1650
      %v1659 = vmul.f32 %v1645, %v1654
      %v1660 = vmul.f32 %v1646, %v1654
      %v1661 = vmul.f32 %v1647, %v1654
      %1668 = vrot.lane.b32.xlu0 %v1656, 96
      %v1669 = vpop.permute.xlu0 %1668
      %1670 = vrot.lane.b32.xlu0 %v1657, 96
      %v1671 = vpop.permute.xlu0 %1670
      %1672 = vrot.lane.b32.xlu0 %v1658, 96
      %v1673 = vpop.permute.xlu0 %1672
      %1674 = vrot.lane.b32.xlu0 %v1659, 96
      %v1675 = vpop.permute.xlu0 %1674
      %1676 = vrot.lane.b32.xlu0 %v1660, 96
      %v1677 = vpop.permute.xlu0 %1676
      %1678 = vrot.lane.b32.xlu0 %v1661, 96
      %v1679 = vpop.permute.xlu0 %1678
      %v1680 = vsel %vm1234, %v1669, %v1671
      %v1681 = vsel %vm1234, %v1671, %v1673
      %v1682 = vsel %vm1234, %v1675, %v1677
      %v1683 = vsel %vm1234, %v1677, %v1679
      %v1688 = vadd.f32 %v1638, %v1680
      %v1689 = vadd.f32 %v1639, %v1681
      %v1690 = vadd.f32 %v1640, %v1682
      %v1691 = vadd.f32 %v1641, %v1683
      %1692 = vset.pattern.permute.xlu0 7
      %1693 = vperm.xlu0 %1692, %v1388
      %v1694 = vpop.permute.xlu0 %1693
      %1696 = vset.pattern.permute.xlu0 7
      %1697 = vperm.xlu0 %1696, %v1389
      %v1698 = vpop.permute.xlu0 %1697
      %v1700 = vmul.f32 %v1410, %v1694
      %v1701 = vmul.f32 %v1402, %v1694
      %v1702 = vmul.f32 %v1412, %v1694
      %v1703 = vmul.f32 %v1411, %v1698
      %v1704 = vmul.f32 %v1403, %v1698
      %v1705 = vmul.f32 %v1413, %v1698
      %1712 = vrot.lane.b32.xlu0 %v1700, 95
      %v1713 = vpop.permute.xlu0 %1712
      %1714 = vrot.lane.b32.xlu0 %v1701, 95
      %v1715 = vpop.permute.xlu0 %1714
      %1716 = vrot.lane.b32.xlu0 %v1702, 95
      %v1717 = vpop.permute.xlu0 %1716
      %1718 = vrot.lane.b32.xlu0 %v1703, 95
      %v1719 = vpop.permute.xlu0 %1718
      %1720 = vrot.lane.b32.xlu0 %v1704, 95
      %v1721 = vpop.permute.xlu0 %1720
      %1722 = vrot.lane.b32.xlu0 %v1705, 95
      %v1723 = vpop.permute.xlu0 %1722
      %v1724 = vsel %vm1279, %v1713, %v1715
      %v1725 = vsel %vm1279, %v1715, %v1717
      %v1726 = vsel %vm1279, %v1719, %v1721
      %v1727 = vsel %vm1279, %v1721, %v1723
      %v1732 = vadd.f32 %v1688, %v1724
      %v1733 = vadd.f32 %v1689, %v1725
      %v1734 = vadd.f32 %v1690, %v1726
      %v1735 = vadd.f32 %v1691, %v1727
      %v1736 = vmul.f32 %v1410, %v1293
      %v1737 = vmul.f32 %v1402, %v1297
      %v1738 = vmul.f32 %v1412, %v1295
      %v1739 = vmul.f32 %v1411, %v1293
      %v1740 = vmul.f32 %v1403, %v1297
      %v1741 = vmul.f32 %v1413, %v1295
      %1742 = vset.pattern.permute.xlu0 8
      %1743 = vperm.xlu0 %1742, %v1388
      %v1744 = vpop.permute.xlu0 %1743
      %1746 = vset.pattern.permute.xlu0 8
      %1747 = vperm.xlu0 %1746, %v1389
      %v1748 = vpop.permute.xlu0 %1747
      %v1750 = vmul.f32 %v1736, %v1744
      %v1751 = vmul.f32 %v1737, %v1744
      %v1752 = vmul.f32 %v1738, %v1744
      %v1753 = vmul.f32 %v1739, %v1748
      %v1754 = vmul.f32 %v1740, %v1748
      %v1755 = vmul.f32 %v1741, %v1748
      %1762 = vrot.lane.b32.xlu0 %v1750, 94
      %v1763 = vpop.permute.xlu0 %1762
      %1764 = vrot.lane.b32.xlu0 %v1751, 94
      %v1765 = vpop.permute.xlu0 %1764
      %1766 = vrot.lane.b32.xlu0 %v1752, 94
      %v1767 = vpop.permute.xlu0 %1766
      %1768 = vrot.lane.b32.xlu0 %v1753, 94
      %v1769 = vpop.permute.xlu0 %1768
      %1770 = vrot.lane.b32.xlu0 %v1754, 94
      %v1771 = vpop.permute.xlu0 %1770
      %1772 = vrot.lane.b32.xlu0 %v1755, 94
      %v1773 = vpop.permute.xlu0 %1772
      %v1774 = vsel %vm1339, %v1763, %v1765
      %v1775 = vsel %vm1339, %v1765, %v1767
      %v1776 = vsel %vm1339, %v1769, %v1771
      %v1777 = vsel %vm1339, %v1771, %v1773
      %v1782 = vadd.f32 %v1732, %v1774
      %v1783 = vadd.f32 %v1733, %v1775
      %v1784 = vadd.f32 %v1734, %v1776
      %v1785 = vadd.f32 %v1735, %v1777
      %v1786 = vadd.f32 %v496, %v874
      %v1787 = vadd.f32 %v497, %v876
      %v1788 = vadd.f32 %v498, %v878
      %v1789 = vadd.f32 %v499, %v880
      %v1790 = vadd.f32 %v1786, %v1782
      %v1791 = vadd.f32 %v1787, %v1783
      %v1792 = vadd.f32 %v1788, %v1784
      %v1793 = vadd.f32 %v1789, %v1785
      %v1794 = vadd.f32 %v1790, %v1792
      %v1795 = vrot.slane %v1794, 4
      %v1796 = vadd.f32 %v1794, %v1795
      %v1797 = vrot.slane %v1796, 2
      %v1798 = vadd.f32 %v1796, %v1797
      %v1799 = vrot.slane %v1798, 1
      %v1800 = vadd.f32 %v1798, %v1799
      %v1801 = vadd.f32 %v1791, %v1793
      %v1802 = vrot.slane %v1801, 4
      %v1803 = vadd.f32 %v1801, %v1802
      %v1804 = vrot.slane %v1803, 2
      %v1805 = vadd.f32 %v1803, %v1804
      %v1806 = vrot.slane %v1805, 1
      %v1807 = vadd.f32 %v1805, %v1806
      %v1808 = vrcp.pop 16.0
      %v1809 = vmul.f32 %v1800, %v1808
      %v1810 = vmul.f32 %v1807, %v1808
      %v1811 = vsub.f32 %v1790, %v1809
      %v1812 = vsub.f32 %v1791, %v1810
      %v1813 = vsub.f32 %v1792, %v1809
      %v1814 = vsub.f32 %v1793, %v1810
      %v1815 = vmul.f32 %v1811, %v1811
      %v1816 = vmul.f32 %v1812, %v1812
      %v1817 = vmul.f32 %v1813, %v1813
      %v1818 = vmul.f32 %v1814, %v1814
      %v1819 = vadd.f32 %v1815, %v1817
      %v1820 = vrot.slane %v1819, 4
      %v1821 = vadd.f32 %v1819, %v1820
      %v1822 = vrot.slane %v1821, 2
      %v1823 = vadd.f32 %v1821, %v1822
      %v1824 = vrot.slane %v1823, 1
      %v1825 = vadd.f32 %v1823, %v1824
      %v1826 = vadd.f32 %v1816, %v1818
      %v1827 = vrot.slane %v1826, 4
      %v1828 = vadd.f32 %v1826, %v1827
      %v1829 = vrot.slane %v1828, 2
      %v1830 = vadd.f32 %v1828, %v1829
      %v1831 = vrot.slane %v1830, 1
      %v1832 = vadd.f32 %v1830, %v1831
      %v1833 = vmul.f32 %v1825, %v1808
      %v1834 = vmul.f32 %v1832, %v1808
      %v1835 = vadd.f32 %v1833, 1e-05
      %v1836 = vadd.f32 %v1834, 1e-05
      %v1837 = vrsqrt.pop %v1835
      %v1838 = vrsqrt.pop %v1836
      %v1839 = vmul.f32 %v1811, %v1837
      %v1840 = vmul.f32 %v1812, %v1838
      %v1841 = vmul.f32 %v1813, %v1837
      %v1842 = vmul.f32 %v1814, %v1838
      %v1843 = vld [vmem:[%s10] sm:$0xff]
      %v1844 = vld [vmem:[%s10 + $0x8] sm:$0xff]
      %1846 = vset.pattern.permute.xlu0 0
      %1847 = vperm.xlu0 %1846, %v1843
      %v1848 = vpop.permute.xlu0 %1847
      %1851 = vset.pattern.permute.xlu0 0
      %1852 = vperm.xlu0 %1851, %v1844
      %v1853 = vpop.permute.xlu0 %1852
      %v1855 = vmul.f32 %v1839, %v1848
      %v1856 = vmul.f32 %v1840, %v1848
      %v1857 = vmul.f32 %v1841, %v1853
      %v1858 = vmul.f32 %v1842, %v1853
      %v1859 = vld [vmem:[%s11] sm:$0xff]
      %v1860 = vld [vmem:[%s11 + $0x8] sm:$0xff]
      %1862 = vset.pattern.permute.xlu0 0
      %1863 = vperm.xlu0 %1862, %v1859
      %v1864 = vpop.permute.xlu0 %1863
      %1867 = vset.pattern.permute.xlu0 0
      %1868 = vperm.xlu0 %1867, %v1860
      %v1869 = vpop.permute.xlu0 %1868
      %v1871 = vadd.f32 %v1855, %v1864
      %v1872 = vadd.f32 %v1856, %v1864
      %v1873 = vadd.f32 %v1857, %v1869
      %v1874 = vadd.f32 %v1858, %v1869
      %v1875 = vld [vmem:[%s12] sm:$0xf]
      %v1876 = vld [vmem:[%s12 + $0x4] sm:$0xf]
      %v1877 = vld [vmem:[%s12 + $0x8] sm:$0xf]
      %v1878 = vld [vmem:[%s12 + $0xc] sm:$0xf]
      %v1879 = vld [vmem:[%s12 + $0x10] sm:$0xf]
      %v1880 = vld [vmem:[%s12 + $0x14] sm:$0xf]
      %v1881 = vld [vmem:[%s12 + $0x18] sm:$0xf]
      %v1882 = vld [vmem:[%s12 + $0x1c] sm:$0xf]
      %v1883 = vpack.c.bf16 %v1873, %v1871
      %v1884 = vpack.c.bf16 %v1874, %v1872
      %v1893 = vunpack.c.l.b16 %v1875
      %v1894 = vunpack.c.l.b16 %v1876
      %v1895 = vunpack.c.l.b16 %v1877
      %v1896 = vunpack.c.l.b16 %v1878
      %v1897 = vunpack.c.l.b16 %v1879
      %v1898 = vunpack.c.l.b16 %v1880
      %v1899 = vunpack.c.l.b16 %v1881
      %v1900 = vunpack.c.l.b16 %v1882
      %v1901 = vpack.c.b16 %v1894, %v1893
      %v1902 = vpack.c.b16 %v1896, %v1895
      %v1903 = vpack.c.b16 %v1898, %v1897
      %v1904 = vpack.c.b16 %v1900, %v1899
      %v1906 = vsel %vm525, %v1901, 0
      %v1909 = vsel %vm525, %v1902, 0
      %v1912 = vsel %vm525, %v1903, 0
      %v1915 = vsel %vm525, %v1904, 0
      %1917 = vmatprep.subr.bf16.mxu0 %v1884
      %1918 = vmatpush1.bf16.msra.mxu0 %v1883
      %1919 = vmatprep.subr.bf16.mxu0 0
      %1920 = vmatpush1.bf16.msra.mxu0 0
      %1921 = vmatprep.subr.bf16.mxu0 0
      %1922 = vmatpush1.bf16.msra.mxu0 0
      %1923 = vmatprep.subr.bf16.mxu0 0
      %1924 = vmatpush1.bf16.msra.mxu0 0
      %1925 = vmatprep.subr.bf16.mxu0 0
      %1926 = vmatpush1.bf16.msra.mxu0 0
      %1927 = vmatprep.subr.bf16.mxu0 0
      %1928 = vmatpush1.bf16.msra.mxu0 0
      %1929 = vmatprep.subr.bf16.mxu0 0
      %1930 = vmatpush1.bf16.msra.mxu0 0
      %1931 = vmatprep.subr.bf16.mxu0 0
      %1932 = vmatpush1.bf16.msra.mxu0 0
      %1933 = vmatprep.subr.bf16.mxu0 0
      %1934 = vmatpush1.bf16.msra.mxu0 0
      %1935 = vmatprep.subr.bf16.mxu0 0
      %1936 = vmatpush1.bf16.msra.mxu0 0
      %1937 = vmatprep.subr.bf16.mxu0 0
      %1938 = vmatpush1.bf16.msra.mxu0 0
      %1939 = vmatprep.subr.bf16.mxu0 0
      %1940 = vmatpush1.bf16.msra.mxu0 0
      %1941 = vmatprep.subr.bf16.mxu0 0
      %1942 = vmatpush1.bf16.msra.mxu0 0
      %1943 = vmatprep.subr.bf16.mxu0 0
      %1944 = vmatpush1.bf16.msra.mxu0 0
      %1945 = vmatprep.subr.bf16.mxu0 0
      %1946 = vmatpush1.bf16.msra.mxu0 0
      %1947 = vmatprep.subr.bf16.mxu0 0
      %1948 = vmatpush1.bf16.msra.mxu0 0
      %1949 = vmatprep.mubr.bf16.mxu0 0
      %1950 = vmatmul.mubr.bf16.gmra.mrb[0].mxu0 %v1906
      %v1951 = vpop.f32.mrb[0].mxu0
      %v1952 = vadd.f32 0.0, %v1951
      %v1953 = vpop.f32.mrb[0].mxu0
      %v1954 = vadd.f32 0.0, %v1953
      %v1955 = vpop.f32.mrb[0].mxu0
      %v1956 = vadd.f32 0.0, %v1955
      %v1957 = vpop.f32.mrb[0].mxu0
      %v1958 = vadd.f32 0.0, %v1957
      %1959 = vmatprep.mubr.bf16.mxu0 0
      %1960 = vmatmul.mubr.bf16.gmra.mrb[0].mxu0 %v1909
      %v1961 = vpop.f32.mrb[0].mxu0
      %v1962 = vadd.f32 0.0, %v1961
      %v1963 = vpop.f32.mrb[0].mxu0
      %v1964 = vadd.f32 0.0, %v1963
      %v1965 = vpop.f32.mrb[0].mxu0
      %v1966 = vadd.f32 0.0, %v1965
      %v1967 = vpop.f32.mrb[0].mxu0
      %v1968 = vadd.f32 0.0, %v1967
      %1969 = vmatprep.mubr.bf16.mxu0 0
      %1970 = vmatmul.mubr.bf16.gmra.mrb[0].mxu0 %v1912
      %v1971 = vpop.f32.mrb[0].mxu0
      %v1972 = vadd.f32 0.0, %v1971
      %v1973 = vpop.f32.mrb[0].mxu0
      %v1974 = vadd.f32 0.0, %v1973
      %v1975 = vpop.f32.mrb[0].mxu0
      %v1976 = vadd.f32 0.0, %v1975
      %v1977 = vpop.f32.mrb[0].mxu0
      %v1978 = vadd.f32 0.0, %v1977
      %1979 = vmatprep.mubr.bf16.mxu0 0
      %1980 = vmatmul.mubr.bf16.gmra.mrb[0].mxu0 %v1915
      %v1981 = vpop.f32.mrb[0].mxu0
      %v1982 = vadd.f32 0.0, %v1981
      %v1983 = vpop.f32.mrb[0].mxu0
      %v1984 = vadd.f32 0.0, %v1983
      %v1985 = vpop.f32.mrb[0].mxu0
      %v1986 = vadd.f32 0.0, %v1985
      %v1987 = vpop.f32.mrb[0].mxu0
      %v1988 = vadd.f32 0.0, %v1987
      %1989 = vdwg.mxu0
      %v1990 = vmul.f32 %v1952, 0.5
      %v1991 = vmul.f32 %v1954, 0.5
      %v1992 = vmul.f32 %v1956, 0.5
      %v1993 = vmul.f32 %v1958, 0.5
      %v1994 = vmul.f32 %v1962, 0.5
      %v1995 = vmul.f32 %v1964, 0.5
      %v1996 = vmul.f32 %v1966, 0.5
      %v1997 = vmul.f32 %v1968, 0.5
      %v1998 = vmul.f32 %v1972, 0.5
      %v1999 = vmul.f32 %v1974, 0.5
      %v2000 = vmul.f32 %v1976, 0.5
      %v2001 = vmul.f32 %v1978, 0.5
      %v2002 = vmul.f32 %v1982, 0.5
      %v2003 = vmul.f32 %v1984, 0.5
      %v2004 = vmul.f32 %v1986, 0.5
      %v2005 = vmul.f32 %v1988, 0.5
      %v2006 = vmul.f32 %v1952, 0.044715
      %v2007 = vmul.f32 %v1954, 0.044715
      %v2008 = vmul.f32 %v1956, 0.044715
      %v2009 = vmul.f32 %v1958, 0.044715
      %v2010 = vmul.f32 %v1962, 0.044715
      %v2011 = vmul.f32 %v1964, 0.044715
      %v2012 = vmul.f32 %v1966, 0.044715
      %v2013 = vmul.f32 %v1968, 0.044715
      %v2014 = vmul.f32 %v1972, 0.044715
      %v2015 = vmul.f32 %v1974, 0.044715
      %v2016 = vmul.f32 %v1976, 0.044715
      %v2017 = vmul.f32 %v1978, 0.044715
      %v2018 = vmul.f32 %v1982, 0.044715
      %v2019 = vmul.f32 %v1984, 0.044715
      %v2020 = vmul.f32 %v1986, 0.044715
      %v2021 = vmul.f32 %v1988, 0.044715
      %v2022 = vmul.f32 %v2006, %v1952
      %v2023 = vmul.f32 %v2007, %v1954
      %v2024 = vmul.f32 %v2008, %v1956
      %v2025 = vmul.f32 %v2009, %v1958
      %v2026 = vmul.f32 %v2010, %v1962
      %v2027 = vmul.f32 %v2011, %v1964
      %v2028 = vmul.f32 %v2012, %v1966
      %v2029 = vmul.f32 %v2013, %v1968
      %v2030 = vmul.f32 %v2014, %v1972
      %v2031 = vmul.f32 %v2015, %v1974
      %v2032 = vmul.f32 %v2016, %v1976
      %v2033 = vmul.f32 %v2017, %v1978
      %v2034 = vmul.f32 %v2018, %v1982
      %v2035 = vmul.f32 %v2019, %v1984
      %v2036 = vmul.f32 %v2020, %v1986
      %v2037 = vmul.f32 %v2021, %v1988
      %v2038 = vmul.f32 %v2022, %v1952
      %v2039 = vmul.f32 %v2023, %v1954
      %v2040 = vmul.f32 %v2024, %v1956
      %v2041 = vmul.f32 %v2025, %v1958
      %v2042 = vmul.f32 %v2026, %v1962
      %v2043 = vmul.f32 %v2027, %v1964
      %v2044 = vmul.f32 %v2028, %v1966
      %v2045 = vmul.f32 %v2029, %v1968
      %v2046 = vmul.f32 %v2030, %v1972
      %v2047 = vmul.f32 %v2031, %v1974
      %v2048 = vmul.f32 %v2032, %v1976
      %v2049 = vmul.f32 %v2033, %v1978
      %v2050 = vmul.f32 %v2034, %v1982
      %v2051 = vmul.f32 %v2035, %v1984
      %v2052 = vmul.f32 %v2036, %v1986
      %v2053 = vmul.f32 %v2037, %v1988
      %v2054 = vadd.f32 %v1952, %v2038
      %v2055 = vadd.f32 %v1954, %v2039
      %v2056 = vadd.f32 %v1956, %v2040
      %v2057 = vadd.f32 %v1958, %v2041
      %v2058 = vadd.f32 %v1962, %v2042
      %v2059 = vadd.f32 %v1964, %v2043
      %v2060 = vadd.f32 %v1966, %v2044
      %v2061 = vadd.f32 %v1968, %v2045
      %v2062 = vadd.f32 %v1972, %v2046
      %v2063 = vadd.f32 %v1974, %v2047
      %v2064 = vadd.f32 %v1976, %v2048
      %v2065 = vadd.f32 %v1978, %v2049
      %v2066 = vadd.f32 %v1982, %v2050
      %v2067 = vadd.f32 %v1984, %v2051
      %v2068 = vadd.f32 %v1986, %v2052
      %v2069 = vadd.f32 %v1988, %v2053
      %v2070 = vmul.f32 %v2054, 0.7978846
      %v2071 = vmul.f32 %v2055, 0.7978846
      %v2072 = vmul.f32 %v2056, 0.7978846
      %v2073 = vmul.f32 %v2057, 0.7978846
      %v2074 = vmul.f32 %v2058, 0.7978846
      %v2075 = vmul.f32 %v2059, 0.7978846
      %v2076 = vmul.f32 %v2060, 0.7978846
      %v2077 = vmul.f32 %v2061, 0.7978846
      %v2078 = vmul.f32 %v2062, 0.7978846
      %v2079 = vmul.f32 %v2063, 0.7978846
      %v2080 = vmul.f32 %v2064, 0.7978846
      %v2081 = vmul.f32 %v2065, 0.7978846
      %v2082 = vmul.f32 %v2066, 0.7978846
      %v2083 = vmul.f32 %v2067, 0.7978846
      %v2084 = vmul.f32 %v2068, 0.7978846
      %v2085 = vmul.f32 %v2069, 0.7978846
      %v2086 = vtanh.pop %v2070
      %v2087 = vtanh.pop %v2071
      %v2088 = vtanh.pop %v2072
      %v2089 = vtanh.pop %v2073
      %v2090 = vtanh.pop %v2074
      %v2091 = vtanh.pop %v2075
      %v2092 = vtanh.pop %v2076
      %v2093 = vtanh.pop %v2077
      %v2094 = vtanh.pop %v2078
      %v2095 = vtanh.pop %v2079
      %v2096 = vtanh.pop %v2080
      %v2097 = vtanh.pop %v2081
      %v2098 = vtanh.pop %v2082
      %v2099 = vtanh.pop %v2083
      %v2100 = vtanh.pop %v2084
      %v2101 = vtanh.pop %v2085
      %v2102 = vadd.f32 %v2086, 1.0
      %v2103 = vadd.f32 %v2087, 1.0
      %v2104 = vadd.f32 %v2088, 1.0
      %v2105 = vadd.f32 %v2089, 1.0
      %v2106 = vadd.f32 %v2090, 1.0
      %v2107 = vadd.f32 %v2091, 1.0
      %v2108 = vadd.f32 %v2092, 1.0
      %v2109 = vadd.f32 %v2093, 1.0
      %v2110 = vadd.f32 %v2094, 1.0
      %v2111 = vadd.f32 %v2095, 1.0
      %v2112 = vadd.f32 %v2096, 1.0
      %v2113 = vadd.f32 %v2097, 1.0
      %v2114 = vadd.f32 %v2098, 1.0
      %v2115 = vadd.f32 %v2099, 1.0
      %v2116 = vadd.f32 %v2100, 1.0
      %v2117 = vadd.f32 %v2101, 1.0
      %v2118 = vmul.f32 %v1990, %v2102
      %v2119 = vmul.f32 %v1991, %v2103
      %v2120 = vmul.f32 %v1992, %v2104
      %v2121 = vmul.f32 %v1993, %v2105
      %v2122 = vmul.f32 %v1994, %v2106
      %v2123 = vmul.f32 %v1995, %v2107
      %v2124 = vmul.f32 %v1996, %v2108
      %v2125 = vmul.f32 %v1997, %v2109
      %v2126 = vmul.f32 %v1998, %v2110
      %v2127 = vmul.f32 %v1999, %v2111
      %v2128 = vmul.f32 %v2000, %v2112
      %v2129 = vmul.f32 %v2001, %v2113
      %v2130 = vmul.f32 %v2002, %v2114
      %v2131 = vmul.f32 %v2003, %v2115
      %v2132 = vmul.f32 %v2004, %v2116
      %v2133 = vmul.f32 %v2005, %v2117
      %v2134 = vld [vmem:[%s13] sm:$0xff]
      %v2135 = vld [vmem:[%s13 + $0x8] sm:$0xff]
      %v2136 = vld [vmem:[%s13 + $0x10] sm:$0xff]
      %v2137 = vld [vmem:[%s13 + $0x18] sm:$0xff]
      %v2138 = vld [vmem:[%s13 + $0x20] sm:$0xff]
      %v2139 = vld [vmem:[%s13 + $0x28] sm:$0xff]
      %v2140 = vld [vmem:[%s13 + $0x30] sm:$0xff]
      %v2141 = vld [vmem:[%s13 + $0x38] sm:$0xff]
      %2158 = vrot.lane.b32.xlu0 %v2118, 17
      %v2159 = vpop.permute.xlu0 %2158
      %2160 = vrot.lane.b32.xlu0 %v2119, 17
      %v2161 = vpop.permute.xlu0 %2160
      %2162 = vrot.lane.b32.xlu0 %v2120, 17
      %v2163 = vpop.permute.xlu0 %2162
      %2164 = vrot.lane.b32.xlu0 %v2121, 17
      %v2165 = vpop.permute.xlu0 %2164
      %2166 = vrot.lane.b32.xlu0 %v2122, 17
      %v2167 = vpop.permute.xlu0 %2166
      %2168 = vrot.lane.b32.xlu0 %v2123, 17
      %v2169 = vpop.permute.xlu0 %2168
      %2170 = vrot.lane.b32.xlu0 %v2124, 17
      %v2171 = vpop.permute.xlu0 %2170
      %2172 = vrot.lane.b32.xlu0 %v2125, 17
      %v2173 = vpop.permute.xlu0 %2172
      %2174 = vrot.lane.b32.xlu0 %v2126, 17
      %v2175 = vpop.permute.xlu0 %2174
      %2176 = vrot.lane.b32.xlu0 %v2127, 17
      %v2177 = vpop.permute.xlu0 %2176
      %2178 = vrot.lane.b32.xlu0 %v2128, 17
      %v2179 = vpop.permute.xlu0 %2178
      %2180 = vrot.lane.b32.xlu0 %v2129, 17
      %v2181 = vpop.permute.xlu0 %2180
      %2182 = vrot.lane.b32.xlu0 %v2130, 17
      %v2183 = vpop.permute.xlu0 %2182
      %2184 = vrot.lane.b32.xlu0 %v2131, 17
      %v2185 = vpop.permute.xlu0 %2184
      %2186 = vrot.lane.b32.xlu0 %v2132, 17
      %v2187 = vpop.permute.xlu0 %2186
      %2188 = vrot.lane.b32.xlu0 %v2133, 17
      %v2189 = vpop.permute.xlu0 %2188
      %v2190 = vsel %vm896, %v2159, %v2161
      %v2191 = vsel %vm896, %v2163, %v2165
      %v2192 = vsel %vm896, %v2167, %v2169
      %v2193 = vsel %vm896, %v2171, %v2173
      %v2194 = vsel %vm896, %v2175, %v2177
      %v2195 = vsel %vm896, %v2179, %v2181
      %v2196 = vsel %vm896, %v2183, %v2185
      %v2197 = vsel %vm896, %v2187, %v2189
      %v2222 = vsel %vm896, 0.0, %v2159
      %v2223 = vsel %vm896, 0.0, %v2163
      %v2224 = vsel %vm896, 0.0, %v2167
      %v2225 = vsel %vm896, 0.0, %v2171
      %v2226 = vsel %vm896, 0.0, %v2175
      %v2227 = vsel %vm896, 0.0, %v2179
      %v2228 = vsel %vm896, 0.0, %v2183
      %v2229 = vsel %vm896, 0.0, %v2187
      %v2230 = vsel %vm896, %v2161, 0.0
      %v2231 = vsel %vm896, %v2165, 0.0
      %v2232 = vsel %vm896, %v2169, 0.0
      %v2233 = vsel %vm896, %v2173, 0.0
      %v2234 = vsel %vm896, %v2177, 0.0
      %v2235 = vsel %vm896, %v2181, 0.0
      %v2236 = vsel %vm896, %v2185, 0.0
      %v2237 = vsel %vm896, %v2189, 0.0
      %2239 = vset.pattern.permute.xlu0 4
      %2240 = vperm.xlu0 %2239, %v2134
      %v2241 = vpop.permute.xlu0 %2240
      %2244 = vset.pattern.permute.xlu0 4
      %2245 = vperm.xlu0 %2244, %v2135
      %v2246 = vpop.permute.xlu0 %2245
      %2249 = vset.pattern.permute.xlu0 4
      %2250 = vperm.xlu0 %2249, %v2136
      %v2251 = vpop.permute.xlu0 %2250
      %2254 = vset.pattern.permute.xlu0 4
      %2255 = vperm.xlu0 %2254, %v2137
      %v2256 = vpop.permute.xlu0 %2255
      %2259 = vset.pattern.permute.xlu0 4
      %2260 = vperm.xlu0 %2259, %v2138
      %v2261 = vpop.permute.xlu0 %2260
      %2264 = vset.pattern.permute.xlu0 4
      %2265 = vperm.xlu0 %2264, %v2139
      %v2266 = vpop.permute.xlu0 %2265
      %2269 = vset.pattern.permute.xlu0 4
      %2270 = vperm.xlu0 %2269, %v2140
      %v2271 = vpop.permute.xlu0 %2270
      %2274 = vset.pattern.permute.xlu0 4
      %2275 = vperm.xlu0 %2274, %v2141
      %v2276 = vpop.permute.xlu0 %2275
      %v2278 = vmul.f32 %v2118, %v2241
      %v2279 = vmul.f32 %v2119, %v2241
      %v2280 = vmul.f32 %v2120, %v2246
      %v2281 = vmul.f32 %v2121, %v2246
      %v2282 = vmul.f32 %v2122, %v2251
      %v2283 = vmul.f32 %v2123, %v2251
      %v2284 = vmul.f32 %v2124, %v2256
      %v2285 = vmul.f32 %v2125, %v2256
      %v2286 = vmul.f32 %v2126, %v2261
      %v2287 = vmul.f32 %v2127, %v2261
      %v2288 = vmul.f32 %v2128, %v2266
      %v2289 = vmul.f32 %v2129, %v2266
      %v2290 = vmul.f32 %v2130, %v2271
      %v2291 = vmul.f32 %v2131, %v2271
      %v2292 = vmul.f32 %v2132, %v2276
      %v2293 = vmul.f32 %v2133, %v2276
      %v2294 = vmul.f32 %v2222, %v927
      %v2295 = vmul.f32 %v2190, %v931
      %v2296 = vmul.f32 %v2223, %v927
      %v2297 = vmul.f32 %v2191, %v931
      %v2298 = vmul.f32 %v2224, %v927
      %v2299 = vmul.f32 %v2192, %v931
      %v2300 = vmul.f32 %v2225, %v927
      %v2301 = vmul.f32 %v2193, %v931
      %v2302 = vmul.f32 %v2226, %v927
      %v2303 = vmul.f32 %v2194, %v931
      %v2304 = vmul.f32 %v2227, %v927
      %v2305 = vmul.f32 %v2195, %v931
      %v2306 = vmul.f32 %v2228, %v927
      %v2307 = vmul.f32 %v2196, %v931
      %v2308 = vmul.f32 %v2229, %v927
      %v2309 = vmul.f32 %v2197, %v931
      %2310 = vset.pattern.permute.xlu0 0
      %2311 = vperm.xlu0 %2310, %v2134
      %v2312 = vpop.permute.xlu0 %2311
      %2314 = vset.pattern.permute.xlu0 0
      %2315 = vperm.xlu0 %2314, %v2135
      %v2316 = vpop.permute.xlu0 %2315
      %2318 = vset.pattern.permute.xlu0 0
      %2319 = vperm.xlu0 %2318, %v2136
      %v2320 = vpop.permute.xlu0 %2319
      %2322 = vset.pattern.permute.xlu0 0
      %2323 = vperm.xlu0 %2322, %v2137
      %v2324 = vpop.permute.xlu0 %2323
      %2326 = vset.pattern.permute.xlu0 0
      %2327 = vperm.xlu0 %2326, %v2138
      %v2328 = vpop.permute.xlu0 %2327
      %2330 = vset.pattern.permute.xlu0 0
      %2331 = vperm.xlu0 %2330, %v2139
      %v2332 = vpop.permute.xlu0 %2331
      %2334 = vset.pattern.permute.xlu0 0
      %2335 = vperm.xlu0 %2334, %v2140
      %v2336 = vpop.permute.xlu0 %2335
      %2338 = vset.pattern.permute.xlu0 0
      %2339 = vperm.xlu0 %2338, %v2141
      %v2340 = vpop.permute.xlu0 %2339
      %v2342 = vmul.f32 %v2294, %v2312
      %v2343 = vmul.f32 %v2295, %v2312
      %v2344 = vmul.f32 %v2296, %v2316
      %v2345 = vmul.f32 %v2297, %v2316
      %v2346 = vmul.f32 %v2298, %v2320
      %v2347 = vmul.f32 %v2299, %v2320
      %v2348 = vmul.f32 %v2300, %v2324
      %v2349 = vmul.f32 %v2301, %v2324
      %v2350 = vmul.f32 %v2302, %v2328
      %v2351 = vmul.f32 %v2303, %v2328
      %v2352 = vmul.f32 %v2304, %v2332
      %v2353 = vmul.f32 %v2305, %v2332
      %v2354 = vmul.f32 %v2306, %v2336
      %v2355 = vmul.f32 %v2307, %v2336
      %v2356 = vmul.f32 %v2308, %v2340
      %v2357 = vmul.f32 %v2309, %v2340
      %v2358 = vadd.f32 %v2278, %v2342
      %v2359 = vadd.f32 %v2279, %v2343
      %v2360 = vadd.f32 %v2280, %v2344
      %v2361 = vadd.f32 %v2281, %v2345
      %v2362 = vadd.f32 %v2282, %v2346
      %v2363 = vadd.f32 %v2283, %v2347
      %v2364 = vadd.f32 %v2284, %v2348
      %v2365 = vadd.f32 %v2285, %v2349
      %v2366 = vadd.f32 %v2286, %v2350
      %v2367 = vadd.f32 %v2287, %v2351
      %v2368 = vadd.f32 %v2288, %v2352
      %v2369 = vadd.f32 %v2289, %v2353
      %v2370 = vadd.f32 %v2290, %v2354
      %v2371 = vadd.f32 %v2291, %v2355
      %v2372 = vadd.f32 %v2292, %v2356
      %v2373 = vadd.f32 %v2293, %v2357
      %2374 = vset.pattern.permute.xlu0 1
      %2375 = vperm.xlu0 %2374, %v2134
      %v2376 = vpop.permute.xlu0 %2375
      %2378 = vset.pattern.permute.xlu0 1
      %2379 = vperm.xlu0 %2378, %v2135
      %v2380 = vpop.permute.xlu0 %2379
      %2382 = vset.pattern.permute.xlu0 1
      %2383 = vperm.xlu0 %2382, %v2136
      %v2384 = vpop.permute.xlu0 %2383
      %2386 = vset.pattern.permute.xlu0 1
      %2387 = vperm.xlu0 %2386, %v2137
      %v2388 = vpop.permute.xlu0 %2387
      %2390 = vset.pattern.permute.xlu0 1
      %2391 = vperm.xlu0 %2390, %v2138
      %v2392 = vpop.permute.xlu0 %2391
      %2394 = vset.pattern.permute.xlu0 1
      %2395 = vperm.xlu0 %2394, %v2139
      %v2396 = vpop.permute.xlu0 %2395
      %2398 = vset.pattern.permute.xlu0 1
      %2399 = vperm.xlu0 %2398, %v2140
      %v2400 = vpop.permute.xlu0 %2399
      %2402 = vset.pattern.permute.xlu0 1
      %2403 = vperm.xlu0 %2402, %v2141
      %v2404 = vpop.permute.xlu0 %2403
      %v2406 = vmul.f32 %v2222, %v2376
      %v2407 = vmul.f32 %v2190, %v2376
      %v2408 = vmul.f32 %v2230, %v2376
      %v2409 = vmul.f32 %v2223, %v2380
      %v2410 = vmul.f32 %v2191, %v2380
      %v2411 = vmul.f32 %v2231, %v2380
      %v2412 = vmul.f32 %v2224, %v2384
      %v2413 = vmul.f32 %v2192, %v2384
      %v2414 = vmul.f32 %v2232, %v2384
      %v2415 = vmul.f32 %v2225, %v2388
      %v2416 = vmul.f32 %v2193, %v2388
      %v2417 = vmul.f32 %v2233, %v2388
      %v2418 = vmul.f32 %v2226, %v2392
      %v2419 = vmul.f32 %v2194, %v2392
      %v2420 = vmul.f32 %v2234, %v2392
      %v2421 = vmul.f32 %v2227, %v2396
      %v2422 = vmul.f32 %v2195, %v2396
      %v2423 = vmul.f32 %v2235, %v2396
      %v2424 = vmul.f32 %v2228, %v2400
      %v2425 = vmul.f32 %v2196, %v2400
      %v2426 = vmul.f32 %v2236, %v2400
      %v2427 = vmul.f32 %v2229, %v2404
      %v2428 = vmul.f32 %v2197, %v2404
      %v2429 = vmul.f32 %v2237, %v2404
      %2454 = vrot.lane.b32.xlu0 %v2406, 127
      %v2455 = vpop.permute.xlu0 %2454
      %2456 = vrot.lane.b32.xlu0 %v2407, 127
      %v2457 = vpop.permute.xlu0 %2456
      %2458 = vrot.lane.b32.xlu0 %v2408, 127
      %v2459 = vpop.permute.xlu0 %2458
      %2460 = vrot.lane.b32.xlu0 %v2409, 127
      %v2461 = vpop.permute.xlu0 %2460
      %2462 = vrot.lane.b32.xlu0 %v2410, 127
      %v2463 = vpop.permute.xlu0 %2462
      %2464 = vrot.lane.b32.xlu0 %v2411, 127
      %v2465 = vpop.permute.xlu0 %2464
      %2466 = vrot.lane.b32.xlu0 %v2412, 127
      %v2467 = vpop.permute.xlu0 %2466
      %2468 = vrot.lane.b32.xlu0 %v2413, 127
      %v2469 = vpop.permute.xlu0 %2468
      %2470 = vrot.lane.b32.xlu0 %v2414, 127
      %v2471 = vpop.permute.xlu0 %2470
      %2472 = vrot.lane.b32.xlu0 %v2415, 127
      %v2473 = vpop.permute.xlu0 %2472
      %2474 = vrot.lane.b32.xlu0 %v2416, 127
      %v2475 = vpop.permute.xlu0 %2474
      %2476 = vrot.lane.b32.xlu0 %v2417, 127
      %v2477 = vpop.permute.xlu0 %2476
      %2478 = vrot.lane.b32.xlu0 %v2418, 127
      %v2479 = vpop.permute.xlu0 %2478
      %2480 = vrot.lane.b32.xlu0 %v2419, 127
      %v2481 = vpop.permute.xlu0 %2480
      %2482 = vrot.lane.b32.xlu0 %v2420, 127
      %v2483 = vpop.permute.xlu0 %2482
      %2484 = vrot.lane.b32.xlu0 %v2421, 127
      %v2485 = vpop.permute.xlu0 %2484
      %2486 = vrot.lane.b32.xlu0 %v2422, 127
      %v2487 = vpop.permute.xlu0 %2486
      %2488 = vrot.lane.b32.xlu0 %v2423, 127
      %v2489 = vpop.permute.xlu0 %2488
      %2490 = vrot.lane.b32.xlu0 %v2424, 127
      %v2491 = vpop.permute.xlu0 %2490
      %2492 = vrot.lane.b32.xlu0 %v2425, 127
      %v2493 = vpop.permute.xlu0 %2492
      %2494 = vrot.lane.b32.xlu0 %v2426, 127
      %v2495 = vpop.permute.xlu0 %2494
      %2496 = vrot.lane.b32.xlu0 %v2427, 127
      %v2497 = vpop.permute.xlu0 %2496
      %2498 = vrot.lane.b32.xlu0 %v2428, 127
      %v2499 = vpop.permute.xlu0 %2498
      %2500 = vrot.lane.b32.xlu0 %v2429, 127
      %v2501 = vpop.permute.xlu0 %2500
      %v2502 = vsel %vm986, %v2455, %v2457
      %v2503 = vsel %vm986, %v2457, %v2459
      %v2504 = vsel %vm986, %v2461, %v2463
      %v2505 = vsel %vm986, %v2463, %v2465
      %v2506 = vsel %vm986, %v2467, %v2469
      %v2507 = vsel %vm986, %v2469, %v2471
      %v2508 = vsel %vm986, %v2473, %v2475
      %v2509 = vsel %vm986, %v2475, %v2477
      %v2510 = vsel %vm986, %v2479, %v2481
      %v2511 = vsel %vm986, %v2481, %v2483
      %v2512 = vsel %vm986, %v2485, %v2487
      %v2513 = vsel %vm986, %v2487, %v2489
      %v2514 = vsel %vm986, %v2491, %v2493
      %v2515 = vsel %vm986, %v2493, %v2495
      %v2516 = vsel %vm986, %v2497, %v2499
      %v2517 = vsel %vm986, %v2499, %v2501
      %v2534 = vadd.f32 %v2358, %v2502
      %v2535 = vadd.f32 %v2359, %v2503
      %v2536 = vadd.f32 %v2360, %v2504
      %v2537 = vadd.f32 %v2361, %v2505
      %v2538 = vadd.f32 %v2362, %v2506
      %v2539 = vadd.f32 %v2363, %v2507
      %v2540 = vadd.f32 %v2364, %v2508
      %v2541 = vadd.f32 %v2365, %v2509
      %v2542 = vadd.f32 %v2366, %v2510
      %v2543 = vadd.f32 %v2367, %v2511
      %v2544 = vadd.f32 %v2368, %v2512
      %v2545 = vadd.f32 %v2369, %v2513
      %v2546 = vadd.f32 %v2370, %v2514
      %v2547 = vadd.f32 %v2371, %v2515
      %v2548 = vadd.f32 %v2372, %v2516
      %v2549 = vadd.f32 %v2373, %v2517
      %v2550 = vmul.f32 %v2222, %v1009
      %v2551 = vmul.f32 %v2190, %v1013
      %v2552 = vmul.f32 %v2230, %v1011
      %v2553 = vmul.f32 %v2223, %v1009
      %v2554 = vmul.f32 %v2191, %v1013
      %v2555 = vmul.f32 %v2231, %v1011
      %v2556 = vmul.f32 %v2224, %v1009
      %v2557 = vmul.f32 %v2192, %v1013
      %v2558 = vmul.f32 %v2232, %v1011
      %v2559 = vmul.f32 %v2225, %v1009
      %v2560 = vmul.f32 %v2193, %v1013
      %v2561 = vmul.f32 %v2233, %v1011
      %v2562 = vmul.f32 %v2226, %v1009
      %v2563 = vmul.f32 %v2194, %v1013
      %v2564 = vmul.f32 %v2234, %v1011
      %v2565 = vmul.f32 %v2227, %v1009
      %v2566 = vmul.f32 %v2195, %v1013
      %v2567 = vmul.f32 %v2235, %v1011
      %v2568 = vmul.f32 %v2228, %v1009
      %v2569 = vmul.f32 %v2196, %v1013
      %v2570 = vmul.f32 %v2236, %v1011
      %v2571 = vmul.f32 %v2229, %v1009
      %v2572 = vmul.f32 %v2197, %v1013
      %v2573 = vmul.f32 %v2237, %v1011
      %2574 = vset.pattern.permute.xlu0 2
      %2575 = vperm.xlu0 %2574, %v2134
      %v2576 = vpop.permute.xlu0 %2575
      %2578 = vset.pattern.permute.xlu0 2
      %2579 = vperm.xlu0 %2578, %v2135
      %v2580 = vpop.permute.xlu0 %2579
      %2582 = vset.pattern.permute.xlu0 2
      %2583 = vperm.xlu0 %2582, %v2136
      %v2584 = vpop.permute.xlu0 %2583
      %2586 = vset.pattern.permute.xlu0 2
      %2587 = vperm.xlu0 %2586, %v2137
      %v2588 = vpop.permute.xlu0 %2587
      %2590 = vset.pattern.permute.xlu0 2
      %2591 = vperm.xlu0 %2590, %v2138
      %v2592 = vpop.permute.xlu0 %2591
      %2594 = vset.pattern.permute.xlu0 2
      %2595 = vperm.xlu0 %2594, %v2139
      %v2596 = vpop.permute.xlu0 %2595
      %2598 = vset.pattern.permute.xlu0 2
      %2599 = vperm.xlu0 %2598, %v2140
      %v2600 = vpop.permute.xlu0 %2599
      %2602 = vset.pattern.permute.xlu0 2
      %2603 = vperm.xlu0 %2602, %v2141
      %v2604 = vpop.permute.xlu0 %2603
      %v2606 = vmul.f32 %v2550, %v2576
      %v2607 = vmul.f32 %v2551, %v2576
      %v2608 = vmul.f32 %v2552, %v2576
      %v2609 = vmul.f32 %v2553, %v2580
      %v2610 = vmul.f32 %v2554, %v2580
      %v2611 = vmul.f32 %v2555, %v2580
      %v2612 = vmul.f32 %v2556, %v2584
      %v2613 = vmul.f32 %v2557, %v2584
      %v2614 = vmul.f32 %v2558, %v2584
      %v2615 = vmul.f32 %v2559, %v2588
      %v2616 = vmul.f32 %v2560, %v2588
      %v2617 = vmul.f32 %v2561, %v2588
      %v2618 = vmul.f32 %v2562, %v2592
      %v2619 = vmul.f32 %v2563, %v2592
      %v2620 = vmul.f32 %v2564, %v2592
      %v2621 = vmul.f32 %v2565, %v2596
      %v2622 = vmul.f32 %v2566, %v2596
      %v2623 = vmul.f32 %v2567, %v2596
      %v2624 = vmul.f32 %v2568, %v2600
      %v2625 = vmul.f32 %v2569, %v2600
      %v2626 = vmul.f32 %v2570, %v2600
      %v2627 = vmul.f32 %v2571, %v2604
      %v2628 = vmul.f32 %v2572, %v2604
      %v2629 = vmul.f32 %v2573, %v2604
      %2654 = vrot.lane.b32.xlu0 %v2606, 126
      %v2655 = vpop.permute.xlu0 %2654
      %2656 = vrot.lane.b32.xlu0 %v2607, 126
      %v2657 = vpop.permute.xlu0 %2656
      %2658 = vrot.lane.b32.xlu0 %v2608, 126
      %v2659 = vpop.permute.xlu0 %2658
      %2660 = vrot.lane.b32.xlu0 %v2609, 126
      %v2661 = vpop.permute.xlu0 %2660
      %2662 = vrot.lane.b32.xlu0 %v2610, 126
      %v2663 = vpop.permute.xlu0 %2662
      %2664 = vrot.lane.b32.xlu0 %v2611, 126
      %v2665 = vpop.permute.xlu0 %2664
      %2666 = vrot.lane.b32.xlu0 %v2612, 126
      %v2667 = vpop.permute.xlu0 %2666
      %2668 = vrot.lane.b32.xlu0 %v2613, 126
      %v2669 = vpop.permute.xlu0 %2668
      %2670 = vrot.lane.b32.xlu0 %v2614, 126
      %v2671 = vpop.permute.xlu0 %2670
      %2672 = vrot.lane.b32.xlu0 %v2615, 126
      %v2673 = vpop.permute.xlu0 %2672
      %2674 = vrot.lane.b32.xlu0 %v2616, 126
      %v2675 = vpop.permute.xlu0 %2674
      %2676 = vrot.lane.b32.xlu0 %v2617, 126
      %v2677 = vpop.permute.xlu0 %2676
      %2678 = vrot.lane.b32.xlu0 %v2618, 126
      %v2679 = vpop.permute.xlu0 %2678
      %2680 = vrot.lane.b32.xlu0 %v2619, 126
      %v2681 = vpop.permute.xlu0 %2680
      %2682 = vrot.lane.b32.xlu0 %v2620, 126
      %v2683 = vpop.permute.xlu0 %2682
      %2684 = vrot.lane.b32.xlu0 %v2621, 126
      %v2685 = vpop.permute.xlu0 %2684
      %2686 = vrot.lane.b32.xlu0 %v2622, 126
      %v2687 = vpop.permute.xlu0 %2686
      %2688 = vrot.lane.b32.xlu0 %v2623, 126
      %v2689 = vpop.permute.xlu0 %2688
      %2690 = vrot.lane.b32.xlu0 %v2624, 126
      %v2691 = vpop.permute.xlu0 %2690
      %2692 = vrot.lane.b32.xlu0 %v2625, 126
      %v2693 = vpop.permute.xlu0 %2692
      %2694 = vrot.lane.b32.xlu0 %v2626, 126
      %v2695 = vpop.permute.xlu0 %2694
      %2696 = vrot.lane.b32.xlu0 %v2627, 126
      %v2697 = vpop.permute.xlu0 %2696
      %2698 = vrot.lane.b32.xlu0 %v2628, 126
      %v2699 = vpop.permute.xlu0 %2698
      %2700 = vrot.lane.b32.xlu0 %v2629, 126
      %v2701 = vpop.permute.xlu0 %2700
      %v2702 = vsel %vm1055, %v2655, %v2657
      %v2703 = vsel %vm1055, %v2657, %v2659
      %v2704 = vsel %vm1055, %v2661, %v2663
      %v2705 = vsel %vm1055, %v2663, %v2665
      %v2706 = vsel %vm1055, %v2667, %v2669
      %v2707 = vsel %vm1055, %v2669, %v2671
      %v2708 = vsel %vm1055, %v2673, %v2675
      %v2709 = vsel %vm1055, %v2675, %v2677
      %v2710 = vsel %vm1055, %v2679, %v2681
      %v2711 = vsel %vm1055, %v2681, %v2683
      %v2712 = vsel %vm1055, %v2685, %v2687
      %v2713 = vsel %vm1055, %v2687, %v2689
      %v2714 = vsel %vm1055, %v2691, %v2693
      %v2715 = vsel %vm1055, %v2693, %v2695
      %v2716 = vsel %vm1055, %v2697, %v2699
      %v2717 = vsel %vm1055, %v2699, %v2701
      %v2734 = vadd.f32 %v2534, %v2702
      %v2735 = vadd.f32 %v2535, %v2703
      %v2736 = vadd.f32 %v2536, %v2704
      %v2737 = vadd.f32 %v2537, %v2705
      %v2738 = vadd.f32 %v2538, %v2706
      %v2739 = vadd.f32 %v2539, %v2707
      %v2740 = vadd.f32 %v2540, %v2708
      %v2741 = vadd.f32 %v2541, %v2709
      %v2742 = vadd.f32 %v2542, %v2710
      %v2743 = vadd.f32 %v2543, %v2711
      %v2744 = vadd.f32 %v2544, %v2712
      %v2745 = vadd.f32 %v2545, %v2713
      %v2746 = vadd.f32 %v2546, %v2714
      %v2747 = vadd.f32 %v2547, %v2715
      %v2748 = vadd.f32 %v2548, %v2716
      %v2749 = vadd.f32 %v2549, %v2717
      %v2750 = vmul.f32 %v2222, %v1069
      %v2751 = vmul.f32 %v2190, %v1072
      %v2752 = vmul.f32 %v2230, %v1071
      %v2753 = vmul.f32 %v2223, %v1069
      %v2754 = vmul.f32 %v2191, %v1072
      %v2755 = vmul.f32 %v2231, %v1071
      %v2756 = vmul.f32 %v2224, %v1069
      %v2757 = vmul.f32 %v2192, %v1072
      %v2758 = vmul.f32 %v2232, %v1071
      %v2759 = vmul.f32 %v2225, %v1069
      %v2760 = vmul.f32 %v2193, %v1072
      %v2761 = vmul.f32 %v2233, %v1071
      %v2762 = vmul.f32 %v2226, %v1069
      %v2763 = vmul.f32 %v2194, %v1072
      %v2764 = vmul.f32 %v2234, %v1071
      %v2765 = vmul.f32 %v2227, %v1069
      %v2766 = vmul.f32 %v2195, %v1072
      %v2767 = vmul.f32 %v2235, %v1071
      %v2768 = vmul.f32 %v2228, %v1069
      %v2769 = vmul.f32 %v2196, %v1072
      %v2770 = vmul.f32 %v2236, %v1071
      %v2771 = vmul.f32 %v2229, %v1069
      %v2772 = vmul.f32 %v2197, %v1072
      %v2773 = vmul.f32 %v2237, %v1071
      %2774 = vset.pattern.permute.xlu0 3
      %2775 = vperm.xlu0 %2774, %v2134
      %v2776 = vpop.permute.xlu0 %2775
      %2778 = vset.pattern.permute.xlu0 3
      %2779 = vperm.xlu0 %2778, %v2135
      %v2780 = vpop.permute.xlu0 %2779
      %2782 = vset.pattern.permute.xlu0 3
      %2783 = vperm.xlu0 %2782, %v2136
      %v2784 = vpop.permute.xlu0 %2783
      %2786 = vset.pattern.permute.xlu0 3
      %2787 = vperm.xlu0 %2786, %v2137
      %v2788 = vpop.permute.xlu0 %2787
      %2790 = vset.pattern.permute.xlu0 3
      %2791 = vperm.xlu0 %2790, %v2138
      %v2792 = vpop.permute.xlu0 %2791
      %2794 = vset.pattern.permute.xlu0 3
      %2795 = vperm.xlu0 %2794, %v2139
      %v2796 = vpop.permute.xlu0 %2795
      %2798 = vset.pattern.permute.xlu0 3
      %2799 = vperm.xlu0 %2798, %v2140
      %v2800 = vpop.permute.xlu0 %2799
      %2802 = vset.pattern.permute.xlu0 3
      %2803 = vperm.xlu0 %2802, %v2141
      %v2804 = vpop.permute.xlu0 %2803
      %v2806 = vmul.f32 %v2750, %v2776
      %v2807 = vmul.f32 %v2751, %v2776
      %v2808 = vmul.f32 %v2752, %v2776
      %v2809 = vmul.f32 %v2753, %v2780
      %v2810 = vmul.f32 %v2754, %v2780
      %v2811 = vmul.f32 %v2755, %v2780
      %v2812 = vmul.f32 %v2756, %v2784
      %v2813 = vmul.f32 %v2757, %v2784
      %v2814 = vmul.f32 %v2758, %v2784
      %v2815 = vmul.f32 %v2759, %v2788
      %v2816 = vmul.f32 %v2760, %v2788
      %v2817 = vmul.f32 %v2761, %v2788
      %v2818 = vmul.f32 %v2762, %v2792
      %v2819 = vmul.f32 %v2763, %v2792
      %v2820 = vmul.f32 %v2764, %v2792
      %v2821 = vmul.f32 %v2765, %v2796
      %v2822 = vmul.f32 %v2766, %v2796
      %v2823 = vmul.f32 %v2767, %v2796
      %v2824 = vmul.f32 %v2768, %v2800
      %v2825 = vmul.f32 %v2769, %v2800
      %v2826 = vmul.f32 %v2770, %v2800
      %v2827 = vmul.f32 %v2771, %v2804
      %v2828 = vmul.f32 %v2772, %v2804
      %v2829 = vmul.f32 %v2773, %v2804
      %2854 = vrot.lane.b32.xlu0 %v2806, 112
      %v2855 = vpop.permute.xlu0 %2854
      %2856 = vrot.lane.b32.xlu0 %v2807, 112
      %v2857 = vpop.permute.xlu0 %2856
      %2858 = vrot.lane.b32.xlu0 %v2808, 112
      %v2859 = vpop.permute.xlu0 %2858
      %2860 = vrot.lane.b32.xlu0 %v2809, 112
      %v2861 = vpop.permute.xlu0 %2860
      %2862 = vrot.lane.b32.xlu0 %v2810, 112
      %v2863 = vpop.permute.xlu0 %2862
      %2864 = vrot.lane.b32.xlu0 %v2811, 112
      %v2865 = vpop.permute.xlu0 %2864
      %2866 = vrot.lane.b32.xlu0 %v2812, 112
      %v2867 = vpop.permute.xlu0 %2866
      %2868 = vrot.lane.b32.xlu0 %v2813, 112
      %v2869 = vpop.permute.xlu0 %2868
      %2870 = vrot.lane.b32.xlu0 %v2814, 112
      %v2871 = vpop.permute.xlu0 %2870
      %2872 = vrot.lane.b32.xlu0 %v2815, 112
      %v2873 = vpop.permute.xlu0 %2872
      %2874 = vrot.lane.b32.xlu0 %v2816, 112
      %v2875 = vpop.permute.xlu0 %2874
      %2876 = vrot.lane.b32.xlu0 %v2817, 112
      %v2877 = vpop.permute.xlu0 %2876
      %2878 = vrot.lane.b32.xlu0 %v2818, 112
      %v2879 = vpop.permute.xlu0 %2878
      %2880 = vrot.lane.b32.xlu0 %v2819, 112
      %v2881 = vpop.permute.xlu0 %2880
      %2882 = vrot.lane.b32.xlu0 %v2820, 112
      %v2883 = vpop.permute.xlu0 %2882
      %2884 = vrot.lane.b32.xlu0 %v2821, 112
      %v2885 = vpop.permute.xlu0 %2884
      %2886 = vrot.lane.b32.xlu0 %v2822, 112
      %v2887 = vpop.permute.xlu0 %2886
      %2888 = vrot.lane.b32.xlu0 %v2823, 112
      %v2889 = vpop.permute.xlu0 %2888
      %2890 = vrot.lane.b32.xlu0 %v2824, 112
      %v2891 = vpop.permute.xlu0 %2890
      %2892 = vrot.lane.b32.xlu0 %v2825, 112
      %v2893 = vpop.permute.xlu0 %2892
      %2894 = vrot.lane.b32.xlu0 %v2826, 112
      %v2895 = vpop.permute.xlu0 %2894
      %2896 = vrot.lane.b32.xlu0 %v2827, 112
      %v2897 = vpop.permute.xlu0 %2896
      %2898 = vrot.lane.b32.xlu0 %v2828, 112
      %v2899 = vpop.permute.xlu0 %2898
      %2900 = vrot.lane.b32.xlu0 %v2829, 112
      %v2901 = vpop.permute.xlu0 %2900
      %v2902 = vsel %vm1114, %v2855, %v2857
      %v2903 = vsel %vm1114, %v2857, %v2859
      %v2904 = vsel %vm1114, %v2861, %v2863
      %v2905 = vsel %vm1114, %v2863, %v2865
      %v2906 = vsel %vm1114, %v2867, %v2869
      %v2907 = vsel %vm1114, %v2869, %v2871
      %v2908 = vsel %vm1114, %v2873, %v2875
      %v2909 = vsel %vm1114, %v2875, %v2877
      %v2910 = vsel %vm1114, %v2879, %v2881
      %v2911 = vsel %vm1114, %v2881, %v2883
      %v2912 = vsel %vm1114, %v2885, %v2887
      %v2913 = vsel %vm1114, %v2887, %v2889
      %v2914 = vsel %vm1114, %v2891, %v2893
      %v2915 = vsel %vm1114, %v2893, %v2895
      %v2916 = vsel %vm1114, %v2897, %v2899
      %v2917 = vsel %vm1114, %v2899, %v2901
      %v2934 = vadd.f32 %v2734, %v2902
      %v2935 = vadd.f32 %v2735, %v2903
      %v2936 = vadd.f32 %v2736, %v2904
      %v2937 = vadd.f32 %v2737, %v2905
      %v2938 = vadd.f32 %v2738, %v2906
      %v2939 = vadd.f32 %v2739, %v2907
      %v2940 = vadd.f32 %v2740, %v2908
      %v2941 = vadd.f32 %v2741, %v2909
      %v2942 = vadd.f32 %v2742, %v2910
      %v2943 = vadd.f32 %v2743, %v2911
      %v2944 = vadd.f32 %v2744, %v2912
      %v2945 = vadd.f32 %v2745, %v2913
      %v2946 = vadd.f32 %v2746, %v2914
      %v2947 = vadd.f32 %v2747, %v2915
      %v2948 = vadd.f32 %v2748, %v2916
      %v2949 = vadd.f32 %v2749, %v2917
      %v2950 = vmul.f32 %v2222, %v1128
      %v2951 = vmul.f32 %v2190, %v1132
      %v2952 = vmul.f32 %v2230, %v1130
      %v2953 = vmul.f32 %v2223, %v1128
      %v2954 = vmul.f32 %v2191, %v1132
      %v2955 = vmul.f32 %v2231, %v1130
      %v2956 = vmul.f32 %v2224, %v1128
      %v2957 = vmul.f32 %v2192, %v1132
      %v2958 = vmul.f32 %v2232, %v1130
      %v2959 = vmul.f32 %v2225, %v1128
      %v2960 = vmul.f32 %v2193, %v1132
      %v2961 = vmul.f32 %v2233, %v1130
      %v2962 = vmul.f32 %v2226, %v1128
      %v2963 = vmul.f32 %v2194, %v1132
      %v2964 = vmul.f32 %v2234, %v1130
      %v2965 = vmul.f32 %v2227, %v1128
      %v2966 = vmul.f32 %v2195, %v1132
      %v2967 = vmul.f32 %v2235, %v1130
      %v2968 = vmul.f32 %v2228, %v1128
      %v2969 = vmul.f32 %v2196, %v1132
      %v2970 = vmul.f32 %v2236, %v1130
      %v2971 = vmul.f32 %v2229, %v1128
      %v2972 = vmul.f32 %v2197, %v1132
      %v2973 = vmul.f32 %v2237, %v1130
      %2974 = vset.pattern.permute.xlu0 5
      %2975 = vperm.xlu0 %2974, %v2134
      %v2976 = vpop.permute.xlu0 %2975
      %2978 = vset.pattern.permute.xlu0 5
      %2979 = vperm.xlu0 %2978, %v2135
      %v2980 = vpop.permute.xlu0 %2979
      %2982 = vset.pattern.permute.xlu0 5
      %2983 = vperm.xlu0 %2982, %v2136
      %v2984 = vpop.permute.xlu0 %2983
      %2986 = vset.pattern.permute.xlu0 5
      %2987 = vperm.xlu0 %2986, %v2137
      %v2988 = vpop.permute.xlu0 %2987
      %2990 = vset.pattern.permute.xlu0 5
      %2991 = vperm.xlu0 %2990, %v2138
      %v2992 = vpop.permute.xlu0 %2991
      %2994 = vset.pattern.permute.xlu0 5
      %2995 = vperm.xlu0 %2994, %v2139
      %v2996 = vpop.permute.xlu0 %2995
      %2998 = vset.pattern.permute.xlu0 5
      %2999 = vperm.xlu0 %2998, %v2140
      %v3000 = vpop.permute.xlu0 %2999
      %3002 = vset.pattern.permute.xlu0 5
      %3003 = vperm.xlu0 %3002, %v2141
      %v3004 = vpop.permute.xlu0 %3003
      %v3006 = vmul.f32 %v2950, %v2976
      %v3007 = vmul.f32 %v2951, %v2976
      %v3008 = vmul.f32 %v2952, %v2976
      %v3009 = vmul.f32 %v2953, %v2980
      %v3010 = vmul.f32 %v2954, %v2980
      %v3011 = vmul.f32 %v2955, %v2980
      %v3012 = vmul.f32 %v2956, %v2984
      %v3013 = vmul.f32 %v2957, %v2984
      %v3014 = vmul.f32 %v2958, %v2984
      %v3015 = vmul.f32 %v2959, %v2988
      %v3016 = vmul.f32 %v2960, %v2988
      %v3017 = vmul.f32 %v2961, %v2988
      %v3018 = vmul.f32 %v2962, %v2992
      %v3019 = vmul.f32 %v2963, %v2992
      %v3020 = vmul.f32 %v2964, %v2992
      %v3021 = vmul.f32 %v2965, %v2996
      %v3022 = vmul.f32 %v2966, %v2996
      %v3023 = vmul.f32 %v2967, %v2996
      %v3024 = vmul.f32 %v2968, %v3000
      %v3025 = vmul.f32 %v2969, %v3000
      %v3026 = vmul.f32 %v2970, %v3000
      %v3027 = vmul.f32 %v2971, %v3004
      %v3028 = vmul.f32 %v2972, %v3004
      %v3029 = vmul.f32 %v2973, %v3004
      %3054 = vrot.lane.b32.xlu0 %v3006, 110
      %v3055 = vpop.permute.xlu0 %3054
      %3056 = vrot.lane.b32.xlu0 %v3007, 110
      %v3057 = vpop.permute.xlu0 %3056
      %3058 = vrot.lane.b32.xlu0 %v3008, 110
      %v3059 = vpop.permute.xlu0 %3058
      %3060 = vrot.lane.b32.xlu0 %v3009, 110
      %v3061 = vpop.permute.xlu0 %3060
      %3062 = vrot.lane.b32.xlu0 %v3010, 110
      %v3063 = vpop.permute.xlu0 %3062
      %3064 = vrot.lane.b32.xlu0 %v3011, 110
      %v3065 = vpop.permute.xlu0 %3064
      %3066 = vrot.lane.b32.xlu0 %v3012, 110
      %v3067 = vpop.permute.xlu0 %3066
      %3068 = vrot.lane.b32.xlu0 %v3013, 110
      %v3069 = vpop.permute.xlu0 %3068
      %3070 = vrot.lane.b32.xlu0 %v3014, 110
      %v3071 = vpop.permute.xlu0 %3070
      %3072 = vrot.lane.b32.xlu0 %v3015, 110
      %v3073 = vpop.permute.xlu0 %3072
      %3074 = vrot.lane.b32.xlu0 %v3016, 110
      %v3075 = vpop.permute.xlu0 %3074
      %3076 = vrot.lane.b32.xlu0 %v3017, 110
      %v3077 = vpop.permute.xlu0 %3076
      %3078 = vrot.lane.b32.xlu0 %v3018, 110
      %v3079 = vpop.permute.xlu0 %3078
      %3080 = vrot.lane.b32.xlu0 %v3019, 110
      %v3081 = vpop.permute.xlu0 %3080
      %3082 = vrot.lane.b32.xlu0 %v3020, 110
      %v3083 = vpop.permute.xlu0 %3082
      %3084 = vrot.lane.b32.xlu0 %v3021, 110
      %v3085 = vpop.permute.xlu0 %3084
      %3086 = vrot.lane.b32.xlu0 %v3022, 110
      %v3087 = vpop.permute.xlu0 %3086
      %3088 = vrot.lane.b32.xlu0 %v3023, 110
      %v3089 = vpop.permute.xlu0 %3088
      %3090 = vrot.lane.b32.xlu0 %v3024, 110
      %v3091 = vpop.permute.xlu0 %3090
      %3092 = vrot.lane.b32.xlu0 %v3025, 110
      %v3093 = vpop.permute.xlu0 %3092
      %3094 = vrot.lane.b32.xlu0 %v3026, 110
      %v3095 = vpop.permute.xlu0 %3094
      %3096 = vrot.lane.b32.xlu0 %v3027, 110
      %v3097 = vpop.permute.xlu0 %3096
      %3098 = vrot.lane.b32.xlu0 %v3028, 110
      %v3099 = vpop.permute.xlu0 %3098
      %3100 = vrot.lane.b32.xlu0 %v3029, 110
      %v3101 = vpop.permute.xlu0 %3100
      %v3102 = vsel %vm1174, %v3055, %v3057
      %v3103 = vsel %vm1174, %v3057, %v3059
      %v3104 = vsel %vm1174, %v3061, %v3063
      %v3105 = vsel %vm1174, %v3063, %v3065
      %v3106 = vsel %vm1174, %v3067, %v3069
      %v3107 = vsel %vm1174, %v3069, %v3071
      %v3108 = vsel %vm1174, %v3073, %v3075
      %v3109 = vsel %vm1174, %v3075, %v3077
      %v3110 = vsel %vm1174, %v3079, %v3081
      %v3111 = vsel %vm1174, %v3081, %v3083
      %v3112 = vsel %vm1174, %v3085, %v3087
      %v3113 = vsel %vm1174, %v3087, %v3089
      %v3114 = vsel %vm1174, %v3091, %v3093
      %v3115 = vsel %vm1174, %v3093, %v3095
      %v3116 = vsel %vm1174, %v3097, %v3099
      %v3117 = vsel %vm1174, %v3099, %v3101
      %v3134 = vadd.f32 %v2934, %v3102
      %v3135 = vadd.f32 %v2935, %v3103
      %v3136 = vadd.f32 %v2936, %v3104
      %v3137 = vadd.f32 %v2937, %v3105
      %v3138 = vadd.f32 %v2938, %v3106
      %v3139 = vadd.f32 %v2939, %v3107
      %v3140 = vadd.f32 %v2940, %v3108
      %v3141 = vadd.f32 %v2941, %v3109
      %v3142 = vadd.f32 %v2942, %v3110
      %v3143 = vadd.f32 %v2943, %v3111
      %v3144 = vadd.f32 %v2944, %v3112
      %v3145 = vadd.f32 %v2945, %v3113
      %v3146 = vadd.f32 %v2946, %v3114
      %v3147 = vadd.f32 %v2947, %v3115
      %v3148 = vadd.f32 %v2948, %v3116
      %v3149 = vadd.f32 %v2949, %v3117
      %v3150 = vmul.f32 %v2222, %v1188
      %v3151 = vmul.f32 %v2190, %v1192
      %v3152 = vmul.f32 %v2230, %v1190
      %v3153 = vmul.f32 %v2223, %v1188
      %v3154 = vmul.f32 %v2191, %v1192
      %v3155 = vmul.f32 %v2231, %v1190
      %v3156 = vmul.f32 %v2224, %v1188
      %v3157 = vmul.f32 %v2192, %v1192
      %v3158 = vmul.f32 %v2232, %v1190
      %v3159 = vmul.f32 %v2225, %v1188
      %v3160 = vmul.f32 %v2193, %v1192
      %v3161 = vmul.f32 %v2233, %v1190
      %v3162 = vmul.f32 %v2226, %v1188
      %v3163 = vmul.f32 %v2194, %v1192
      %v3164 = vmul.f32 %v2234, %v1190
      %v3165 = vmul.f32 %v2227, %v1188
      %v3166 = vmul.f32 %v2195, %v1192
      %v3167 = vmul.f32 %v2235, %v1190
      %v3168 = vmul.f32 %v2228, %v1188
      %v3169 = vmul.f32 %v2196, %v1192
      %v3170 = vmul.f32 %v2236, %v1190
      %v3171 = vmul.f32 %v2229, %v1188
      %v3172 = vmul.f32 %v2197, %v1192
      %v3173 = vmul.f32 %v2237, %v1190
      %3174 = vset.pattern.permute.xlu0 6
      %3175 = vperm.xlu0 %3174, %v2134
      %v3176 = vpop.permute.xlu0 %3175
      %3178 = vset.pattern.permute.xlu0 6
      %3179 = vperm.xlu0 %3178, %v2135
      %v3180 = vpop.permute.xlu0 %3179
      %3182 = vset.pattern.permute.xlu0 6
      %3183 = vperm.xlu0 %3182, %v2136
      %v3184 = vpop.permute.xlu0 %3183
      %3186 = vset.pattern.permute.xlu0 6
      %3187 = vperm.xlu0 %3186, %v2137
      %v3188 = vpop.permute.xlu0 %3187
      %3190 = vset.pattern.permute.xlu0 6
      %3191 = vperm.xlu0 %3190, %v2138
      %v3192 = vpop.permute.xlu0 %3191
      %3194 = vset.pattern.permute.xlu0 6
      %3195 = vperm.xlu0 %3194, %v2139
      %v3196 = vpop.permute.xlu0 %3195
      %3198 = vset.pattern.permute.xlu0 6
      %3199 = vperm.xlu0 %3198, %v2140
      %v3200 = vpop.permute.xlu0 %3199
      %3202 = vset.pattern.permute.xlu0 6
      %3203 = vperm.xlu0 %3202, %v2141
      %v3204 = vpop.permute.xlu0 %3203
      %v3206 = vmul.f32 %v3150, %v3176
      %v3207 = vmul.f32 %v3151, %v3176
      %v3208 = vmul.f32 %v3152, %v3176
      %v3209 = vmul.f32 %v3153, %v3180
      %v3210 = vmul.f32 %v3154, %v3180
      %v3211 = vmul.f32 %v3155, %v3180
      %v3212 = vmul.f32 %v3156, %v3184
      %v3213 = vmul.f32 %v3157, %v3184
      %v3214 = vmul.f32 %v3158, %v3184
      %v3215 = vmul.f32 %v3159, %v3188
      %v3216 = vmul.f32 %v3160, %v3188
      %v3217 = vmul.f32 %v3161, %v3188
      %v3218 = vmul.f32 %v3162, %v3192
      %v3219 = vmul.f32 %v3163, %v3192
      %v3220 = vmul.f32 %v3164, %v3192
      %v3221 = vmul.f32 %v3165, %v3196
      %v3222 = vmul.f32 %v3166, %v3196
      %v3223 = vmul.f32 %v3167, %v3196
      %v3224 = vmul.f32 %v3168, %v3200
      %v3225 = vmul.f32 %v3169, %v3200
      %v3226 = vmul.f32 %v3170, %v3200
      %v3227 = vmul.f32 %v3171, %v3204
      %v3228 = vmul.f32 %v3172, %v3204
      %v3229 = vmul.f32 %v3173, %v3204
      %3254 = vrot.lane.b32.xlu0 %v3206, 96
      %v3255 = vpop.permute.xlu0 %3254
      %3256 = vrot.lane.b32.xlu0 %v3207, 96
      %v3257 = vpop.permute.xlu0 %3256
      %3258 = vrot.lane.b32.xlu0 %v3208, 96
      %v3259 = vpop.permute.xlu0 %3258
      %3260 = vrot.lane.b32.xlu0 %v3209, 96
      %v3261 = vpop.permute.xlu0 %3260
      %3262 = vrot.lane.b32.xlu0 %v3210, 96
      %v3263 = vpop.permute.xlu0 %3262
      %3264 = vrot.lane.b32.xlu0 %v3211, 96
      %v3265 = vpop.permute.xlu0 %3264
      %3266 = vrot.lane.b32.xlu0 %v3212, 96
      %v3267 = vpop.permute.xlu0 %3266
      %3268 = vrot.lane.b32.xlu0 %v3213, 96
      %v3269 = vpop.permute.xlu0 %3268
      %3270 = vrot.lane.b32.xlu0 %v3214, 96
      %v3271 = vpop.permute.xlu0 %3270
      %3272 = vrot.lane.b32.xlu0 %v3215, 96
      %v3273 = vpop.permute.xlu0 %3272
      %3274 = vrot.lane.b32.xlu0 %v3216, 96
      %v3275 = vpop.permute.xlu0 %3274
      %3276 = vrot.lane.b32.xlu0 %v3217, 96
      %v3277 = vpop.permute.xlu0 %3276
      %3278 = vrot.lane.b32.xlu0 %v3218, 96
      %v3279 = vpop.permute.xlu0 %3278
      %3280 = vrot.lane.b32.xlu0 %v3219, 96
      %v3281 = vpop.permute.xlu0 %3280
      %3282 = vrot.lane.b32.xlu0 %v3220, 96
      %v3283 = vpop.permute.xlu0 %3282
      %3284 = vrot.lane.b32.xlu0 %v3221, 96
      %v3285 = vpop.permute.xlu0 %3284
      %3286 = vrot.lane.b32.xlu0 %v3222, 96
      %v3287 = vpop.permute.xlu0 %3286
      %3288 = vrot.lane.b32.xlu0 %v3223, 96
      %v3289 = vpop.permute.xlu0 %3288
      %3290 = vrot.lane.b32.xlu0 %v3224, 96
      %v3291 = vpop.permute.xlu0 %3290
      %3292 = vrot.lane.b32.xlu0 %v3225, 96
      %v3293 = vpop.permute.xlu0 %3292
      %3294 = vrot.lane.b32.xlu0 %v3226, 96
      %v3295 = vpop.permute.xlu0 %3294
      %3296 = vrot.lane.b32.xlu0 %v3227, 96
      %v3297 = vpop.permute.xlu0 %3296
      %3298 = vrot.lane.b32.xlu0 %v3228, 96
      %v3299 = vpop.permute.xlu0 %3298
      %3300 = vrot.lane.b32.xlu0 %v3229, 96
      %v3301 = vpop.permute.xlu0 %3300
      %v3302 = vsel %vm1234, %v3255, %v3257
      %v3303 = vsel %vm1234, %v3257, %v3259
      %v3304 = vsel %vm1234, %v3261, %v3263
      %v3305 = vsel %vm1234, %v3263, %v3265
      %v3306 = vsel %vm1234, %v3267, %v3269
      %v3307 = vsel %vm1234, %v3269, %v3271
      %v3308 = vsel %vm1234, %v3273, %v3275
      %v3309 = vsel %vm1234, %v3275, %v3277
      %v3310 = vsel %vm1234, %v3279, %v3281
      %v3311 = vsel %vm1234, %v3281, %v3283
      %v3312 = vsel %vm1234, %v3285, %v3287
      %v3313 = vsel %vm1234, %v3287, %v3289
      %v3314 = vsel %vm1234, %v3291, %v3293
      %v3315 = vsel %vm1234, %v3293, %v3295
      %v3316 = vsel %vm1234, %v3297, %v3299
      %v3317 = vsel %vm1234, %v3299, %v3301
      %v3334 = vadd.f32 %v3134, %v3302
      %v3335 = vadd.f32 %v3135, %v3303
      %v3336 = vadd.f32 %v3136, %v3304
      %v3337 = vadd.f32 %v3137, %v3305
      %v3338 = vadd.f32 %v3138, %v3306
      %v3339 = vadd.f32 %v3139, %v3307
      %v3340 = vadd.f32 %v3140, %v3308
      %v3341 = vadd.f32 %v3141, %v3309
      %v3342 = vadd.f32 %v3142, %v3310
      %v3343 = vadd.f32 %v3143, %v3311
      %v3344 = vadd.f32 %v3144, %v3312
      %v3345 = vadd.f32 %v3145, %v3313
      %v3346 = vadd.f32 %v3146, %v3314
      %v3347 = vadd.f32 %v3147, %v3315
      %v3348 = vadd.f32 %v3148, %v3316
      %v3349 = vadd.f32 %v3149, %v3317
      %3350 = vset.pattern.permute.xlu0 7
      %3351 = vperm.xlu0 %3350, %v2134
      %v3352 = vpop.permute.xlu0 %3351
      %3354 = vset.pattern.permute.xlu0 7
      %3355 = vperm.xlu0 %3354, %v2135
      %v3356 = vpop.permute.xlu0 %3355
      %3358 = vset.pattern.permute.xlu0 7
      %3359 = vperm.xlu0 %3358, %v2136
      %v3360 = vpop.permute.xlu0 %3359
      %3362 = vset.pattern.permute.xlu0 7
      %3363 = vperm.xlu0 %3362, %v2137
      %v3364 = vpop.permute.xlu0 %3363
      %3366 = vset.pattern.permute.xlu0 7
      %3367 = vperm.xlu0 %3366, %v2138
      %v3368 = vpop.permute.xlu0 %3367
      %3370 = vset.pattern.permute.xlu0 7
      %3371 = vperm.xlu0 %3370, %v2139
      %v3372 = vpop.permute.xlu0 %3371
      %3374 = vset.pattern.permute.xlu0 7
      %3375 = vperm.xlu0 %3374, %v2140
      %v3376 = vpop.permute.xlu0 %3375
      %3378 = vset.pattern.permute.xlu0 7
      %3379 = vperm.xlu0 %3378, %v2141
      %v3380 = vpop.permute.xlu0 %3379
      %v3382 = vmul.f32 %v2222, %v3352
      %v3383 = vmul.f32 %v2190, %v3352
      %v3384 = vmul.f32 %v2230, %v3352
      %v3385 = vmul.f32 %v2223, %v3356
      %v3386 = vmul.f32 %v2191, %v3356
      %v3387 = vmul.f32 %v2231, %v3356
      %v3388 = vmul.f32 %v2224, %v3360
      %v3389 = vmul.f32 %v2192, %v3360
      %v3390 = vmul.f32 %v2232, %v3360
      %v3391 = vmul.f32 %v2225, %v3364
      %v3392 = vmul.f32 %v2193, %v3364
      %v3393 = vmul.f32 %v2233, %v3364
      %v3394 = vmul.f32 %v2226, %v3368
      %v3395 = vmul.f32 %v2194, %v3368
      %v3396 = vmul.f32 %v2234, %v3368
      %v3397 = vmul.f32 %v2227, %v3372
      %v3398 = vmul.f32 %v2195, %v3372
      %v3399 = vmul.f32 %v2235, %v3372
      %v3400 = vmul.f32 %v2228, %v3376
      %v3401 = vmul.f32 %v2196, %v3376
      %v3402 = vmul.f32 %v2236, %v3376
      %v3403 = vmul.f32 %v2229, %v3380
      %v3404 = vmul.f32 %v2197, %v3380
      %v3405 = vmul.f32 %v2237, %v3380
      %3430 = vrot.lane.b32.xlu0 %v3382, 95
      %v3431 = vpop.permute.xlu0 %3430
      %3432 = vrot.lane.b32.xlu0 %v3383, 95
      %v3433 = vpop.permute.xlu0 %3432
      %3434 = vrot.lane.b32.xlu0 %v3384, 95
      %v3435 = vpop.permute.xlu0 %3434
      %3436 = vrot.lane.b32.xlu0 %v3385, 95
      %v3437 = vpop.permute.xlu0 %3436
      %3438 = vrot.lane.b32.xlu0 %v3386, 95
      %v3439 = vpop.permute.xlu0 %3438
      %3440 = vrot.lane.b32.xlu0 %v3387, 95
      %v3441 = vpop.permute.xlu0 %3440
      %3442 = vrot.lane.b32.xlu0 %v3388, 95
      %v3443 = vpop.permute.xlu0 %3442
      %3444 = vrot.lane.b32.xlu0 %v3389, 95
      %v3445 = vpop.permute.xlu0 %3444
      %3446 = vrot.lane.b32.xlu0 %v3390, 95
      %v3447 = vpop.permute.xlu0 %3446
      %3448 = vrot.lane.b32.xlu0 %v3391, 95
      %v3449 = vpop.permute.xlu0 %3448
      %3450 = vrot.lane.b32.xlu0 %v3392, 95
      %v3451 = vpop.permute.xlu0 %3450
      %3452 = vrot.lane.b32.xlu0 %v3393, 95
      %v3453 = vpop.permute.xlu0 %3452
      %3454 = vrot.lane.b32.xlu0 %v3394, 95
      %v3455 = vpop.permute.xlu0 %3454
      %3456 = vrot.lane.b32.xlu0 %v3395, 95
      %v3457 = vpop.permute.xlu0 %3456
      %3458 = vrot.lane.b32.xlu0 %v3396, 95
      %v3459 = vpop.permute.xlu0 %3458
      %3460 = vrot.lane.b32.xlu0 %v3397, 95
      %v3461 = vpop.permute.xlu0 %3460
      %3462 = vrot.lane.b32.xlu0 %v3398, 95
      %v3463 = vpop.permute.xlu0 %3462
      %3464 = vrot.lane.b32.xlu0 %v3399, 95
      %v3465 = vpop.permute.xlu0 %3464
      %3466 = vrot.lane.b32.xlu0 %v3400, 95
      %v3467 = vpop.permute.xlu0 %3466
      %3468 = vrot.lane.b32.xlu0 %v3401, 95
      %v3469 = vpop.permute.xlu0 %3468
      %3470 = vrot.lane.b32.xlu0 %v3402, 95
      %v3471 = vpop.permute.xlu0 %3470
      %3472 = vrot.lane.b32.xlu0 %v3403, 95
      %v3473 = vpop.permute.xlu0 %3472
      %3474 = vrot.lane.b32.xlu0 %v3404, 95
      %v3475 = vpop.permute.xlu0 %3474
      %3476 = vrot.lane.b32.xlu0 %v3405, 95
      %v3477 = vpop.permute.xlu0 %3476
      %v3478 = vsel %vm1279, %v3431, %v3433
      %v3479 = vsel %vm1279, %v3433, %v3435
      %v3480 = vsel %vm1279, %v3437, %v3439
      %v3481 = vsel %vm1279, %v3439, %v3441
      %v3482 = vsel %vm1279, %v3443, %v3445
      %v3483 = vsel %vm1279, %v3445, %v3447
      %v3484 = vsel %vm1279, %v3449, %v3451
      %v3485 = vsel %vm1279, %v3451, %v3453
      %v3486 = vsel %vm1279, %v3455, %v3457
      %v3487 = vsel %vm1279, %v3457, %v3459
      %v3488 = vsel %vm1279, %v3461, %v3463
      %v3489 = vsel %vm1279, %v3463, %v3465
      %v3490 = vsel %vm1279, %v3467, %v3469
      %v3491 = vsel %vm1279, %v3469, %v3471
      %v3492 = vsel %vm1279, %v3473, %v3475
      %v3493 = vsel %vm1279, %v3475, %v3477
      %v3510 = vadd.f32 %v3334, %v3478
      %v3511 = vadd.f32 %v3335, %v3479
      %v3512 = vadd.f32 %v3336, %v3480
      %v3513 = vadd.f32 %v3337, %v3481
      %v3514 = vadd.f32 %v3338, %v3482
      %v3515 = vadd.f32 %v3339, %v3483
      %v3516 = vadd.f32 %v3340, %v3484
      %v3517 = vadd.f32 %v3341, %v3485
      %v3518 = vadd.f32 %v3342, %v3486
      %v3519 = vadd.f32 %v3343, %v3487
      %v3520 = vadd.f32 %v3344, %v3488
      %v3521 = vadd.f32 %v3345, %v3489
      %v3522 = vadd.f32 %v3346, %v3490
      %v3523 = vadd.f32 %v3347, %v3491
      %v3524 = vadd.f32 %v3348, %v3492
      %v3525 = vadd.f32 %v3349, %v3493
      %v3526 = vmul.f32 %v2222, %v1293
      %v3527 = vmul.f32 %v2190, %v1297
      %v3528 = vmul.f32 %v2230, %v1295
      %v3529 = vmul.f32 %v2223, %v1293
      %v3530 = vmul.f32 %v2191, %v1297
      %v3531 = vmul.f32 %v2231, %v1295
      %v3532 = vmul.f32 %v2224, %v1293
      %v3533 = vmul.f32 %v2192, %v1297
      %v3534 = vmul.f32 %v2232, %v1295
      %v3535 = vmul.f32 %v2225, %v1293
      %v3536 = vmul.f32 %v2193, %v1297
      %v3537 = vmul.f32 %v2233, %v1295
      %v3538 = vmul.f32 %v2226, %v1293
      %v3539 = vmul.f32 %v2194, %v1297
      %v3540 = vmul.f32 %v2234, %v1295
      %v3541 = vmul.f32 %v2227, %v1293
      %v3542 = vmul.f32 %v2195, %v1297
      %v3543 = vmul.f32 %v2235, %v1295
      %v3544 = vmul.f32 %v2228, %v1293
      %v3545 = vmul.f32 %v2196, %v1297
      %v3546 = vmul.f32 %v2236, %v1295
      %v3547 = vmul.f32 %v2229, %v1293
      %v3548 = vmul.f32 %v2197, %v1297
      %v3549 = vmul.f32 %v2237, %v1295
      %3550 = vset.pattern.permute.xlu0 8
      %3551 = vperm.xlu0 %3550, %v2134
      %v3552 = vpop.permute.xlu0 %3551
      %3554 = vset.pattern.permute.xlu0 8
      %3555 = vperm.xlu0 %3554, %v2135
      %v3556 = vpop.permute.xlu0 %3555
      %3558 = vset.pattern.permute.xlu0 8
      %3559 = vperm.xlu0 %3558, %v2136
      %v3560 = vpop.permute.xlu0 %3559
      %3562 = vset.pattern.permute.xlu0 8
      %3563 = vperm.xlu0 %3562, %v2137
      %v3564 = vpop.permute.xlu0 %3563
      %3566 = vset.pattern.permute.xlu0 8
      %3567 = vperm.xlu0 %3566, %v2138
      %v3568 = vpop.permute.xlu0 %3567
      %3570 = vset.pattern.permute.xlu0 8
      %3571 = vperm.xlu0 %3570, %v2139
      %v3572 = vpop.permute.xlu0 %3571
      %3574 = vset.pattern.permute.xlu0 8
      %3575 = vperm.xlu0 %3574, %v2140
      %v3576 = vpop.permute.xlu0 %3575
      %3578 = vset.pattern.permute.xlu0 8
      %3579 = vperm.xlu0 %3578, %v2141
      %v3580 = vpop.permute.xlu0 %3579
      %v3582 = vmul.f32 %v3526, %v3552
      %v3583 = vmul.f32 %v3527, %v3552
      %v3584 = vmul.f32 %v3528, %v3552
      %v3585 = vmul.f32 %v3529, %v3556
      %v3586 = vmul.f32 %v3530, %v3556
      %v3587 = vmul.f32 %v3531, %v3556
      %v3588 = vmul.f32 %v3532, %v3560
      %v3589 = vmul.f32 %v3533, %v3560
      %v3590 = vmul.f32 %v3534, %v3560
      %v3591 = vmul.f32 %v3535, %v3564
      %v3592 = vmul.f32 %v3536, %v3564
      %v3593 = vmul.f32 %v3537, %v3564
      %v3594 = vmul.f32 %v3538, %v3568
      %v3595 = vmul.f32 %v3539, %v3568
      %v3596 = vmul.f32 %v3540, %v3568
      %v3597 = vmul.f32 %v3541, %v3572
      %v3598 = vmul.f32 %v3542, %v3572
      %v3599 = vmul.f32 %v3543, %v3572
      %v3600 = vmul.f32 %v3544, %v3576
      %v3601 = vmul.f32 %v3545, %v3576
      %v3602 = vmul.f32 %v3546, %v3576
      %v3603 = vmul.f32 %v3547, %v3580
      %v3604 = vmul.f32 %v3548, %v3580
      %v3605 = vmul.f32 %v3549, %v3580
      %3630 = vrot.lane.b32.xlu0 %v3582, 94
      %v3631 = vpop.permute.xlu0 %3630
      %3632 = vrot.lane.b32.xlu0 %v3583, 94
      %v3633 = vpop.permute.xlu0 %3632
      %3634 = vrot.lane.b32.xlu0 %v3584, 94
      %v3635 = vpop.permute.xlu0 %3634
      %3636 = vrot.lane.b32.xlu0 %v3585, 94
      %v3637 = vpop.permute.xlu0 %3636
      %3638 = vrot.lane.b32.xlu0 %v3586, 94
      %v3639 = vpop.permute.xlu0 %3638
      %3640 = vrot.lane.b32.xlu0 %v3587, 94
      %v3641 = vpop.permute.xlu0 %3640
      %3642 = vrot.lane.b32.xlu0 %v3588, 94
      %v3643 = vpop.permute.xlu0 %3642
      %3644 = vrot.lane.b32.xlu0 %v3589, 94
      %v3645 = vpop.permute.xlu0 %3644
      %3646 = vrot.lane.b32.xlu0 %v3590, 94
      %v3647 = vpop.permute.xlu0 %3646
      %3648 = vrot.lane.b32.xlu0 %v3591, 94
      %v3649 = vpop.permute.xlu0 %3648
      %3650 = vrot.lane.b32.xlu0 %v3592, 94
      %v3651 = vpop.permute.xlu0 %3650
      %3652 = vrot.lane.b32.xlu0 %v3593, 94
      %v3653 = vpop.permute.xlu0 %3652
      %3654 = vrot.lane.b32.xlu0 %v3594, 94
      %v3655 = vpop.permute.xlu0 %3654
      %3656 = vrot.lane.b32.xlu0 %v3595, 94
      %v3657 = vpop.permute.xlu0 %3656
      %3658 = vrot.lane.b32.xlu0 %v3596, 94
      %v3659 = vpop.permute.xlu0 %3658
      %3660 = vrot.lane.b32.xlu0 %v3597, 94
      %v3661 = vpop.permute.xlu0 %3660
      %3662 = vrot.lane.b32.xlu0 %v3598, 94
      %v3663 = vpop.permute.xlu0 %3662
      %3664 = vrot.lane.b32.xlu0 %v3599, 94
      %v3665 = vpop.permute.xlu0 %3664
      %3666 = vrot.lane.b32.xlu0 %v3600, 94
      %v3667 = vpop.permute.xlu0 %3666
      %3668 = vrot.lane.b32.xlu0 %v3601, 94
      %v3669 = vpop.permute.xlu0 %3668
      %3670 = vrot.lane.b32.xlu0 %v3602, 94
      %v3671 = vpop.permute.xlu0 %3670
      %3672 = vrot.lane.b32.xlu0 %v3603, 94
      %v3673 = vpop.permute.xlu0 %3672
      %3674 = vrot.lane.b32.xlu0 %v3604, 94
      %v3675 = vpop.permute.xlu0 %3674
      %3676 = vrot.lane.b32.xlu0 %v3605, 94
      %v3677 = vpop.permute.xlu0 %3676
      %v3678 = vsel %vm1339, %v3631, %v3633
      %v3679 = vsel %vm1339, %v3633, %v3635
      %v3680 = vsel %vm1339, %v3637, %v3639
      %v3681 = vsel %vm1339, %v3639, %v3641
      %v3682 = vsel %vm1339, %v3643, %v3645
      %v3683 = vsel %vm1339, %v3645, %v3647
      %v3684 = vsel %vm1339, %v3649, %v3651
      %v3685 = vsel %vm1339, %v3651, %v3653
      %v3686 = vsel %vm1339, %v3655, %v3657
      %v3687 = vsel %vm1339, %v3657, %v3659
      %v3688 = vsel %vm1339, %v3661, %v3663
      %v3689 = vsel %vm1339, %v3663, %v3665
      %v3690 = vsel %vm1339, %v3667, %v3669
      %v3691 = vsel %vm1339, %v3669, %v3671
      %v3692 = vsel %vm1339, %v3673, %v3675
      %v3693 = vsel %vm1339, %v3675, %v3677
      %v3710 = vadd.f32 %v3510, %v3678
      %v3711 = vadd.f32 %v3511, %v3679
      %v3712 = vadd.f32 %v3512, %v3680
      %v3713 = vadd.f32 %v3513, %v3681
      %v3714 = vadd.f32 %v3514, %v3682
      %v3715 = vadd.f32 %v3515, %v3683
      %v3716 = vadd.f32 %v3516, %v3684
      %v3717 = vadd.f32 %v3517, %v3685
      %v3718 = vadd.f32 %v3518, %v3686
      %v3719 = vadd.f32 %v3519, %v3687
      %v3720 = vadd.f32 %v3520, %v3688
      %v3721 = vadd.f32 %v3521, %v3689
      %v3722 = vadd.f32 %v3522, %v3690
      %v3723 = vadd.f32 %v3523, %v3691
      %v3724 = vadd.f32 %v3524, %v3692
      %v3725 = vadd.f32 %v3525, %v3693
      %v3726 = vmul.f32 %v3710, 0.5
      %v3727 = vmul.f32 %v3711, 0.5
      %v3728 = vmul.f32 %v3712, 0.5
      %v3729 = vmul.f32 %v3713, 0.5
      %v3730 = vmul.f32 %v3714, 0.5
      %v3731 = vmul.f32 %v3715, 0.5
      %v3732 = vmul.f32 %v3716, 0.5
      %v3733 = vmul.f32 %v3717, 0.5
      %v3734 = vmul.f32 %v3718, 0.5
      %v3735 = vmul.f32 %v3719, 0.5
      %v3736 = vmul.f32 %v3720, 0.5
      %v3737 = vmul.f32 %v3721, 0.5
      %v3738 = vmul.f32 %v3722, 0.5
      %v3739 = vmul.f32 %v3723, 0.5
      %v3740 = vmul.f32 %v3724, 0.5
      %v3741 = vmul.f32 %v3725, 0.5
      %v3742 = vmul.f32 %v3710, 0.044715
      %v3743 = vmul.f32 %v3711, 0.044715
      %v3744 = vmul.f32 %v3712, 0.044715
      %v3745 = vmul.f32 %v3713, 0.044715
      %v3746 = vmul.f32 %v3714, 0.044715
      %v3747 = vmul.f32 %v3715, 0.044715
      %v3748 = vmul.f32 %v3716, 0.044715
      %v3749 = vmul.f32 %v3717, 0.044715
      %v3750 = vmul.f32 %v3718, 0.044715
      %v3751 = vmul.f32 %v3719, 0.044715
      %v3752 = vmul.f32 %v3720, 0.044715
      %v3753 = vmul.f32 %v3721, 0.044715
      %v3754 = vmul.f32 %v3722, 0.044715
      %v3755 = vmul.f32 %v3723, 0.044715
      %v3756 = vmul.f32 %v3724, 0.044715
      %v3757 = vmul.f32 %v3725, 0.044715
      %v3758 = vmul.f32 %v3742, %v3710
      %v3759 = vmul.f32 %v3743, %v3711
      %v3760 = vmul.f32 %v3744, %v3712
      %v3761 = vmul.f32 %v3745, %v3713
      %v3762 = vmul.f32 %v3746, %v3714
      %v3763 = vmul.f32 %v3747, %v3715
      %v3764 = vmul.f32 %v3748, %v3716
      %v3765 = vmul.f32 %v3749, %v3717
      %v3766 = vmul.f32 %v3750, %v3718
      %v3767 = vmul.f32 %v3751, %v3719
      %v3768 = vmul.f32 %v3752, %v3720
      %v3769 = vmul.f32 %v3753, %v3721
      %v3770 = vmul.f32 %v3754, %v3722
      %v3771 = vmul.f32 %v3755, %v3723
      %v3772 = vmul.f32 %v3756, %v3724
      %v3773 = vmul.f32 %v3757, %v3725
      %v3774 = vmul.f32 %v3758, %v3710
      %v3775 = vmul.f32 %v3759, %v3711
      %v3776 = vmul.f32 %v3760, %v3712
      %v3777 = vmul.f32 %v3761, %v3713
      %v3778 = vmul.f32 %v3762, %v3714
      %v3779 = vmul.f32 %v3763, %v3715
      %v3780 = vmul.f32 %v3764, %v3716
      %v3781 = vmul.f32 %v3765, %v3717
      %v3782 = vmul.f32 %v3766, %v3718
      %v3783 = vmul.f32 %v3767, %v3719
      %v3784 = vmul.f32 %v3768, %v3720
      %v3785 = vmul.f32 %v3769, %v3721
      %v3786 = vmul.f32 %v3770, %v3722
      %v3787 = vmul.f32 %v3771, %v3723
      %v3788 = vmul.f32 %v3772, %v3724
      %v3789 = vmul.f32 %v3773, %v3725
      %v3790 = vadd.f32 %v3710, %v3774
      %v3791 = vadd.f32 %v3711, %v3775
      %v3792 = vadd.f32 %v3712, %v3776
      %v3793 = vadd.f32 %v3713, %v3777
      %v3794 = vadd.f32 %v3714, %v3778
      %v3795 = vadd.f32 %v3715, %v3779
      %v3796 = vadd.f32 %v3716, %v3780
      %v3797 = vadd.f32 %v3717, %v3781
      %v3798 = vadd.f32 %v3718, %v3782
      %v3799 = vadd.f32 %v3719, %v3783
      %v3800 = vadd.f32 %v3720, %v3784
      %v3801 = vadd.f32 %v3721, %v3785
      %v3802 = vadd.f32 %v3722, %v3786
      %v3803 = vadd.f32 %v3723, %v3787
      %v3804 = vadd.f32 %v3724, %v3788
      %v3805 = vadd.f32 %v3725, %v3789
      %v3806 = vmul.f32 %v3790, 0.7978846
      %v3807 = vmul.f32 %v3791, 0.7978846
      %v3808 = vmul.f32 %v3792, 0.7978846
      %v3809 = vmul.f32 %v3793, 0.7978846
      %v3810 = vmul.f32 %v3794, 0.7978846
      %v3811 = vmul.f32 %v3795, 0.7978846
      %v3812 = vmul.f32 %v3796, 0.7978846
      %v3813 = vmul.f32 %v3797, 0.7978846
      %v3814 = vmul.f32 %v3798, 0.7978846
      %v3815 = vmul.f32 %v3799, 0.7978846
      %v3816 = vmul.f32 %v3800, 0.7978846
      %v3817 = vmul.f32 %v3801, 0.7978846
      %v3818 = vmul.f32 %v3802, 0.7978846
      %v3819 = vmul.f32 %v3803, 0.7978846
      %v3820 = vmul.f32 %v3804, 0.7978846
      %v3821 = vmul.f32 %v3805, 0.7978846
      %v3822 = vtanh.pop %v3806
      %v3823 = vtanh.pop %v3807
      %v3824 = vtanh.pop %v3808
      %v3825 = vtanh.pop %v3809
      %v3826 = vtanh.pop %v3810
      %v3827 = vtanh.pop %v3811
      %v3828 = vtanh.pop %v3812
      %v3829 = vtanh.pop %v3813
      %v3830 = vtanh.pop %v3814
      %v3831 = vtanh.pop %v3815
      %v3832 = vtanh.pop %v3816
      %v3833 = vtanh.pop %v3817
      %v3834 = vtanh.pop %v3818
      %v3835 = vtanh.pop %v3819
      %v3836 = vtanh.pop %v3820
      %v3837 = vtanh.pop %v3821
      %v3838 = vadd.f32 %v3822, 1.0
      %v3839 = vadd.f32 %v3823, 1.0
      %v3840 = vadd.f32 %v3824, 1.0
      %v3841 = vadd.f32 %v3825, 1.0
      %v3842 = vadd.f32 %v3826, 1.0
      %v3843 = vadd.f32 %v3827, 1.0
      %v3844 = vadd.f32 %v3828, 1.0
      %v3845 = vadd.f32 %v3829, 1.0
      %v3846 = vadd.f32 %v3830, 1.0
      %v3847 = vadd.f32 %v3831, 1.0
      %v3848 = vadd.f32 %v3832, 1.0
      %v3849 = vadd.f32 %v3833, 1.0
      %v3850 = vadd.f32 %v3834, 1.0
      %v3851 = vadd.f32 %v3835, 1.0
      %v3852 = vadd.f32 %v3836, 1.0
      %v3853 = vadd.f32 %v3837, 1.0
      %v3854 = vmul.f32 %v3726, %v3838
      %v3855 = vmul.f32 %v3727, %v3839
      %v3856 = vmul.f32 %v3728, %v3840
      %v3857 = vmul.f32 %v3729, %v3841
      %v3858 = vmul.f32 %v3730, %v3842
      %v3859 = vmul.f32 %v3731, %v3843
      %v3860 = vmul.f32 %v3732, %v3844
      %v3861 = vmul.f32 %v3733, %v3845
      %v3862 = vmul.f32 %v3734, %v3846
      %v3863 = vmul.f32 %v3735, %v3847
      %v3864 = vmul.f32 %v3736, %v3848
      %v3865 = vmul.f32 %v3737, %v3849
      %v3866 = vmul.f32 %v3738, %v3850
      %v3867 = vmul.f32 %v3739, %v3851
      %v3868 = vmul.f32 %v3740, %v3852
      %v3869 = vmul.f32 %v3741, %v3853
      %v3870 = vld [vmem:[%s14] sm:$0xf]
      %v3871 = vld [vmem:[%s14 + $0x4] sm:$0xf]
      %v3872 = vpack.c.bf16 %v3856, %v3854
      %v3873 = vpack.c.bf16 %v3857, %v3855
      %v3874 = vpack.c.bf16 %v3860, %v3858
      %v3875 = vpack.c.bf16 %v3861, %v3859
      %v3876 = vpack.c.bf16 %v3864, %v3862
      %v3877 = vpack.c.bf16 %v3865, %v3863
      %v3878 = vpack.c.bf16 %v3868, %v3866
      %v3879 = vpack.c.bf16 %v3869, %v3867
      %v3882 = vunpack.c.l.b16 %v3870
      %v3883 = vunpack.c.l.b16 %v3871
      %v3884 = vpack.c.b16 %v3883, %v3882
      %vm3885 = vcmask 523264
      %v3887 = vsel %vm3885, %v3884, 0
      %3889 = vmatprep.subr.bf16.mxu0 %v3873
      %3890 = vmatpush1.bf16.msra.mxu0 %v3872
      %3891 = vmatprep.subr.bf16.mxu0 %v3875
      %3892 = vmatpush1.bf16.msra.mxu0 %v3874
      %3893 = vmatprep.subr.bf16.mxu0 %v3877
      %3894 = vmatpush1.bf16.msra.mxu0 %v3876
      %3895 = vmatprep.subr.bf16.mxu0 %v3879
      %3896 = vmatpush1.bf16.msra.mxu0 %v3878
      %3897 = vmatprep.subr.bf16.mxu0 0
      %3898 = vmatpush1.bf16.msra.mxu0 0
      %3899 = vmatprep.subr.bf16.mxu0 0
      %3900 = vmatpush1.bf16.msra.mxu0 0
      %3901 = vmatprep.subr.bf16.mxu0 0
      %3902 = vmatpush1.bf16.msra.mxu0 0
      %3903 = vmatprep.subr.bf16.mxu0 0
      %3904 = vmatpush1.bf16.msra.mxu0 0
      %3905 = vmatprep.subr.bf16.mxu0 0
      %3906 = vmatpush1.bf16.msra.mxu0 0
      %3907 = vmatprep.subr.bf16.mxu0 0
      %3908 = vmatpush1.bf16.msra.mxu0 0
      %3909 = vmatprep.subr.bf16.mxu0 0
      %3910 = vmatpush1.bf16.msra.mxu0 0
      %3911 = vmatprep.subr.bf16.mxu0 0
      %3912 = vmatpush1.bf16.msra.mxu0 0
      %3913 = vmatprep.subr.bf16.mxu0 0
      %3914 = vmatpush1.bf16.msra.mxu0 0
      %3915 = vmatprep.subr.bf16.mxu0 0
      %3916 = vmatpush1.bf16.msra.mxu0 0
      %3917 = vmatprep.subr.bf16.mxu0 0
      %3918 = vmatpush1.bf16.msra.mxu0 0
      %3919 = vmatprep.subr.bf16.mxu0 0
      %3920 = vmatpush1.bf16.msra.mxu0 0
      %3921 = vmatprep.mubr.bf16.mxu0 0
      %3922 = vmatmul.mubr.bf16.gmra.mrb[0].mxu0 %v3887
      %v3923 = vpop.f32.mrb[0].mxu0
      %v3924 = vadd.f32 %v1790, %v3923
      %v3925 = vpop.f32.mrb[0].mxu0
      %v3926 = vadd.f32 %v1791, %v3925
      %v3927 = vpop.f32.mrb[0].mxu0
      %v3928 = vadd.f32 %v1792, %v3927
      %v3929 = vpop.f32.mrb[0].mxu0
      %v3930 = vadd.f32 %v1793, %v3929
      %3931 = vdwg.mxu0
      %3932 = vst [vmem:[%s494] sm:$0xff] %v3924
      %3933 = vst [vmem:[%s494 + $0x8] sm:$0xff] %v3926
      %3934 = vst [vmem:[%s494 + $0x10] sm:$0xff] %v3928
      %3935 = vst [vmem:[%s494 + $0x18] sm:$0xff] %v3930
      %p3936 = scmp.lt.s32.totalorder %s26, 1
      %s3937 = scalar_select %p3936, %s26, 1
      %s3938 = smul.addr %s3937, 4
      %s3939 = smul.addr %s3938, 8
      %s3940 = scalar_lea.vmem %s15, %s3939
      // Predicated region
      $region81: #{basic_block_forward.4} parent=79 // pred_check
        %p3941 = pneg %p364
      $region82: #{basic_block_forward.4} parent=79 // pred_check_branch
        %3943 = sbr.rel (%p3941) target = $region84
      $region83: #{basic_block_forward.4} parent=79 // pred_region
        _
      $region84: #{basic_block_forward.4} parent=79 // pred_fallthru
        _
    $region80: #{basic_block_forward.4} parent=5 // pred_fallthru
      _
    %p3944 = scmp.le.s32.totalorder 2, %s21
    // Predicated region
    $region85: #{basic_block_forward.4} parent=5 // pred_check
      %p3945 = pneg %p3944
    $region86: #{basic_block_forward.4} parent=5 // pred_check_branch
      %3947 = sbr.rel (%p3945) target = $region88
    $region87: #{basic_block_forward.4} parent=5 // pred_region
      %s3948 = ssub.s32 %s21, 2
      // Predicated region
      $region89: #{basic_block_forward.4} parent=87 // pred_check
        %p3949 = pneg %p370
      $region90: #{basic_block_forward.4} parent=87 // pred_check_branch
        %3951 = sbr.rel (%p3949) target = $region92
      $region91: #{basic_block_forward.4} parent=87 // pred_region
        %p3952 = scmp.lt.s32.totalorder %s27, 1
        %s3953 = scalar_select %p3952, %s27, 1
        %s3954 = smul.addr %s3953, 4
        %s3955 = smul.addr %s3954, 8
        %s3956 = scalar_lea.vmem %s15, %s3955
      $region92: #{basic_block_forward.4} parent=87 // pred_fallthru
        _
    $region88: #{basic_block_forward.4} parent=5 // pred_fallthru
      _
  $region6: #{basic_block_forward.4} parent=0 // loop_footer
    %s25 = sadd.s32 1, %s21
  $region7: #{basic_block_forward.4} parent=0 // loop_footer_branch
    %20 = sbr.rel target = $region3
  $region8: #{basic_block_forward.4} parent=0 // loop_exit
    _

</llo_original>
